<compile_context>
chip_gen: v7x
topology: tpu7x:2x2x1
jax: 0.10.0
libtpu: 0.0.40
codegen_flags: <defaults>
</compile_context>

<pallas_src>
import jax
import jax.numpy as jnp
import numpy as np
from jax import lax
from jax.experimental import pallas as pl
from jax.experimental.pallas import tpu as pltpu

EPS = 1e-5  # nn.BatchNorm2d default eps


def _round_up(a, b):
    return (a + b - 1) // b * b


def _layout(H, W):
    """Wide padded layout constants: pixel (y, x) at lane HEAD + y*(W+2) + x."""
    Wp = W + 2
    L = H * Wp                    # accumulator extent (incl. 2 inter-row halo cols/row)
    HEAD = _round_up(W + 3, 128)  # lane-aligned leading halo (covers taps at y=-1,x=-1)
    TAIL = W + 3                  # trailing halo (covers taps at y=H, x=W)
    return Wp, L, HEAD, TAIL, HEAD + L + TAIL


def _vmem_limit_bytes(block_bytes):
    # v5e's default scoped-VMEM budget is only 16 MiB: size it to the real block
    # footprint (+ headroom), capped at v7x's 64 MiB physical VMEM.
    return int(min(max(block_bytes + (4 << 20), 16 << 20), 64 << 20))


# ----------------------------------------------------------------------------
# Fused kernel: [optional BN-affine + ReLU on input] -> 3x3 conv -> BN partial stats
#   x_ref     : (Cin,  PW)      wide-layout input (zero halo), bf16
#   scale_ref : (Cin,  1)       previous-stage folded BN scale (unused if !apply_act)
#   shift_ref : (Cin,  1)       previous-stage folded BN shift (unused if !apply_act)
#   w_ref     : (9, CB, Cin)    tap-major weights (dy*3+dx), bf16
#   y_ref     : (CB,  PW)       wide-layout conv output (zero halo)
#   st_ref    : (CB,  2)        per-batch [sum, sum^2] of the valid conv output
#   acc_ref   : (CB,  L)  f32   VMEM accumulator scratch
#   *xa       : (Cin, PW) bf16  activated-input scratch (only when apply_act)
# ----------------------------------------------------------------------------
def _make_conv_kernel(H, W, HEAD, apply_act):
    Wp = W + 2
    L = H * Wp
    TAIL = W + 3

    def kernel(x_ref, scale_ref, shift_ref, w_ref, y_ref, st_ref, acc_ref, *xa):
        PW = x_ref.shape[1]
        CB = y_ref.shape[0]

        if apply_act:
            # Fuse the previous stage's BatchNorm affine + ReLU into this conv's input
            # path, then re-zero the halo lanes (ReLU(shift) != 0) so the tap reads
            # below still see a properly zero-padded image.
            xa_ref = xa[0]
            xv = x_ref[...].astype(jnp.float32)
            xv = jnp.maximum(xv * scale_ref[...] + shift_ref[...], 0.0)
            p = lax.broadcasted_iota(jnp.int32, (1, PW), 1) - HEAD
            col = jnp.maximum(p, 0) % Wp
            valid = (p >= 0) & (p < L) & (col < W)
            xa_ref[...] = jnp.where(valid, xv, 0.0).astype(xa_ref.dtype)
            src = xa_ref
        else:
            src = x_ref  # wrapper already provides the zero-padded wide-layout image

        # 3x3 conv as 9 lane-shifted (CB, Cin) @ (Cin, L) bf16 MXU matmuls with f32
        # accumulation in VMEM scratch: no transposes, no per-tap reshape copies,
        # no scratch zero-fill.
        # TODO(synk): fold the 9 taps into the contraction dim (im2col, K=9*Cin) when
        # Cin is small to improve MXU K-utilisation.
        for k in range(9):
            dy, dx = k // 3, k % 3
            start = HEAD + (dy - 1) * Wp + (dx - 1)  # static lane offset
            xs = src[:, pl.ds(start, L)].astype(jnp.bfloat16)
            part = jnp.dot(w_ref[k].astype(jnp.bfloat16), xs,
                           preferred_element_type=jnp.float32)
            if k == 0:
                acc_ref[...] = part
            else:
                acc_ref[...] += part

        # Zero the 2 inter-row garbage columns once; the masked plane is reused both
        # for the BatchNorm partial sums and for the store (so the stored activation
        # is a valid zero-padded input for the next conv).
        j = lax.broadcasted_iota(jnp.int32, (1, L), 1) % Wp
        acc = acc_ref[...] * (j < W).astype(jnp.float32)

        st_ref[:, 0:1] = jnp.sum(acc, axis=1, keepdims=True)
        st_ref[:, 1:2] = jnp.sum(acc * acc, axis=1, keepdims=True)

        y_ref[:, pl.ds(0, HEAD)] = jnp.zeros((CB, HEAD), y_ref.dtype)
        y_ref[:, pl.ds(HEAD, L)] = acc.astype(y_ref.dtype)
        y_ref[:, pl.ds(HEAD + L, TAIL)] = jnp.zeros((CB, TAIL), y_ref.dtype)

    return kernel


# ----------------------------------------------------------------------------
# Final BN-affine + ReLU, tiled into lane-dense spatial blocks.
# ----------------------------------------------------------------------------
def _affine_relu_kernel(x_ref, scale_ref, shift_ref, o_ref):
    y = x_ref[...].astype(jnp.float32) * scale_ref[...] + shift_ref[...]
    o_ref[...] = jnp.maximum(y, 0.0).astype(o_ref.dtype)


def affine_relu(x, scale, shift, out_dtype=jnp.float32, max_lanes=2048):
    N, C, PW = x.shape
    SB = PW if PW <= max_lanes else max_lanes  # multiple of 128, or the full extent
    NS = pl.cdiv(PW, SB)
    return pl.pallas_call(
        _affine_relu_kernel,
        out_shape=jax.ShapeDtypeStruct((N, C, PW), out_dtype),
        grid=(N, NS),
        in_specs=[
            pl.BlockSpec((None, C, SB), lambda n, s: (n, 0, s)),
            pl.BlockSpec((C, 1), lambda n, s: (0, 0)),
            pl.BlockSpec((C, 1), lambda n, s: (0, 0)),
        ],
        out_specs=pl.BlockSpec((None, C, SB), lambda n, s: (n, 0, s)),
        compiler_params=pltpu.CompilerParams(
            dimension_semantics=("parallel", "parallel")),
    )(x, scale, shift)


# ----------------------------------------------------------------------------
# Wrappers
# ----------------------------------------------------------------------------
def conv3x3_bn_stats(x, w9, H, W, scale=None, shift=None,
                     out_dtype=jnp.bfloat16, cout_block=256):
    """One fused Conv3x3 stage on the wide padded layout.

    x: (N, Cin, PW) wide-layout activations; w9: (9, Cout, Cin) bf16 weights.
    Returns (y (N, Cout, PW) out_dtype, stats (N, Cout, 2) f32 [sum, sum^2])."""
    N, Cin, PW = x.shape
    Cout = w9.shape[1]
    Wp, L, HEAD, TAIL, PW_expect = _layout(H, W)
    assert PW == PW_expect, (PW, PW_expect)

    apply_act = scale is not None
    if not apply_act:
        scale = jnp.ones((Cin, 1), jnp.float32)
        shift = jnp.zeros((Cin, 1), jnp.float32)

    # 256-wide Cout tiles feed the v6e/v7x 256x256 MXU; small Cout stays one block.
    CB = cout_block if (Cout > cout_block and Cout % cout_block == 0) else Cout
    NCO = Cout // CB

    xbytes = np.dtype(x.dtype).itemsize
    wbytes = np.dtype(w9.dtype).itemsize
    ybytes = np.dtype(out_dtype).itemsize
    block_bytes = (2 * Cin * PW * xbytes                    # input block (double-buffered)
                   + 2 * 9 * CB * Cin * wbytes              # weight block
                   + 2 * (CB * PW * ybytes + CB * 2 * 4)    # output blocks
                   + CB * L * 4                             # f32 accumulator scratch
                   + (Cin * PW * 2 if apply_act else 0))    # activated-input scratch

    scratch = [pltpu.VMEM((CB, L), jnp.float32)]
    if apply_act:
        scratch.append(pltpu.VMEM((Cin, PW), jnp.bfloat16))

    # TODO(synk): pipeline_mode=pl.Buffered(1) on the grid-invariant scale/shift/weight
    # blocks would save their second VMEM buffer.
    # TODO(synk): for very large images on v7x (64 MiB VMEM), tile the grid over output
    # row blocks with a 2-row halo fetched via manual DMA instead of whole-image blocks.
    return pl.pallas_call(
        _make_conv_kernel(H, W, HEAD, apply_act),
        out_shape=(jax.ShapeDtypeStruct((N, Cout, PW), out_dtype),
                   jax.ShapeDtypeStruct((N, Cout, 2), jnp.float32)),
        grid=(N, NCO),
        in_specs=[
            pl.BlockSpec((None, Cin, PW), lambda n, co: (n, 0, 0)),
            pl.BlockSpec((Cin, 1), lambda n, co: (0, 0)),
            pl.BlockSpec((Cin, 1), lambda n, co: (0, 0)),
            pl.BlockSpec((9, CB, Cin), lambda n, co: (0, co, 0)),
        ],
        out_specs=(
            pl.BlockSpec((None, CB, PW), lambda n, co: (n, co, 0)),
            pl.BlockSpec((None, CB, 2), lambda n, co: (n, co, 0)),
        ),
        scratch_shapes=scratch,
        compiler_params=pltpu.CompilerParams(
            dimension_semantics=("parallel", "parallel"),
            vmem_limit_bytes=_vmem_limit_bytes(block_bytes)),
    )(x, scale, shift, w9)


def fold_bn(stats, gamma, beta, count):
    """Per-batch [sum, sum^2] partials (N, C, 2) -> folded BN (scale, shift), each (C, 1)."""
    s = jnp.sum(stats, axis=0)                               # (C, 2)
    mean = s[:, 0] / count
    var = jnp.maximum(s[:, 1] / count - mean * mean, 0.0)    # biased var, clamped >= 0
    # TODO(synk): Welford-style (per-block mean-subtracted) accumulation for very large
    # N*H*W, where single-pass f32 E[x^2]-E[x]^2 can cancel catastrophically.
    scale = gamma / jnp.sqrt(var + EPS)
    shift = beta - mean * scale
    return scale[:, None].astype(jnp.float32), shift[:, None].astype(jnp.float32)


def convolution_block(x_nchw, params, interm_dtype=jnp.bfloat16):
    """PyTorch-equivalent forward: NCHW float32 in -> NCHW float32 out."""
    w1, g1, b1, w2, g2, b2 = params
    N, Cin, H, W = x_nchw.shape
    Wp, L, HEAD, TAIL, PW = _layout(H, W)
    count = N * H * W

    # One XLA pad into the wide layout (valid (y, x) at lane HEAD + y*(W+2) + x, zeros
    # elsewhere); stored bf16 so every conv DMA / MXU operand is half-width.
    xw = jnp.pad(x_nchw.astype(jnp.float32), ((0, 0), (0, 0), (0, 0), (0, 2)))
    xw = jnp.pad(xw.reshape(N, Cin, L), ((0, 0), (0, 0), (HEAD, TAIL)))
    xw = xw.astype(interm_dtype)

    w1b = w1.astype(jnp.bfloat16)
    w2b = w2.astype(jnp.bfloat16)

    y1, s1 = conv3x3_bn_stats(xw, w1b, H, W, out_dtype=interm_dtype)   # conv1 + stats
    sc1, sh1 = fold_bn(s1, g1, b1, count)
    y2, s2 = conv3x3_bn_stats(y1, w2b, H, W, scale=sc1, shift=sh1,     # bn1+relu fused
                              out_dtype=interm_dtype)                  # into conv2
    sc2, sh2 = fold_bn(s2, g2, b2, count)
    outw = affine_relu(y2, sc2, sh2)                                   # bn2 + relu

    # Drop the halo lanes back to NCHW (single XLA slice pass).
    out = outw[:, :, HEAD:HEAD + L].reshape(N, -1, H, Wp)[:, :, :, :W]
    return out


# ----------------------------------------------------------------------------
# Deterministic parameter init (shapes from the module __init__)
# ----------------------------------------------------------------------------
def init_params(key, ch_in, ch_out):
    k1, k2, k3, k4, k5, k6 = jax.random.split(key, 6)
    # Conv2d weights in PyTorch OIHW layout, repacked to tap-major (9, Cout, Cin) so the
    # kernel's per-tap matmul (weight-as-LHS) needs no transposes.  No bias (norm != Identity).
    w1 = jax.random.uniform(k1, (ch_out, ch_in, 3, 3), jnp.float32, -1.0, 1.0)
    w1 = w1 / float(np.sqrt(ch_in * 9))
    w2 = jax.random.uniform(k2, (ch_out, ch_out, 3, 3), jnp.float32, -1.0, 1.0)
    w2 = w2 / float(np.sqrt(ch_out * 9))
    w1 = jnp.transpose(w1, (2, 3, 0, 1)).reshape(9, ch_out, ch_in)
    w2 = jnp.transpose(w2, (2, 3, 0, 1)).reshape(9, ch_out, ch_out)
    g1 = 1.0 + 0.1 * jax.random.normal(k3, (ch_out,), jnp.float32)
    b1 = 0.1 * jax.random.normal(k4, (ch_out,), jnp.float32)
    g2 = 1.0 + 0.1 * jax.random.normal(k5, (ch_out,), jnp.float32)
    b2 = 0.1 * jax.random.normal(k6, (ch_out,), jnp.float32)
    # TODO(synk): BatchNorm running_mean/running_var buffers (momentum update) are not
    # modeled; they do not affect the training-mode forward output.
    return (w1, g1, b1, w2, g2, b2)


# ----------------------------------------------------------------------------
# Pure-JAX f32 reference (for verification only)
# ----------------------------------------------------------------------------
def reference_block(x_nchw, params):
    w1, g1, b1, w2, g2, b2 = params

    def conv(x, w9):
        co, ci = w9.shape[1], w9.shape[2]
        w = w9.reshape(3, 3, co, ci).transpose(0, 1, 3, 2)  # HWIO
        return lax.conv_general_dilated(
            x, w, window_strides=(1, 1), padding=((1, 1), (1, 1)),
            dimension_numbers=("NCHW", "HWIO", "NCHW"))

    def bn_relu(x, g, b):
        mean = jnp.mean(x, axis=(0, 2, 3), keepdims=True)
        var = jnp.mean((x - mean) ** 2, axis=(0, 2, 3), keepdims=True)
        y = (x - mean) / jnp.sqrt(var + EPS)
        y = y * g.reshape(1, -1, 1, 1) + b.reshape(1, -1, 1, 1)
        return jnp.maximum(y, 0.0)

    y = bn_relu(conv(x_nchw, w1), g1, b1)
    return bn_relu(conv(y, w2), g2, b2)


if __name__ == "__main__":
    N, C_IN, C_OUT, S = 2, 4, 8, 16
    key = jax.random.PRNGKey(0)
    kx, kp = jax.random.split(key)
    x = jax.random.normal(kx, (N, C_IN, S, S), jnp.float32)  # NCHW, like PyTorch
    params = init_params(kp, C_IN, C_OUT)

    out = jax.jit(convolution_block)(x, params)
    out = jax.block_until_ready(out)
    assert out.shape == (N, C_OUT, S, S), out.shape

    ref = reference_block(x, params)
    # bf16 MXU operands + bf16 inter-stage activations -> compare at bf16-level tolerance.
    np.testing.assert_allclose(np.asarray(out), np.asarray(ref), rtol=2e-2, atol=2e-2)
    print("KERNEL_OK")
</pallas_src>

<mosaic_0001>
module attributes {stable_mosaic.version = 11 : i64} {
  func.func @kernel(%arg0: i32, %arg1: i32, %arg2: memref<1x4x435xbf16, #tpu.memory_space<vmem>>, %arg3: memref<4x1xf32, #tpu.memory_space<vmem>>, %arg4: memref<4x1xf32, #tpu.memory_space<vmem>>, %arg5: memref<9x8x4xbf16, #tpu.memory_space<vmem>>, %arg6: memref<1x8x435xbf16, #tpu.memory_space<vmem>>, %arg7: memref<1x8x2xf32, #tpu.memory_space<vmem>>, %arg8: memref<8x288xf32, #tpu.memory_space<vmem>>) attributes {dimension_semantics = [#tpu.dimension_semantics<parallel>, #tpu.dimension_semantics<parallel>], iteration_bounds = array<i64: 2, 1>, scalar_prefetch = 0 : i64, scratch_operands = 1 : i64, tpu.core_type = #tpu.core_type<tc>, window_params = [{transform_indices = @transform_0, window_bounds = array<i64: 1, 4, 435>}, {pipeline_mode = #tpu.pipeline_mode<synchronous>, transform_indices = @transform_1, window_bounds = array<i64: 4, 1>}, {pipeline_mode = #tpu.pipeline_mode<synchronous>, transform_indices = @transform_2, window_bounds = array<i64: 4, 1>}, {transform_indices = @transform_3, window_bounds = array<i64: 9, 8, 4>}, {transform_indices = @transform_4, window_bounds = array<i64: 1, 8, 435>}, {transform_indices = @transform_5, window_bounds = array<i64: 1, 8, 2>}]} {
    %c0 = arith.constant 0 : index
    %c0_0 = arith.constant 0 : index
    %c109 = arith.constant 109 : index
    %0 = vector.load %arg2[%c0, %c0_0, %c109] : memref<1x4x435xbf16, #tpu.memory_space<vmem>>, vector<1x4x288xbf16>
    %1 = vector.shape_cast %0 : vector<1x4x288xbf16> to vector<4x288xbf16>
    %c0_1 = arith.constant 0 : index
    %c0_2 = arith.constant 0 : index
    %c0_3 = arith.constant 0 : index
    %2 = vector.load %arg5[%c0_1, %c0_2, %c0_3] : memref<9x8x4xbf16, #tpu.memory_space<vmem>>, vector<1x8x4xbf16>
    %3 = vector.shape_cast %2 : vector<1x8x4xbf16> to vector<8x4xbf16>
    %cst = arith.constant dense<0.000000e+00> : vector<8x288xf32>
    %4 = tpu.matmul %3, %1, %cst {dimension_numbers = #tpu.dot_dimension_numbers<[1], [0], [0], [1], [0, 0, 1, 1], [], []>} : vector<8x4xbf16>, vector<4x288xbf16>, vector<8x288xf32> -> vector<8x288xf32>
    %c0_4 = arith.constant 0 : index
    %c0_5 = arith.constant 0 : index
    %5 = vector.load %arg8[%c0_4, %c0_5] : memref<8x288xf32, #tpu.memory_space<vmem>>, vector<8x288xf32>
    tpu.vector_store %arg8[%c0_4, %c0_5], %4 {strides = array<i32>} : memref<8x288xf32, #tpu.memory_space<vmem>>, vector<8x288xf32>,
    %c0_6 = arith.constant 0 : index
    %c0_7 = arith.constant 0 : index
    %c110 = arith.constant 110 : index
    %6 = vector.load %arg2[%c0_6, %c0_7, %c110] : memref<1x4x435xbf16, #tpu.memory_space<vmem>>, vector<1x4x288xbf16>
    %7 = vector.shape_cast %6 : vector<1x4x288xbf16> to vector<4x288xbf16>
    %c1 = arith.constant 1 : index
    %c0_8 = arith.constant 0 : index
    %c0_9 = arith.constant 0 : index
    %8 = vector.load %arg5[%c1, %c0_8, %c0_9] : memref<9x8x4xbf16, #tpu.memory_space<vmem>>, vector<1x8x4xbf16>
    %9 = vector.shape_cast %8 : vector<1x8x4xbf16> to vector<8x4xbf16>
    %cst_10 = arith.constant dense<0.000000e+00> : vector<8x288xf32>
    %10 = tpu.matmul %9, %7, %cst_10 {dimension_numbers = #tpu.dot_dimension_numbers<[1], [0], [0], [1], [0, 0, 1, 1], [], []>} : vector<8x4xbf16>, vector<4x288xbf16>, vector<8x288xf32> -> vector<8x288xf32>
    %c0_11 = arith.constant 0 : index
    %c0_12 = arith.constant 0 : index
    %11 = vector.load %arg8[%c0_11, %c0_12] : memref<8x288xf32, #tpu.memory_space<vmem>>, vector<8x288xf32>
    %12 = arith.addf %11, %10 : vector<8x288xf32>
    %c0_13 = arith.constant 0 : index
    %c0_14 = arith.constant 0 : index
    %13 = vector.load %arg8[%c0_13, %c0_14] : memref<8x288xf32, #tpu.memory_space<vmem>>, vector<8x288xf32>
    tpu.vector_store %arg8[%c0_13, %c0_14], %12 {strides = array<i32>} : memref<8x288xf32, #tpu.memory_space<vmem>>, vector<8x288xf32>,
    %c0_15 = arith.constant 0 : index
    %c0_16 = arith.constant 0 : index
    %c111 = arith.constant 111 : index
    %14 = vector.load %arg2[%c0_15, %c0_16, %c111] : memref<1x4x435xbf16, #tpu.memory_space<vmem>>, vector<1x4x288xbf16>
    %15 = vector.shape_cast %14 : vector<1x4x288xbf16> to vector<4x288xbf16>
    %c2 = arith.constant 2 : index
    %c0_17 = arith.constant 0 : index
    %c0_18 = arith.constant 0 : index
    %16 = vector.load %arg5[%c2, %c0_17, %c0_18] : memref<9x8x4xbf16, #tpu.memory_space<vmem>>, vector<1x8x4xbf16>
    %17 = vector.shape_cast %16 : vector<1x8x4xbf16> to vector<8x4xbf16>
    %cst_19 = arith.constant dense<0.000000e+00> : vector<8x288xf32>
    %18 = tpu.matmul %17, %15, %cst_19 {dimension_numbers = #tpu.dot_dimension_numbers<[1], [0], [0], [1], [0, 0, 1, 1], [], []>} : vector<8x4xbf16>, vector<4x288xbf16>, vector<8x288xf32> -> vector<8x288xf32>
    %c0_20 = arith.constant 0 : index
    %c0_21 = arith.constant 0 : index
    %19 = vector.load %arg8[%c0_20, %c0_21] : memref<8x288xf32, #tpu.memory_space<vmem>>, vector<8x288xf32>
    %20 = arith.addf %19, %18 : vector<8x288xf32>
    %c0_22 = arith.constant 0 : index
    %c0_23 = arith.constant 0 : index
    %21 = vector.load %arg8[%c0_22, %c0_23] : memref<8x288xf32, #tpu.memory_space<vmem>>, vector<8x288xf32>
    tpu.vector_store %arg8[%c0_22, %c0_23], %20 {strides = array<i32>} : memref<8x288xf32, #tpu.memory_space<vmem>>, vector<8x288xf32>,
    %c0_24 = arith.constant 0 : index
    %c0_25 = arith.constant 0 : index
    %c127 = arith.constant 127 : index
    %22 = vector.load %arg2[%c0_24, %c0_25, %c127] : memref<1x4x435xbf16, #tpu.memory_space<vmem>>, vector<1x4x288xbf16>
    %23 = vector.shape_cast %22 : vector<1x4x288xbf16> to vector<4x288xbf16>
    %c3 = arith.constant 3 : index
    %c0_26 = arith.constant 0 : index
    %c0_27 = arith.constant 0 : index
    %24 = vector.load %arg5[%c3, %c0_26, %c0_27] : memref<9x8x4xbf16, #tpu.memory_space<vmem>>, vector<1x8x4xbf16>
    %25 = vector.shape_cast %24 : vector<1x8x4xbf16> to vector<8x4xbf16>
    %cst_28 = arith.constant dense<0.000000e+00> : vector<8x288xf32>
    %26 = tpu.matmul %25, %23, %cst_28 {dimension_numbers = #tpu.dot_dimension_numbers<[1], [0], [0], [1], [0, 0, 1, 1], [], []>} : vector<8x4xbf16>, vector<4x288xbf16>, vector<8x288xf32> -> vector<8x288xf32>
    %c0_29 = arith.constant 0 : index
    %c0_30 = arith.constant 0 : index
    %27 = vector.load %arg8[%c0_29, %c0_30] : memref<8x288xf32, #tpu.memory_space<vmem>>, vector<8x288xf32>
    %28 = arith.addf %27, %26 : vector<8x288xf32>
    %c0_31 = arith.constant 0 : index
    %c0_32 = arith.constant 0 : index
    %29 = vector.load %arg8[%c0_31, %c0_32] : memref<8x288xf32, #tpu.memory_space<vmem>>, vector<8x288xf32>
    tpu.vector_store %arg8[%c0_31, %c0_32], %28 {strides = array<i32>} : memref<8x288xf32, #tpu.memory_space<vmem>>, vector<8x288xf32>,
    %c0_33 = arith.constant 0 : index
    %c0_34 = arith.constant 0 : index
    %c128 = arith.constant 128 : index
    %30 = vector.load %arg2[%c0_33, %c0_34, %c128] : memref<1x4x435xbf16, #tpu.memory_space<vmem>>, vector<1x4x288xbf16>
    %31 = vector.shape_cast %30 : vector<1x4x288xbf16> to vector<4x288xbf16>
    %c4 = arith.constant 4 : index
    %c0_35 = arith.constant 0 : index
    %c0_36 = arith.constant 0 : index
    %32 = vector.load %arg5[%c4, %c0_35, %c0_36] : memref<9x8x4xbf16, #tpu.memory_space<vmem>>, vector<1x8x4xbf16>
    %33 = vector.shape_cast %32 : vector<1x8x4xbf16> to vector<8x4xbf16>
    %cst_37 = arith.constant dense<0.000000e+00> : vector<8x288xf32>
    %34 = tpu.matmul %33, %31, %cst_37 {dimension_numbers = #tpu.dot_dimension_numbers<[1], [0], [0], [1], [0, 0, 1, 1], [], []>} : vector<8x4xbf16>, vector<4x288xbf16>, vector<8x288xf32> -> vector<8x288xf32>
    %c0_38 = arith.constant 0 : index
    %c0_39 = arith.constant 0 : index
    %35 = vector.load %arg8[%c0_38, %c0_39] : memref<8x288xf32, #tpu.memory_space<vmem>>, vector<8x288xf32>
    %36 = arith.addf %35, %34 : vector<8x288xf32>
    %c0_40 = arith.constant 0 : index
    %c0_41 = arith.constant 0 : index
    %37 = vector.load %arg8[%c0_40, %c0_41] : memref<8x288xf32, #tpu.memory_space<vmem>>, vector<8x288xf32>
    tpu.vector_store %arg8[%c0_40, %c0_41], %36 {strides = array<i32>} : memref<8x288xf32, #tpu.memory_space<vmem>>, vector<8x288xf32>,
    %c0_42 = arith.constant 0 : index
    %c0_43 = arith.constant 0 : index
    %c129 = arith.constant 129 : index
    %38 = vector.load %arg2[%c0_42, %c0_43, %c129] : memref<1x4x435xbf16, #tpu.memory_space<vmem>>, vector<1x4x288xbf16>
    %39 = vector.shape_cast %38 : vector<1x4x288xbf16> to vector<4x288xbf16>
    %c5 = arith.constant 5 : index
    %c0_44 = arith.constant 0 : index
    %c0_45 = arith.constant 0 : index
    %40 = vector.load %arg5[%c5, %c0_44, %c0_45] : memref<9x8x4xbf16, #tpu.memory_space<vmem>>, vector<1x8x4xbf16>
    %41 = vector.shape_cast %40 : vector<1x8x4xbf16> to vector<8x4xbf16>
    %cst_46 = arith.constant dense<0.000000e+00> : vector<8x288xf32>
    %42 = tpu.matmul %41, %39, %cst_46 {dimension_numbers = #tpu.dot_dimension_numbers<[1], [0], [0], [1], [0, 0, 1, 1], [], []>} : vector<8x4xbf16>, vector<4x288xbf16>, vector<8x288xf32> -> vector<8x288xf32>
    %c0_47 = arith.constant 0 : index
    %c0_48 = arith.constant 0 : index
    %43 = vector.load %arg8[%c0_47, %c0_48] : memref<8x288xf32, #tpu.memory_space<vmem>>, vector<8x288xf32>
    %44 = arith.addf %43, %42 : vector<8x288xf32>
    %c0_49 = arith.constant 0 : index
    %c0_50 = arith.constant 0 : index
    %45 = vector.load %arg8[%c0_49, %c0_50] : memref<8x288xf32, #tpu.memory_space<vmem>>, vector<8x288xf32>
    tpu.vector_store %arg8[%c0_49, %c0_50], %44 {strides = array<i32>} : memref<8x288xf32, #tpu.memory_space<vmem>>, vector<8x288xf32>,
    %c0_51 = arith.constant 0 : index
    %c0_52 = arith.constant 0 : index
    %c145 = arith.constant 145 : index
    %46 = vector.load %arg2[%c0_51, %c0_52, %c145] : memref<1x4x435xbf16, #tpu.memory_space<vmem>>, vector<1x4x288xbf16>
    %47 = vector.shape_cast %46 : vector<1x4x288xbf16> to vector<4x288xbf16>
    %c6 = arith.constant 6 : index
    %c0_53 = arith.constant 0 : index
    %c0_54 = arith.constant 0 : index
    %48 = vector.load %arg5[%c6, %c0_53, %c0_54] : memref<9x8x4xbf16, #tpu.memory_space<vmem>>, vector<1x8x4xbf16>
    %49 = vector.shape_cast %48 : vector<1x8x4xbf16> to vector<8x4xbf16>
    %cst_55 = arith.constant dense<0.000000e+00> : vector<8x288xf32>
    %50 = tpu.matmul %49, %47, %cst_55 {dimension_numbers = #tpu.dot_dimension_numbers<[1], [0], [0], [1], [0, 0, 1, 1], [], []>} : vector<8x4xbf16>, vector<4x288xbf16>, vector<8x288xf32> -> vector<8x288xf32>
    %c0_56 = arith.constant 0 : index
    %c0_57 = arith.constant 0 : index
    %51 = vector.load %arg8[%c0_56, %c0_57] : memref<8x288xf32, #tpu.memory_space<vmem>>, vector<8x288xf32>
    %52 = arith.addf %51, %50 : vector<8x288xf32>
    %c0_58 = arith.constant 0 : index
    %c0_59 = arith.constant 0 : index
    %53 = vector.load %arg8[%c0_58, %c0_59] : memref<8x288xf32, #tpu.memory_space<vmem>>, vector<8x288xf32>
    tpu.vector_store %arg8[%c0_58, %c0_59], %52 {strides = array<i32>} : memref<8x288xf32, #tpu.memory_space<vmem>>, vector<8x288xf32>,
    %c0_60 = arith.constant 0 : index
    %c0_61 = arith.constant 0 : index
    %c146 = arith.constant 146 : index
    %54 = vector.load %arg2[%c0_60, %c0_61, %c146] : memref<1x4x435xbf16, #tpu.memory_space<vmem>>, vector<1x4x288xbf16>
    %55 = vector.shape_cast %54 : vector<1x4x288xbf16> to vector<4x288xbf16>
    %c7 = arith.constant 7 : index
    %c0_62 = arith.constant 0 : index
    %c0_63 = arith.constant 0 : index
    %56 = vector.load %arg5[%c7, %c0_62, %c0_63] : memref<9x8x4xbf16, #tpu.memory_space<vmem>>, vector<1x8x4xbf16>
    %57 = vector.shape_cast %56 : vector<1x8x4xbf16> to vector<8x4xbf16>
    %cst_64 = arith.constant dense<0.000000e+00> : vector<8x288xf32>
    %58 = tpu.matmul %57, %55, %cst_64 {dimension_numbers = #tpu.dot_dimension_numbers<[1], [0], [0], [1], [0, 0, 1, 1], [], []>} : vector<8x4xbf16>, vector<4x288xbf16>, vector<8x288xf32> -> vector<8x288xf32>
    %c0_65 = arith.constant 0 : index
    %c0_66 = arith.constant 0 : index
    %59 = vector.load %arg8[%c0_65, %c0_66] : memref<8x288xf32, #tpu.memory_space<vmem>>, vector<8x288xf32>
    %60 = arith.addf %59, %58 : vector<8x288xf32>
    %c0_67 = arith.constant 0 : index
    %c0_68 = arith.constant 0 : index
    %61 = vector.load %arg8[%c0_67, %c0_68] : memref<8x288xf32, #tpu.memory_space<vmem>>, vector<8x288xf32>
    tpu.vector_store %arg8[%c0_67, %c0_68], %60 {strides = array<i32>} : memref<8x288xf32, #tpu.memory_space<vmem>>, vector<8x288xf32>,
    %c0_69 = arith.constant 0 : index
    %c0_70 = arith.constant 0 : index
    %c147 = arith.constant 147 : index
    %62 = vector.load %arg2[%c0_69, %c0_70, %c147] : memref<1x4x435xbf16, #tpu.memory_space<vmem>>, vector<1x4x288xbf16>
    %63 = vector.shape_cast %62 : vector<1x4x288xbf16> to vector<4x288xbf16>
    %c8 = arith.constant 8 : index
    %c0_71 = arith.constant 0 : index
    %c0_72 = arith.constant 0 : index
    %64 = vector.load %arg5[%c8, %c0_71, %c0_72] : memref<9x8x4xbf16, #tpu.memory_space<vmem>>, vector<1x8x4xbf16>
    %65 = vector.shape_cast %64 : vector<1x8x4xbf16> to vector<8x4xbf16>
    %cst_73 = arith.constant dense<0.000000e+00> : vector<8x288xf32>
    %66 = tpu.matmul %65, %63, %cst_73 {dimension_numbers = #tpu.dot_dimension_numbers<[1], [0], [0], [1], [0, 0, 1, 1], [], []>} : vector<8x4xbf16>, vector<4x288xbf16>, vector<8x288xf32> -> vector<8x288xf32>
    %c0_74 = arith.constant 0 : index
    %c0_75 = arith.constant 0 : index
    %67 = vector.load %arg8[%c0_74, %c0_75] : memref<8x288xf32, #tpu.memory_space<vmem>>, vector<8x288xf32>
    %68 = arith.addf %67, %66 : vector<8x288xf32>
    %c0_76 = arith.constant 0 : index
    %c0_77 = arith.constant 0 : index
    %69 = vector.load %arg8[%c0_76, %c0_77] : memref<8x288xf32, #tpu.memory_space<vmem>>, vector<8x288xf32>
    tpu.vector_store %arg8[%c0_76, %c0_77], %68 {strides = array<i32>} : memref<8x288xf32, #tpu.memory_space<vmem>>, vector<8x288xf32>,
    %70 = tpu.iota {dimensions = array<i32: 1>} : vector<1x288xi32>
    %c18_i32 = arith.constant 18 : i32
    %c0_i32 = arith.constant 0 : i32
    %71 = arith.cmpi eq, %c18_i32, %c0_i32 : i32
    %c1_i32 = arith.constant 1 : i32
    %72 = arith.select %71, %c1_i32, %c18_i32 : i32
    %73 = vector.broadcast %72 : i32 to vector<1x288xi32>
    %74 = arith.remsi %70, %73 : vector<1x288xi32>
    %c0_i32_78 = arith.constant 0 : i32
    %75 = vector.broadcast %c0_i32_78 : i32 to vector<1x288xi32>
    %76 = arith.cmpi ne, %74, %75 : vector<1x288xi32>
    %c0_i32_79 = arith.constant 0 : i32
    %77 = vector.broadcast %c0_i32_79 : i32 to vector<1x288xi32>
    %78 = arith.cmpi slt, %74, %77 : vector<1x288xi32>
    %c0_i32_80 = arith.constant 0 : i32
    %79 = arith.cmpi slt, %72, %c0_i32_80 : i32
    %80 = vector.broadcast %79 : i1 to vector<1x288xi1>
    %81 = vector.broadcast %80 : vector<1x288xi1> to vector<1x288xi1>
    %82 = arith.xori %78, %81 : vector<1x288xi1>
    %83 = arith.andi %82, %76 : vector<1x288xi1>
    %84 = vector.broadcast %72 : i32 to vector<1x288xi32>
    %85 = arith.addi %74, %84 : vector<1x288xi32>
    %86 = arith.select %83, %85, %74 : vector<1x288xi1>, vector<1x288xi32>
    %c0_81 = arith.constant 0 : index
    %c0_82 = arith.constant 0 : index
    %87 = vector.load %arg8[%c0_81, %c0_82] : memref<8x288xf32, #tpu.memory_space<vmem>>, vector<8x288xf32>
    %c16_i32 = arith.constant 16 : i32
    %88 = vector.broadcast %c16_i32 : i32 to vector<1x288xi32>
    %89 = arith.cmpi slt, %86, %88 : vector<1x288xi32>
    %90 = arith.extui %89 : vector<1x288xi1> to vector<1x288xi32>
    %91 = arith.sitofp %90 : vector<1x288xi32> to vector<1x288xf32>
    %92 = vector.broadcast %91 : vector<1x288xf32> to vector<8x288xf32>
    %93 = arith.mulf %87, %92 : vector<8x288xf32>
    %cst_83 = arith.constant dense<0.000000e+00> : vector<8xf32>
    %94 = vector.multi_reduction <add>, %93, %cst_83 [1] : vector<8x288xf32> to vector<8xf32>
    %95 = vector.shape_cast %94 : vector<8xf32> to vector<8x1xf32>
    %c0_84 = arith.constant 0 : index
    %c0_85 = arith.constant 0 : index
    %c0_86 = arith.constant 0 : index
    %96 = vector.load %arg7[%c0_84, %c0_85, %c0_86] : memref<1x8x2xf32, #tpu.memory_space<vmem>>, vector<1x8x1xf32>
    %97 = vector.shape_cast %96 : vector<1x8x1xf32> to vector<8x1xf32>
    %98 = vector.shape_cast %95 : vector<8x1xf32> to vector<1x8x1xf32>
    tpu.vector_store %arg7[%c0_84, %c0_85, %c0_86], %98 {strides = array<i32>} : memref<1x8x2xf32, #tpu.memory_space<vmem>>, vector<1x8x1xf32>,
    %99 = arith.mulf %93, %93 : vector<8x288xf32>
    %cst_87 = arith.constant dense<0.000000e+00> : vector<8xf32>
    %100 = vector.multi_reduction <add>, %99, %cst_87 [1] : vector<8x288xf32> to vector<8xf32>
    %101 = vector.shape_cast %100 : vector<8xf32> to vector<8x1xf32>
    %c0_88 = arith.constant 0 : index
    %c0_89 = arith.constant 0 : index
    %c1_90 = arith.constant 1 : index
    %102 = vector.load %arg7[%c0_88, %c0_89, %c1_90] : memref<1x8x2xf32, #tpu.memory_space<vmem>>, vector<1x8x1xf32>
    %103 = vector.shape_cast %102 : vector<1x8x1xf32> to vector<8x1xf32>
    %104 = vector.shape_cast %101 : vector<8x1xf32> to vector<1x8x1xf32>
    tpu.vector_store %arg7[%c0_88, %c0_89, %c1_90], %104 {strides = array<i32>} : memref<1x8x2xf32, #tpu.memory_space<vmem>>, vector<1x8x1xf32>,
    %cst_91 = arith.constant 0.000000e+00 : bf16
    %105 = vector.broadcast %cst_91 : bf16 to vector<8x128xbf16>
    %c0_92 = arith.constant 0 : index
    %c0_93 = arith.constant 0 : index
    %c0_94 = arith.constant 0 : index
    %106 = vector.load %arg6[%c0_92, %c0_93, %c0_94] : memref<1x8x435xbf16, #tpu.memory_space<vmem>>, vector<1x8x128xbf16>
    %107 = vector.shape_cast %106 : vector<1x8x128xbf16> to vector<8x128xbf16>
    %108 = vector.shape_cast %105 : vector<8x128xbf16> to vector<1x8x128xbf16>
    tpu.vector_store %arg6[%c0_92, %c0_93, %c0_94], %108 {strides = array<i32>} : memref<1x8x435xbf16, #tpu.memory_space<vmem>>, vector<1x8x128xbf16>,
    %109 = arith.truncf %93 : vector<8x288xf32> to vector<8x288xbf16>
    %c0_95 = arith.constant 0 : index
    %c0_96 = arith.constant 0 : index
    %c128_97 = arith.constant 128 : index
    %110 = vector.load %arg6[%c0_95, %c0_96, %c128_97] : memref<1x8x435xbf16, #tpu.memory_space<vmem>>, vector<1x8x288xbf16>
    %111 = vector.shape_cast %110 : vector<1x8x288xbf16> to vector<8x288xbf16>
    %112 = vector.shape_cast %109 : vector<8x288xbf16> to vector<1x8x288xbf16>
    tpu.vector_store %arg6[%c0_95, %c0_96, %c128_97], %112 {strides = array<i32>} : memref<1x8x435xbf16, #tpu.memory_space<vmem>>, vector<1x8x288xbf16>,
    %cst_98 = arith.constant 0.000000e+00 : bf16
    %113 = vector.broadcast %cst_98 : bf16 to vector<8x19xbf16>
    %c0_99 = arith.constant 0 : index
    %c0_100 = arith.constant 0 : index
    %c416 = arith.constant 416 : index
    %114 = vector.load %arg6[%c0_99, %c0_100, %c416] : memref<1x8x435xbf16, #tpu.memory_space<vmem>>, vector<1x8x19xbf16>
    %115 = vector.shape_cast %114 : vector<1x8x19xbf16> to vector<8x19xbf16>
    %116 = vector.shape_cast %113 : vector<8x19xbf16> to vector<1x8x19xbf16>
    tpu.vector_store %arg6[%c0_99, %c0_100, %c416], %116 {strides = array<i32>} : memref<1x8x435xbf16, #tpu.memory_space<vmem>>, vector<1x8x19xbf16>,
    return
  }
  func.func @transform_0(%arg0: i32, %arg1: i32) -> (i32, i32, i32) {
    %c0_i32 = arith.constant 0 : i32
    %c0_i32_0 = arith.constant 0 : i32
    %c0_i32_1 = arith.constant 0 : i32
    return %arg0, %c0_i32, %c0_i32_0 : i32, i32, i32
  }
  func.func @transform_1(%arg0: i32, %arg1: i32) -> (i32, i32) {
    %c0_i32 = arith.constant 0 : i32
    %c0_i32_0 = arith.constant 0 : i32
    %c0_i32_1 = arith.constant 0 : i32
    return %c0_i32, %c0_i32_0 : i32, i32
  }
  func.func @transform_2(%arg0: i32, %arg1: i32) -> (i32, i32) {
    %c0_i32 = arith.constant 0 : i32
    %c0_i32_0 = arith.constant 0 : i32
    %c0_i32_1 = arith.constant 0 : i32
    return %c0_i32, %c0_i32_0 : i32, i32
  }
  func.func @transform_3(%arg0: i32, %arg1: i32) -> (i32, i32, i32) {
    %c0_i32 = arith.constant 0 : i32
    %c0_i32_0 = arith.constant 0 : i32
    %c0_i32_1 = arith.constant 0 : i32
    return %c0_i32, %arg1, %c0_i32_0 : i32, i32, i32
  }
  func.func @transform_4(%arg0: i32, %arg1: i32) -> (i32, i32, i32) {
    %c0_i32 = arith.constant 0 : i32
    %c0_i32_0 = arith.constant 0 : i32
    return %arg0, %arg1, %c0_i32 : i32, i32, i32
  }
  func.func @transform_5(%arg0: i32, %arg1: i32) -> (i32, i32, i32) {
    %c0_i32 = arith.constant 0 : i32
    %c0_i32_0 = arith.constant 0 : i32
    return %arg0, %arg1, %c0_i32 : i32, i32, i32
  }
}

module attributes {stable_mosaic.version = 11 : i64} {
  func.func @_affine_relu_kernel(%arg0: i32, %arg1: i32, %arg2: memref<1x8x435xbf16, #tpu.memory_space<vmem>>, %arg3: memref<8x1xf32, #tpu.memory_space<vmem>>, %arg4: memref<8x1xf32, #tpu.memory_space<vmem>>, %arg5: memref<1x8x435xf32, #tpu.memory_space<vmem>>) attributes {dimension_semantics = [#tpu.dimension_semantics<parallel>, #tpu.dimension_semantics<parallel>], iteration_bounds = array<i64: 2, 1>, scalar_prefetch = 0 : i64, scratch_operands = 0 : i64, tpu.core_type = #tpu.core_type<tc>, window_params = [{transform_indices = @transform_0, window_bounds = array<i64: 1, 8, 435>}, {pipeline_mode = #tpu.pipeline_mode<synchronous>, transform_indices = @transform_1, window_bounds = array<i64: 8, 1>}, {pipeline_mode = #tpu.pipeline_mode<synchronous>, transform_indices = @transform_2, window_bounds = array<i64: 8, 1>}, {transform_indices = @transform_3, window_bounds = array<i64: 1, 8, 435>}]} {
    %c0 = arith.constant 0 : index
    %c0_0 = arith.constant 0 : index
    %c0_1 = arith.constant 0 : index
    %0 = vector.load %arg2[%c0, %c0_0, %c0_1] : memref<1x8x435xbf16, #tpu.memory_space<vmem>>, vector<1x8x435xbf16>
    %1 = vector.shape_cast %0 : vector<1x8x435xbf16> to vector<8x435xbf16>
    %2 = arith.extf %1 : vector<8x435xbf16> to vector<8x435xf32>
    %c0_2 = arith.constant 0 : index
    %c0_3 = arith.constant 0 : index
    %3 = vector.load %arg3[%c0_2, %c0_3] : memref<8x1xf32, #tpu.memory_space<vmem>>, vector<8x1xf32>
    %4 = vector.broadcast %3 : vector<8x1xf32> to vector<8x435xf32>
    %5 = arith.mulf %2, %4 : vector<8x435xf32>
    %c0_4 = arith.constant 0 : index
    %c0_5 = arith.constant 0 : index
    %6 = vector.load %arg4[%c0_4, %c0_5] : memref<8x1xf32, #tpu.memory_space<vmem>>, vector<8x1xf32>
    %7 = vector.broadcast %6 : vector<8x1xf32> to vector<8x435xf32>
    %8 = arith.addf %5, %7 : vector<8x435xf32>
    %cst = arith.constant 0.000000e+00 : f32
    %9 = vector.broadcast %cst : f32 to vector<8x435xf32>
    %10 = arith.maximumf %8, %9 : vector<8x435xf32>
    %c0_6 = arith.constant 0 : index
    %c0_7 = arith.constant 0 : index
    %c0_8 = arith.constant 0 : index
    %11 = vector.load %arg5[%c0_6, %c0_7, %c0_8] : memref<1x8x435xf32, #tpu.memory_space<vmem>>, vector<1x8x435xf32>
    %12 = vector.shape_cast %11 : vector<1x8x435xf32> to vector<8x435xf32>
    %13 = vector.shape_cast %10 : vector<8x435xf32> to vector<1x8x435xf32>
    tpu.vector_store %arg5[%c0_6, %c0_7, %c0_8], %13 {strides = array<i32>} : memref<1x8x435xf32, #tpu.memory_space<vmem>>, vector<1x8x435xf32>,
    return
  }
  func.func @transform_0(%arg0: i32, %arg1: i32) -> (i32, i32, i32) {
    %c0_i32 = arith.constant 0 : i32
    %c0_i32_0 = arith.constant 0 : i32
    return %arg0, %c0_i32, %arg1 : i32, i32, i32
  }
  func.func @transform_1(%arg0: i32, %arg1: i32) -> (i32, i32) {
    %c0_i32 = arith.constant 0 : i32
    %c0_i32_0 = arith.constant 0 : i32
    %c0_i32_1 = arith.constant 0 : i32
    return %c0_i32, %c0_i32_0 : i32, i32
  }
  func.func @transform_2(%arg0: i32, %arg1: i32) -> (i32, i32) {
    %c0_i32 = arith.constant 0 : i32
    %c0_i32_0 = arith.constant 0 : i32
    %c0_i32_1 = arith.constant 0 : i32
    return %c0_i32, %c0_i32_0 : i32, i32
  }
  func.func @transform_3(%arg0: i32, %arg1: i32) -> (i32, i32, i32) {
    %c0_i32 = arith.constant 0 : i32
    %c0_i32_0 = arith.constant 0 : i32
    return %arg0, %c0_i32, %arg1 : i32, i32, i32
  }
}

module attributes {stable_mosaic.version = 11 : i64} {
  func.func @kernel(%arg0: i32, %arg1: i32, %arg2: memref<1x8x435xbf16, #tpu.memory_space<vmem>>, %arg3: memref<8x1xf32, #tpu.memory_space<vmem>>, %arg4: memref<8x1xf32, #tpu.memory_space<vmem>>, %arg5: memref<9x8x8xbf16, #tpu.memory_space<vmem>>, %arg6: memref<1x8x435xbf16, #tpu.memory_space<vmem>>, %arg7: memref<1x8x2xf32, #tpu.memory_space<vmem>>, %arg8: memref<8x288xf32, #tpu.memory_space<vmem>>, %arg9: memref<8x435xbf16, #tpu.memory_space<vmem>>) attributes {dimension_semantics = [#tpu.dimension_semantics<parallel>, #tpu.dimension_semantics<parallel>], iteration_bounds = array<i64: 2, 1>, scalar_prefetch = 0 : i64, scratch_operands = 2 : i64, tpu.core_type = #tpu.core_type<tc>, window_params = [{transform_indices = @transform_0, window_bounds = array<i64: 1, 8, 435>}, {pipeline_mode = #tpu.pipeline_mode<synchronous>, transform_indices = @transform_1, window_bounds = array<i64: 8, 1>}, {pipeline_mode = #tpu.pipeline_mode<synchronous>, transform_indices = @transform_2, window_bounds = array<i64: 8, 1>}, {transform_indices = @transform_3, window_bounds = array<i64: 9, 8, 8>}, {transform_indices = @transform_4, window_bounds = array<i64: 1, 8, 435>}, {transform_indices = @transform_5, window_bounds = array<i64: 1, 8, 2>}]} {
    %c0 = arith.constant 0 : index
    %c0_0 = arith.constant 0 : index
    %c0_1 = arith.constant 0 : index
    %0 = vector.load %arg2[%c0, %c0_0, %c0_1] : memref<1x8x435xbf16, #tpu.memory_space<vmem>>, vector<1x8x435xbf16>
    %1 = vector.shape_cast %0 : vector<1x8x435xbf16> to vector<8x435xbf16>
    %2 = arith.extf %1 : vector<8x435xbf16> to vector<8x435xf32>
    %c0_2 = arith.constant 0 : index
    %c0_3 = arith.constant 0 : index
    %3 = vector.load %arg3[%c0_2, %c0_3] : memref<8x1xf32, #tpu.memory_space<vmem>>, vector<8x1xf32>
    %4 = vector.broadcast %3 : vector<8x1xf32> to vector<8x435xf32>
    %5 = arith.mulf %2, %4 : vector<8x435xf32>
    %c0_4 = arith.constant 0 : index
    %c0_5 = arith.constant 0 : index
    %6 = vector.load %arg4[%c0_4, %c0_5] : memref<8x1xf32, #tpu.memory_space<vmem>>, vector<8x1xf32>
    %7 = vector.broadcast %6 : vector<8x1xf32> to vector<8x435xf32>
    %8 = arith.addf %5, %7 : vector<8x435xf32>
    %cst = arith.constant 0.000000e+00 : f32
    %9 = vector.broadcast %cst : f32 to vector<8x435xf32>
    %10 = arith.maximumf %8, %9 : vector<8x435xf32>
    %11 = tpu.iota {dimensions = array<i32: 1>} : vector<1x435xi32>
    %c128_i32 = arith.constant 128 : i32
    %12 = vector.broadcast %c128_i32 : i32 to vector<1x435xi32>
    %13 = arith.subi %11, %12 : vector<1x435xi32>
    %c0_i32 = arith.constant 0 : i32
    %14 = vector.broadcast %c0_i32 : i32 to vector<1x435xi32>
    %15 = arith.maxsi %13, %14 : vector<1x435xi32>
    %c18_i32 = arith.constant 18 : i32
    %c0_i32_6 = arith.constant 0 : i32
    %16 = arith.cmpi eq, %c18_i32, %c0_i32_6 : i32
    %c1_i32 = arith.constant 1 : i32
    %17 = arith.select %16, %c1_i32, %c18_i32 : i32
    %18 = vector.broadcast %17 : i32 to vector<1x435xi32>
    %19 = arith.remsi %15, %18 : vector<1x435xi32>
    %c0_i32_7 = arith.constant 0 : i32
    %20 = vector.broadcast %c0_i32_7 : i32 to vector<1x435xi32>
    %21 = arith.cmpi ne, %19, %20 : vector<1x435xi32>
    %c0_i32_8 = arith.constant 0 : i32
    %22 = vector.broadcast %c0_i32_8 : i32 to vector<1x435xi32>
    %23 = arith.cmpi slt, %19, %22 : vector<1x435xi32>
    %c0_i32_9 = arith.constant 0 : i32
    %24 = arith.cmpi slt, %17, %c0_i32_9 : i32
    %25 = vector.broadcast %24 : i1 to vector<1x435xi1>
    %26 = vector.broadcast %25 : vector<1x435xi1> to vector<1x435xi1>
    %27 = arith.xori %23, %26 : vector<1x435xi1>
    %28 = arith.andi %27, %21 : vector<1x435xi1>
    %29 = vector.broadcast %17 : i32 to vector<1x435xi32>
    %30 = arith.addi %19, %29 : vector<1x435xi32>
    %31 = arith.select %28, %30, %19 : vector<1x435xi1>, vector<1x435xi32>
    %c0_i32_10 = arith.constant 0 : i32
    %32 = vector.broadcast %c0_i32_10 : i32 to vector<1x435xi32>
    %33 = arith.cmpi sge, %13, %32 : vector<1x435xi32>
    %c288_i32 = arith.constant 288 : i32
    %34 = vector.broadcast %c288_i32 : i32 to vector<1x435xi32>
    %35 = arith.cmpi slt, %13, %34 : vector<1x435xi32>
    %36 = arith.andi %33, %35 : vector<1x435xi1>
    %c16_i32 = arith.constant 16 : i32
    %37 = vector.broadcast %c16_i32 : i32 to vector<1x435xi32>
    %38 = arith.cmpi slt, %31, %37 : vector<1x435xi32>
    %39 = arith.andi %36, %38 : vector<1x435xi1>
    %cst_11 = arith.constant 0.000000e+00 : f32
    %40 = vector.shape_cast %39 : vector<1x435xi1> to vector<1x435xi1>
    %41 = vector.broadcast %40 : vector<1x435xi1> to vector<8x435xi1>
    %42 = vector.broadcast %cst_11 : f32 to vector<8x435xf32>
    %43 = arith.select %41, %10, %42 : vector<8x435xi1>, vector<8x435xf32>
    %44 = arith.truncf %43 : vector<8x435xf32> to vector<8x435xbf16>
    %c0_12 = arith.constant 0 : index
    %c0_13 = arith.constant 0 : index
    %45 = vector.load %arg9[%c0_12, %c0_13] : memref<8x435xbf16, #tpu.memory_space<vmem>>, vector<8x435xbf16>
    tpu.vector_store %arg9[%c0_12, %c0_13], %44 {strides = array<i32>} : memref<8x435xbf16, #tpu.memory_space<vmem>>, vector<8x435xbf16>,
    %c0_14 = arith.constant 0 : index
    %c109 = arith.constant 109 : index
    %46 = vector.load %arg9[%c0_14, %c109] : memref<8x435xbf16, #tpu.memory_space<vmem>>, vector<8x288xbf16>
    %c0_15 = arith.constant 0 : index
    %c0_16 = arith.constant 0 : index
    %c0_17 = arith.constant 0 : index
    %47 = vector.load %arg5[%c0_15, %c0_16, %c0_17] : memref<9x8x8xbf16, #tpu.memory_space<vmem>>, vector<1x8x8xbf16>
    %48 = vector.shape_cast %47 : vector<1x8x8xbf16> to vector<8x8xbf16>
    %cst_18 = arith.constant dense<0.000000e+00> : vector<8x288xf32>
    %49 = tpu.matmul %48, %46, %cst_18 {dimension_numbers = #tpu.dot_dimension_numbers<[1], [0], [0], [1], [0, 0, 1, 1], [], []>} : vector<8x8xbf16>, vector<8x288xbf16>, vector<8x288xf32> -> vector<8x288xf32>
    %c0_19 = arith.constant 0 : index
    %c0_20 = arith.constant 0 : index
    %50 = vector.load %arg8[%c0_19, %c0_20] : memref<8x288xf32, #tpu.memory_space<vmem>>, vector<8x288xf32>
    tpu.vector_store %arg8[%c0_19, %c0_20], %49 {strides = array<i32>} : memref<8x288xf32, #tpu.memory_space<vmem>>, vector<8x288xf32>,
    %c0_21 = arith.constant 0 : index
    %c110 = arith.constant 110 : index
    %51 = vector.load %arg9[%c0_21, %c110] : memref<8x435xbf16, #tpu.memory_space<vmem>>, vector<8x288xbf16>
    %c1 = arith.constant 1 : index
    %c0_22 = arith.constant 0 : index
    %c0_23 = arith.constant 0 : index
    %52 = vector.load %arg5[%c1, %c0_22, %c0_23] : memref<9x8x8xbf16, #tpu.memory_space<vmem>>, vector<1x8x8xbf16>
    %53 = vector.shape_cast %52 : vector<1x8x8xbf16> to vector<8x8xbf16>
    %cst_24 = arith.constant dense<0.000000e+00> : vector<8x288xf32>
    %54 = tpu.matmul %53, %51, %cst_24 {dimension_numbers = #tpu.dot_dimension_numbers<[1], [0], [0], [1], [0, 0, 1, 1], [], []>} : vector<8x8xbf16>, vector<8x288xbf16>, vector<8x288xf32> -> vector<8x288xf32>
    %c0_25 = arith.constant 0 : index
    %c0_26 = arith.constant 0 : index
    %55 = vector.load %arg8[%c0_25, %c0_26] : memref<8x288xf32, #tpu.memory_space<vmem>>, vector<8x288xf32>
    %56 = arith.addf %55, %54 : vector<8x288xf32>
    %c0_27 = arith.constant 0 : index
    %c0_28 = arith.constant 0 : index
    %57 = vector.load %arg8[%c0_27, %c0_28] : memref<8x288xf32, #tpu.memory_space<vmem>>, vector<8x288xf32>
    tpu.vector_store %arg8[%c0_27, %c0_28], %56 {strides = array<i32>} : memref<8x288xf32, #tpu.memory_space<vmem>>, vector<8x288xf32>,
    %c0_29 = arith.constant 0 : index
    %c111 = arith.constant 111 : index
    %58 = vector.load %arg9[%c0_29, %c111] : memref<8x435xbf16, #tpu.memory_space<vmem>>, vector<8x288xbf16>
    %c2 = arith.constant 2 : index
    %c0_30 = arith.constant 0 : index
    %c0_31 = arith.constant 0 : index
    %59 = vector.load %arg5[%c2, %c0_30, %c0_31] : memref<9x8x8xbf16, #tpu.memory_space<vmem>>, vector<1x8x8xbf16>
    %60 = vector.shape_cast %59 : vector<1x8x8xbf16> to vector<8x8xbf16>
    %cst_32 = arith.constant dense<0.000000e+00> : vector<8x288xf32>
    %61 = tpu.matmul %60, %58, %cst_32 {dimension_numbers = #tpu.dot_dimension_numbers<[1], [0], [0], [1], [0, 0, 1, 1], [], []>} : vector<8x8xbf16>, vector<8x288xbf16>, vector<8x288xf32> -> vector<8x288xf32>
    %c0_33 = arith.constant 0 : index
    %c0_34 = arith.constant 0 : index
    %62 = vector.load %arg8[%c0_33, %c0_34] : memref<8x288xf32, #tpu.memory_space<vmem>>, vector<8x288xf32>
    %63 = arith.addf %62, %61 : vector<8x288xf32>
    %c0_35 = arith.constant 0 : index
    %c0_36 = arith.constant 0 : index
    %64 = vector.load %arg8[%c0_35, %c0_36] : memref<8x288xf32, #tpu.memory_space<vmem>>, vector<8x288xf32>
    tpu.vector_store %arg8[%c0_35, %c0_36], %63 {strides = array<i32>} : memref<8x288xf32, #tpu.memory_space<vmem>>, vector<8x288xf32>,
    %c0_37 = arith.constant 0 : index
    %c127 = arith.constant 127 : index
    %65 = vector.load %arg9[%c0_37, %c127] : memref<8x435xbf16, #tpu.memory_space<vmem>>, vector<8x288xbf16>
    %c3 = arith.constant 3 : index
    %c0_38 = arith.constant 0 : index
    %c0_39 = arith.constant 0 : index
    %66 = vector.load %arg5[%c3, %c0_38, %c0_39] : memref<9x8x8xbf16, #tpu.memory_space<vmem>>, vector<1x8x8xbf16>
    %67 = vector.shape_cast %66 : vector<1x8x8xbf16> to vector<8x8xbf16>
    %cst_40 = arith.constant dense<0.000000e+00> : vector<8x288xf32>
    %68 = tpu.matmul %67, %65, %cst_40 {dimension_numbers = #tpu.dot_dimension_numbers<[1], [0], [0], [1], [0, 0, 1, 1], [], []>} : vector<8x8xbf16>, vector<8x288xbf16>, vector<8x288xf32> -> vector<8x288xf32>
    %c0_41 = arith.constant 0 : index
    %c0_42 = arith.constant 0 : index
    %69 = vector.load %arg8[%c0_41, %c0_42] : memref<8x288xf32, #tpu.memory_space<vmem>>, vector<8x288xf32>
    %70 = arith.addf %69, %68 : vector<8x288xf32>
    %c0_43 = arith.constant 0 : index
    %c0_44 = arith.constant 0 : index
    %71 = vector.load %arg8[%c0_43, %c0_44] : memref<8x288xf32, #tpu.memory_space<vmem>>, vector<8x288xf32>
    tpu.vector_store %arg8[%c0_43, %c0_44], %70 {strides = array<i32>} : memref<8x288xf32, #tpu.memory_space<vmem>>, vector<8x288xf32>,
    %c0_45 = arith.constant 0 : index
    %c128 = arith.constant 128 : index
    %72 = vector.load %arg9[%c0_45, %c128] : memref<8x435xbf16, #tpu.memory_space<vmem>>, vector<8x288xbf16>
    %c4 = arith.constant 4 : index
    %c0_46 = arith.constant 0 : index
    %c0_47 = arith.constant 0 : index
    %73 = vector.load %arg5[%c4, %c0_46, %c0_47] : memref<9x8x8xbf16, #tpu.memory_space<vmem>>, vector<1x8x8xbf16>
    %74 = vector.shape_cast %73 : vector<1x8x8xbf16> to vector<8x8xbf16>
    %cst_48 = arith.constant dense<0.000000e+00> : vector<8x288xf32>
    %75 = tpu.matmul %74, %72, %cst_48 {dimension_numbers = #tpu.dot_dimension_numbers<[1], [0], [0], [1], [0, 0, 1, 1], [], []>} : vector<8x8xbf16>, vector<8x288xbf16>, vector<8x288xf32> -> vector<8x288xf32>
    %c0_49 = arith.constant 0 : index
    %c0_50 = arith.constant 0 : index
    %76 = vector.load %arg8[%c0_49, %c0_50] : memref<8x288xf32, #tpu.memory_space<vmem>>, vector<8x288xf32>
    %77 = arith.addf %76, %75 : vector<8x288xf32>
    %c0_51 = arith.constant 0 : index
    %c0_52 = arith.constant 0 : index
    %78 = vector.load %arg8[%c0_51, %c0_52] : memref<8x288xf32, #tpu.memory_space<vmem>>, vector<8x288xf32>
    tpu.vector_store %arg8[%c0_51, %c0_52], %77 {strides = array<i32>} : memref<8x288xf32, #tpu.memory_space<vmem>>, vector<8x288xf32>,
    %c0_53 = arith.constant 0 : index
    %c129 = arith.constant 129 : index
    %79 = vector.load %arg9[%c0_53, %c129] : memref<8x435xbf16, #tpu.memory_space<vmem>>, vector<8x288xbf16>
    %c5 = arith.constant 5 : index
    %c0_54 = arith.constant 0 : index
    %c0_55 = arith.constant 0 : index
    %80 = vector.load %arg5[%c5, %c0_54, %c0_55] : memref<9x8x8xbf16, #tpu.memory_space<vmem>>, vector<1x8x8xbf16>
    %81 = vector.shape_cast %80 : vector<1x8x8xbf16> to vector<8x8xbf16>
    %cst_56 = arith.constant dense<0.000000e+00> : vector<8x288xf32>
    %82 = tpu.matmul %81, %79, %cst_56 {dimension_numbers = #tpu.dot_dimension_numbers<[1], [0], [0], [1], [0, 0, 1, 1], [], []>} : vector<8x8xbf16>, vector<8x288xbf16>, vector<8x288xf32> -> vector<8x288xf32>
    %c0_57 = arith.constant 0 : index
    %c0_58 = arith.constant 0 : index
    %83 = vector.load %arg8[%c0_57, %c0_58] : memref<8x288xf32, #tpu.memory_space<vmem>>, vector<8x288xf32>
    %84 = arith.addf %83, %82 : vector<8x288xf32>
    %c0_59 = arith.constant 0 : index
    %c0_60 = arith.constant 0 : index
    %85 = vector.load %arg8[%c0_59, %c0_60] : memref<8x288xf32, #tpu.memory_space<vmem>>, vector<8x288xf32>
    tpu.vector_store %arg8[%c0_59, %c0_60], %84 {strides = array<i32>} : memref<8x288xf32, #tpu.memory_space<vmem>>, vector<8x288xf32>,
    %c0_61 = arith.constant 0 : index
    %c145 = arith.constant 145 : index
    %86 = vector.load %arg9[%c0_61, %c145] : memref<8x435xbf16, #tpu.memory_space<vmem>>, vector<8x288xbf16>
    %c6 = arith.constant 6 : index
    %c0_62 = arith.constant 0 : index
    %c0_63 = arith.constant 0 : index
    %87 = vector.load %arg5[%c6, %c0_62, %c0_63] : memref<9x8x8xbf16, #tpu.memory_space<vmem>>, vector<1x8x8xbf16>
    %88 = vector.shape_cast %87 : vector<1x8x8xbf16> to vector<8x8xbf16>
    %cst_64 = arith.constant dense<0.000000e+00> : vector<8x288xf32>
    %89 = tpu.matmul %88, %86, %cst_64 {dimension_numbers = #tpu.dot_dimension_numbers<[1], [0], [0], [1], [0, 0, 1, 1], [], []>} : vector<8x8xbf16>, vector<8x288xbf16>, vector<8x288xf32> -> vector<8x288xf32>
    %c0_65 = arith.constant 0 : index
    %c0_66 = arith.constant 0 : index
    %90 = vector.load %arg8[%c0_65, %c0_66] : memref<8x288xf32, #tpu.memory_space<vmem>>, vector<8x288xf32>
    %91 = arith.addf %90, %89 : vector<8x288xf32>
    %c0_67 = arith.constant 0 : index
    %c0_68 = arith.constant 0 : index
    %92 = vector.load %arg8[%c0_67, %c0_68] : memref<8x288xf32, #tpu.memory_space<vmem>>, vector<8x288xf32>
    tpu.vector_store %arg8[%c0_67, %c0_68], %91 {strides = array<i32>} : memref<8x288xf32, #tpu.memory_space<vmem>>, vector<8x288xf32>,
    %c0_69 = arith.constant 0 : index
    %c146 = arith.constant 146 : index
    %93 = vector.load %arg9[%c0_69, %c146] : memref<8x435xbf16, #tpu.memory_space<vmem>>, vector<8x288xbf16>
    %c7 = arith.constant 7 : index
    %c0_70 = arith.constant 0 : index
    %c0_71 = arith.constant 0 : index
    %94 = vector.load %arg5[%c7, %c0_70, %c0_71] : memref<9x8x8xbf16, #tpu.memory_space<vmem>>, vector<1x8x8xbf16>
    %95 = vector.shape_cast %94 : vector<1x8x8xbf16> to vector<8x8xbf16>
    %cst_72 = arith.constant dense<0.000000e+00> : vector<8x288xf32>
    %96 = tpu.matmul %95, %93, %cst_72 {dimension_numbers = #tpu.dot_dimension_numbers<[1], [0], [0], [1], [0, 0, 1, 1], [], []>} : vector<8x8xbf16>, vector<8x288xbf16>, vector<8x288xf32> -> vector<8x288xf32>
    %c0_73 = arith.constant 0 : index
    %c0_74 = arith.constant 0 : index
    %97 = vector.load %arg8[%c0_73, %c0_74] : memref<8x288xf32, #tpu.memory_space<vmem>>, vector<8x288xf32>
    %98 = arith.addf %97, %96 : vector<8x288xf32>
    %c0_75 = arith.constant 0 : index
    %c0_76 = arith.constant 0 : index
    %99 = vector.load %arg8[%c0_75, %c0_76] : memref<8x288xf32, #tpu.memory_space<vmem>>, vector<8x288xf32>
    tpu.vector_store %arg8[%c0_75, %c0_76], %98 {strides = array<i32>} : memref<8x288xf32, #tpu.memory_space<vmem>>, vector<8x288xf32>,
    %c0_77 = arith.constant 0 : index
    %c147 = arith.constant 147 : index
    %100 = vector.load %arg9[%c0_77, %c147] : memref<8x435xbf16, #tpu.memory_space<vmem>>, vector<8x288xbf16>
    %c8 = arith.constant 8 : index
    %c0_78 = arith.constant 0 : index
    %c0_79 = arith.constant 0 : index
    %101 = vector.load %arg5[%c8, %c0_78, %c0_79] : memref<9x8x8xbf16, #tpu.memory_space<vmem>>, vector<1x8x8xbf16>
    %102 = vector.shape_cast %101 : vector<1x8x8xbf16> to vector<8x8xbf16>
    %cst_80 = arith.constant dense<0.000000e+00> : vector<8x288xf32>
    %103 = tpu.matmul %102, %100, %cst_80 {dimension_numbers = #tpu.dot_dimension_numbers<[1], [0], [0], [1], [0, 0, 1, 1], [], []>} : vector<8x8xbf16>, vector<8x288xbf16>, vector<8x288xf32> -> vector<8x288xf32>
    %c0_81 = arith.constant 0 : index
    %c0_82 = arith.constant 0 : index
    %104 = vector.load %arg8[%c0_81, %c0_82] : memref<8x288xf32, #tpu.memory_space<vmem>>, vector<8x288xf32>
    %105 = arith.addf %104, %103 : vector<8x288xf32>
    %c0_83 = arith.constant 0 : index
    %c0_84 = arith.constant 0 : index
    %106 = vector.load %arg8[%c0_83, %c0_84] : memref<8x288xf32, #tpu.memory_space<vmem>>, vector<8x288xf32>
    tpu.vector_store %arg8[%c0_83, %c0_84], %105 {strides = array<i32>} : memref<8x288xf32, #tpu.memory_space<vmem>>, vector<8x288xf32>,
    %107 = tpu.iota {dimensions = array<i32: 1>} : vector<1x288xi32>
    %c18_i32_85 = arith.constant 18 : i32
    %c0_i32_86 = arith.constant 0 : i32
    %108 = arith.cmpi eq, %c18_i32_85, %c0_i32_86 : i32
    %c1_i32_87 = arith.constant 1 : i32
    %109 = arith.select %108, %c1_i32_87, %c18_i32_85 : i32
    %110 = vector.broadcast %109 : i32 to vector<1x288xi32>
    %111 = arith.remsi %107, %110 : vector<1x288xi32>
    %c0_i32_88 = arith.constant 0 : i32
    %112 = vector.broadcast %c0_i32_88 : i32 to vector<1x288xi32>
    %113 = arith.cmpi ne, %111, %112 : vector<1x288xi32>
    %c0_i32_89 = arith.constant 0 : i32
    %114 = vector.broadcast %c0_i32_89 : i32 to vector<1x288xi32>
    %115 = arith.cmpi slt, %111, %114 : vector<1x288xi32>
    %c0_i32_90 = arith.constant 0 : i32
    %116 = arith.cmpi slt, %109, %c0_i32_90 : i32
    %117 = vector.broadcast %116 : i1 to vector<1x288xi1>
    %118 = vector.broadcast %117 : vector<1x288xi1> to vector<1x288xi1>
    %119 = arith.xori %115, %118 : vector<1x288xi1>
    %120 = arith.andi %119, %113 : vector<1x288xi1>
    %121 = vector.broadcast %109 : i32 to vector<1x288xi32>
    %122 = arith.addi %111, %121 : vector<1x288xi32>
    %123 = arith.select %120, %122, %111 : vector<1x288xi1>, vector<1x288xi32>
    %c0_91 = arith.constant 0 : index
    %c0_92 = arith.constant 0 : index
    %124 = vector.load %arg8[%c0_91, %c0_92] : memref<8x288xf32, #tpu.memory_space<vmem>>, vector<8x288xf32>
    %c16_i32_93 = arith.constant 16 : i32
    %125 = vector.broadcast %c16_i32_93 : i32 to vector<1x288xi32>
    %126 = arith.cmpi slt, %123, %125 : vector<1x288xi32>
    %127 = arith.extui %126 : vector<1x288xi1> to vector<1x288xi32>
    %128 = arith.sitofp %127 : vector<1x288xi32> to vector<1x288xf32>
    %129 = vector.broadcast %128 : vector<1x288xf32> to vector<8x288xf32>
    %130 = arith.mulf %124, %129 : vector<8x288xf32>
    %cst_94 = arith.constant dense<0.000000e+00> : vector<8xf32>
    %131 = vector.multi_reduction <add>, %130, %cst_94 [1] : vector<8x288xf32> to vector<8xf32>
    %132 = vector.shape_cast %131 : vector<8xf32> to vector<8x1xf32>
    %c0_95 = arith.constant 0 : index
    %c0_96 = arith.constant 0 : index
    %c0_97 = arith.constant 0 : index
    %133 = vector.load %arg7[%c0_95, %c0_96, %c0_97] : memref<1x8x2xf32, #tpu.memory_space<vmem>>, vector<1x8x1xf32>
    %134 = vector.shape_cast %133 : vector<1x8x1xf32> to vector<8x1xf32>
    %135 = vector.shape_cast %132 : vector<8x1xf32> to vector<1x8x1xf32>
    tpu.vector_store %arg7[%c0_95, %c0_96, %c0_97], %135 {strides = array<i32>} : memref<1x8x2xf32, #tpu.memory_space<vmem>>, vector<1x8x1xf32>,
    %136 = arith.mulf %130, %130 : vector<8x288xf32>
    %cst_98 = arith.constant dense<0.000000e+00> : vector<8xf32>
    %137 = vector.multi_reduction <add>, %136, %cst_98 [1] : vector<8x288xf32> to vector<8xf32>
    %138 = vector.shape_cast %137 : vector<8xf32> to vector<8x1xf32>
    %c0_99 = arith.constant 0 : index
    %c0_100 = arith.constant 0 : index
    %c1_101 = arith.constant 1 : index
    %139 = vector.load %arg7[%c0_99, %c0_100, %c1_101] : memref<1x8x2xf32, #tpu.memory_space<vmem>>, vector<1x8x1xf32>
    %140 = vector.shape_cast %139 : vector<1x8x1xf32> to vector<8x1xf32>
    %141 = vector.shape_cast %138 : vector<8x1xf32> to vector<1x8x1xf32>
    tpu.vector_store %arg7[%c0_99, %c0_100, %c1_101], %141 {strides = array<i32>} : memref<1x8x2xf32, #tpu.memory_space<vmem>>, vector<1x8x1xf32>,
    %cst_102 = arith.constant 0.000000e+00 : bf16
    %142 = vector.broadcast %cst_102 : bf16 to vector<8x128xbf16>
    %c0_103 = arith.constant 0 : index
    %c0_104 = arith.constant 0 : index
    %c0_105 = arith.constant 0 : index
    %143 = vector.load %arg6[%c0_103, %c0_104, %c0_105] : memref<1x8x435xbf16, #tpu.memory_space<vmem>>, vector<1x8x128xbf16>
    %144 = vector.shape_cast %143 : vector<1x8x128xbf16> to vector<8x128xbf16>
    %145 = vector.shape_cast %142 : vector<8x128xbf16> to vector<1x8x128xbf16>
    tpu.vector_store %arg6[%c0_103, %c0_104, %c0_105], %145 {strides = array<i32>} : memref<1x8x435xbf16, #tpu.memory_space<vmem>>, vector<1x8x128xbf16>,
    %146 = arith.truncf %130 : vector<8x288xf32> to vector<8x288xbf16>
    %c0_106 = arith.constant 0 : index
    %c0_107 = arith.constant 0 : index
    %c128_108 = arith.constant 128 : index
    %147 = vector.load %arg6[%c0_106, %c0_107, %c128_108] : memref<1x8x435xbf16, #tpu.memory_space<vmem>>, vector<1x8x288xbf16>
    %148 = vector.shape_cast %147 : vector<1x8x288xbf16> to vector<8x288xbf16>
    %149 = vector.shape_cast %146 : vector<8x288xbf16> to vector<1x8x288xbf16>
    tpu.vector_store %arg6[%c0_106, %c0_107, %c128_108], %149 {strides = array<i32>} : memref<1x8x435xbf16, #tpu.memory_space<vmem>>, vector<1x8x288xbf16>,
    %cst_109 = arith.constant 0.000000e+00 : bf16
    %150 = vector.broadcast %cst_109 : bf16 to vector<8x19xbf16>
    %c0_110 = arith.constant 0 : index
    %c0_111 = arith.constant 0 : index
    %c416 = arith.constant 416 : index
    %151 = vector.load %arg6[%c0_110, %c0_111, %c416] : memref<1x8x435xbf16, #tpu.memory_space<vmem>>, vector<1x8x19xbf16>
    %152 = vector.shape_cast %151 : vector<1x8x19xbf16> to vector<8x19xbf16>
    %153 = vector.shape_cast %150 : vector<8x19xbf16> to vector<1x8x19xbf16>
    tpu.vector_store %arg6[%c0_110, %c0_111, %c416], %153 {strides = array<i32>} : memref<1x8x435xbf16, #tpu.memory_space<vmem>>, vector<1x8x19xbf16>,
    return
  }
  func.func @transform_0(%arg0: i32, %arg1: i32) -> (i32, i32, i32) {
    %c0_i32 = arith.constant 0 : i32
    %c0_i32_0 = arith.constant 0 : i32
    %c0_i32_1 = arith.constant 0 : i32
    return %arg0, %c0_i32, %c0_i32_0 : i32, i32, i32
  }
  func.func @transform_1(%arg0: i32, %arg1: i32) -> (i32, i32) {
    %c0_i32 = arith.constant 0 : i32
    %c0_i32_0 = arith.constant 0 : i32
    %c0_i32_1 = arith.constant 0 : i32
    return %c0_i32, %c0_i32_0 : i32, i32
  }
  func.func @transform_2(%arg0: i32, %arg1: i32) -> (i32, i32) {
    %c0_i32 = arith.constant 0 : i32
    %c0_i32_0 = arith.constant 0 : i32
    %c0_i32_1 = arith.constant 0 : i32
    return %c0_i32, %c0_i32_0 : i32, i32
  }
  func.func @transform_3(%arg0: i32, %arg1: i32) -> (i32, i32, i32) {
    %c0_i32 = arith.constant 0 : i32
    %c0_i32_0 = arith.constant 0 : i32
    %c0_i32_1 = arith.constant 0 : i32
    return %c0_i32, %arg1, %c0_i32_0 : i32, i32, i32
  }
  func.func @transform_4(%arg0: i32, %arg1: i32) -> (i32, i32, i32) {
    %c0_i32 = arith.constant 0 : i32
    %c0_i32_0 = arith.constant 0 : i32
    return %arg0, %arg1, %c0_i32 : i32, i32, i32
  }
  func.func @transform_5(%arg0: i32, %arg1: i32) -> (i32, i32, i32) {
    %c0_i32 = arith.constant 0 : i32
    %c0_i32_0 = arith.constant 0 : i32
    return %arg0, %arg1, %c0_i32 : i32, i32, i32
  }
}

</mosaic_0001>

<llo_original>
// kernel: convolution_block.5
$region0: #{convolution_block.5}
  #allocation0 [shape = 'u32[]', space=smem, size = 0x4, offset = 0x4, fixed_abs, tag = 'smem constant byte address 0x4 - core index']
  #allocation1 [shape = 'u32[144,128]{1,0:T(1,128)}', space=vmem, size = 0x12000, scoped, tag = 'internal scratch']
  %s0 = inlined_call_operand.vmem [shape: bf16[2,8,435], index: 0, kind: input, shape index: {}]
  %s1 = inlined_call_operand.vmem [shape: f32[8,1], index: 1, kind: input, shape index: {}]
  %s2 = inlined_call_operand.vmem [shape: f32[8,1], index: 2, kind: input, shape index: {}]
  %s3 = inlined_call_operand.vmem [shape: f32[2,8,435], index: 3, kind: output, shape index: {}]
  %s4 = sld [smem:[#allocation0]]
  $region45: #{convolution_block.5} parent=0
    _
  %s6 = ssub.s32 1, %s4
  %s7 = scalar_select 0, %s6, %s4
  loop: start=0, step=1, limit=4
  $region2: #{convolution_block.5} parent=0 // loop_pre_header
    _
  $region3: #{convolution_block.5} parent=0 // loop_header
    %s9 = sphi 0, %s13
    %p10 = scmp.ge.s32.totalorder %s9, 4
    %s16 = sphi 0, %s28
    %s17 = sphi 0, %s24
    %s18 = sphi 0, %s16
    %s19 = sphi 0, %s17
    %s20 = sphi 0, %s18
    %s21 = sphi 0, %s19
    %s33 = sphi 0, %s35
    %s36 = sphi 0, %s33
    %s37 = sphi 0, %s36
    %s53 = sphi 0, %s37
    %s57 = sphi 0, %s57
    %s59 = sphi 0, %s57
    %s60 = sphi 0, %s59
    %s74 = sphi 0, %s60
    %s78 = sphi 0, %s78
    %s80 = sphi 0, %s78
    %s81 = sphi 0, %s80
    %s95 = sphi 0, %s81
    %s103 = sphi 0, %s105
    %s106 = sphi 0, %s103
    %s107 = sphi 0, %s106
    %s123 = sphi 0, %s107
  $region4: #{convolution_block.5} parent=0 // loop_header_branch
    %12 = sbr.rel (%p10) target = $region8
  $region5: #{convolution_block.5} parent=0 // loop_body
    %s14 = ssub.s32 %s9, 1
    %s15 = ssub.s32 %s9, 2
    %s22 = sadd.s32 1, %s17
    %p23 = scmp.ge.s32.totalorder %s22, 1
    %s24 = scalar_select %p23, 0, %s22
    %s25 = sadd.s32 1, %s16
    %s26 = scalar_select %p23, %s25, %s16
    %p27 = scmp.ge.s32.totalorder %s26, 2
    %s28 = scalar_select %p27, 0, %s26
    %s29 = ssub.s32 %s16, %s28
    %s30 = ssub.s32 %s17, %s24
    %s31 = sor.u32 %s29, %s30
    %p32 = scmp.eq.s32.totalorder %s31, 0
    %s34 = sadd.s32 %s33, 1
    %s35 = scalar_select %p32, %s33, %s34
    %p38 = pneg %p32
    %p39 = scmp.eq.s32.totalorder %s9, 1
    %p40 = por %p38, %p39
    %p41 = scmp.ne.s32.totalorder %s33, %s36
    %p42 = scmp.eq.s32.totalorder %s9, 0
    %p43 = por %p41, %p42
    %p44 = scmp.ne.s32.totalorder %s33, %s36
    %p45 = scmp.eq.s32.totalorder %s14, 1
    %p46 = por %p44, %p45
    %p47 = scmp.ne.s32.totalorder %s36, %s37
    %p48 = scmp.eq.s32.totalorder %s14, 0
    %p49 = por %p47, %p48
    %p50 = scmp.ne.s32.totalorder %s36, %s37
    %p51 = scmp.eq.s32.totalorder %s15, 1
    %p52 = por %p50, %p51
    %p54 = scmp.ne.s32.totalorder %s37, %s53
    %p55 = scmp.eq.s32.totalorder %s15, 0
    %p56 = por %p54, %p55
    %s58 = sadd.s32 %s57, 1
    %p61 = scmp.eq.s32.totalorder %s9, 1
    %p62 = scmp.ne.s32.totalorder %s57, %s59
    %p63 = scmp.eq.s32.totalorder %s9, 0
    %p64 = por %p62, %p63
    %p65 = scmp.ne.s32.totalorder %s57, %s59
    %p66 = scmp.eq.s32.totalorder %s14, 1
    %p67 = por %p65, %p66
    %p68 = scmp.ne.s32.totalorder %s59, %s60
    %p69 = scmp.eq.s32.totalorder %s14, 0
    %p70 = por %p68, %p69
    %p71 = scmp.ne.s32.totalorder %s59, %s60
    %p72 = scmp.eq.s32.totalorder %s15, 1
    %p73 = por %p71, %p72
    %p75 = scmp.ne.s32.totalorder %s60, %s74
    %p76 = scmp.eq.s32.totalorder %s15, 0
    %p77 = por %p75, %p76
    %s79 = sadd.s32 %s78, 1
    %p82 = scmp.eq.s32.totalorder %s9, 1
    %p83 = scmp.ne.s32.totalorder %s78, %s80
    %p84 = scmp.eq.s32.totalorder %s9, 0
    %p85 = por %p83, %p84
    %p86 = scmp.ne.s32.totalorder %s78, %s80
    %p87 = scmp.eq.s32.totalorder %s14, 1
    %p88 = por %p86, %p87
    %p89 = scmp.ne.s32.totalorder %s80, %s81
    %p90 = scmp.eq.s32.totalorder %s14, 0
    %p91 = por %p89, %p90
    %p92 = scmp.ne.s32.totalorder %s80, %s81
    %p93 = scmp.eq.s32.totalorder %s15, 1
    %p94 = por %p92, %p93
    %p96 = scmp.ne.s32.totalorder %s81, %s95
    %p97 = scmp.eq.s32.totalorder %s15, 0
    %p98 = por %p96, %p97
    %s99 = ssub.s32 %s16, %s28
    %s100 = ssub.s32 %s17, %s24
    %s101 = sor.u32 %s99, %s100
    %p102 = scmp.eq.s32.totalorder %s101, 0
    %s104 = sadd.s32 %s103, 1
    %s105 = scalar_select %p102, %s103, %s104
    %p108 = pneg %p102
    %p109 = scmp.eq.s32.totalorder %s9, 1
    %p110 = por %p108, %p109
    %p111 = scmp.ne.s32.totalorder %s103, %s106
    %p112 = scmp.eq.s32.totalorder %s9, 0
    %p113 = por %p111, %p112
    %p114 = scmp.ne.s32.totalorder %s103, %s106
    %p115 = scmp.eq.s32.totalorder %s14, 1
    %p116 = por %p114, %p115
    %p117 = scmp.ne.s32.totalorder %s106, %s107
    %p118 = scmp.eq.s32.totalorder %s14, 0
    %p119 = por %p117, %p118
    %p120 = scmp.ne.s32.totalorder %s106, %s107
    %p121 = scmp.eq.s32.totalorder %s15, 1
    %p122 = por %p120, %p121
    %p124 = scmp.ne.s32.totalorder %s107, %s123
    %p125 = scmp.eq.s32.totalorder %s15, 0
    %p126 = por %p124, %p125
    %p127 = scmp.le.s32.totalorder 1, %s9
    %p128 = scmp.lt.s32.totalorder %s9, 3
    %p129 = pnand %p127, %p128
    %p130 = pneg %p129
    // Predicated region
    $region9: #{convolution_block.5} parent=5 // pred_check
      _
    $region10: #{convolution_block.5} parent=5 // pred_check_branch
      %132 = sbr.rel (%p129) target = $region12
    $region11: #{convolution_block.5} parent=5 // pred_region
      %s133 = ssub.s32 %s9, 1
      // Predicated region
      $region13: #{convolution_block.5} parent=11 // pred_check
        %p134 = pneg %p70
      $region14: #{convolution_block.5} parent=11 // pred_check_branch
        %136 = sbr.rel (%p134) target = $region16
      $region15: #{convolution_block.5} parent=11 // pred_region
        _
      $region16: #{convolution_block.5} parent=11 // pred_fallthru
        _
      // Predicated region
      $region17: #{convolution_block.5} parent=11 // pred_check
        %p137 = pneg %p91
      $region18: #{convolution_block.5} parent=11 // pred_check_branch
        %139 = sbr.rel (%p137) target = $region20
      $region19: #{convolution_block.5} parent=11 // pred_region
        _
      $region20: #{convolution_block.5} parent=11 // pred_fallthru
        _
    $region12: #{convolution_block.5} parent=5 // pred_fallthru
      _
    %p140 = scmp.lt.s32.totalorder %s9, 2
    // Predicated region
    $region21: #{convolution_block.5} parent=5 // pred_check
      %p141 = pneg %p140
    $region22: #{convolution_block.5} parent=5 // pred_check_branch
      %143 = sbr.rel (%p141) target = $region24
    $region23: #{convolution_block.5} parent=5 // pred_region
      // Predicated region
      $region25: #{convolution_block.5} parent=23 // pred_check
        %p144 = pneg %p43
      $region26: #{convolution_block.5} parent=23 // pred_check_branch
        %146 = sbr.rel (%p144) target = $region28
      $region27: #{convolution_block.5} parent=23 // pred_region
        %s147 = smul.u32 4, %s17
        %p148 = scmp.lt.s32.totalorder %s16, 1
        %s149 = scalar_select %p148, %s16, 1
        %p150 = scmp.lt.s32.totalorder %s147, 3
        %s151 = scalar_select %p150, %s147, 3
        %s152 = smul.addr %s149, 4
        %s153 = sadd.s32 %s151, %s152
        %s154 = smul.addr %s153, 4
        %s155 = scalar_lea.vmem %s0, %s154
        %s156 = smul.u32 4, %s17
      $region28: #{convolution_block.5} parent=23 // pred_fallthru
        _
    $region24: #{convolution_block.5} parent=5 // pred_fallthru
      _
    %p157 = scmp.le.s32.totalorder 1, %s9
    %p158 = scmp.lt.s32.totalorder %s9, 3
    %p159 = pnand %p157, %p158
    %p160 = pneg %p159
    // Predicated region
    $region29: #{convolution_block.5} parent=5 // pred_check
      _
    $region30: #{convolution_block.5} parent=5 // pred_check_branch
      %162 = sbr.rel (%p159) target = $region32
    $region31: #{convolution_block.5} parent=5 // pred_region
      %s163 = ssub.s32 %s9, 1
      %s164 = smul.u32 4, %s19
      %p165 = scmp.lt.s32.totalorder %s18, 1
      %s166 = scalar_select %p165, %s18, 1
      %p167 = scmp.lt.s32.totalorder %s164, 3
      %s168 = scalar_select %p167, %s164, 3
      %s169 = smul.addr %s166, 4
      %s170 = sadd.s32 %s168, %s169
      %s171 = smul.addr %s170, 4
      %s172 = scalar_lea.vmem %s0, %s171
      %p173 = pneg %p49
      %p174 = pneg %p46
      %p175 = pneg %p70
      %p176 = pneg %p67
      %p177 = pneg %p91
      %p178 = pneg %p88
      %p179 = pneg %p119
      %p180 = pneg %p116
      %s181 = smul.u32 4, %s19
      %p182 = scmp.lt.s32.totalorder %s18, 1
      %s183 = scalar_select %p182, %s18, 1
      %p184 = scmp.lt.s32.totalorder %s181, 3
      %s185 = scalar_select %p184, %s181, 3
      %s186 = smul.addr %s183, 4
      %s187 = sadd.s32 %s185, %s186
      %s188 = smul.addr %s187, 8
      %s189 = scalar_lea.vmem %s3, %s188
      %s190 = smul.u32 4, %s19
      %p191 = scmp.lt.s32.totalorder %s18, 1
      %s192 = scalar_select %p191, %s18, 1
      %p193 = scmp.lt.s32.totalorder %s190, 3
      %s194 = scalar_select %p193, %s190, 3
      %s195 = smul.addr %s192, 4
      %s196 = sadd.s32 %s194, %s195
      %s197 = smul.addr %s196, 4
      %s198 = scalar_lea.vmem %s0, %s197
      %s199 = smul.u32 4, %s19
      %s200 = smul.u32 4, %s19
      %p201 = scmp.lt.s32.totalorder %s18, 1
      %s202 = scalar_select %p201, %s18, 1
      %p203 = scmp.lt.s32.totalorder %s200, 3
      %s204 = scalar_select %p203, %s200, 3
      %s205 = smul.addr %s202, 4
      %s206 = sadd.s32 %s204, %s205
      %s207 = smul.addr %s206, 8
      %s208 = scalar_lea.vmem %s3, %s207
      %s209 = smul.u32 4, %s19
      %v210 = vld [vmem:[%s198] sm:$0xff]
      %v211 = vld [vmem:[%s198 + $0x8] sm:$0xff]
      %v212 = vunpack.c.l.bf16 %v210
      %v213 = vunpack.c.h.bf16 %v210
      %v214 = vunpack.c.l.bf16 %v211
      %v215 = vunpack.c.h.bf16 %v211
      %v216 = vld [vmem:[%s1] sm:$0xff]
      %218 = vset.pattern.permute.xlu0 0
      %219 = vperm.xlu0 %218, %v216
      %v220 = vpop.permute.xlu0 %219
      %v222 = vmul.f32 %v212, %v220
      %v223 = vmul.f32 %v213, %v220
      %v224 = vmul.f32 %v214, %v220
      %v225 = vmul.f32 %v215, %v220
      %v226 = vld [vmem:[%s2] sm:$0xff]
      %228 = vset.pattern.permute.xlu0 0
      %229 = vperm.xlu0 %228, %v226
      %v230 = vpop.permute.xlu0 %229
      %v232 = vadd.f32 %v222, %v230
      %v233 = vadd.f32 %v223, %v230
      %v234 = vadd.f32 %v224, %v230
      %v235 = vadd.f32 %v225, %v230
      %v236 = vmax.f32 %v232, 0.0
      %v237 = vmax.f32 %v233, 0.0
      %v238 = vmax.f32 %v234, 0.0
      %v239 = vmax.f32 %v235, 0.0
      %240 = vst [vmem:[%s208] sm:$0xff] %v236
      %241 = vst [vmem:[%s208 + $0x8] sm:$0xff] %v237
      %242 = vst [vmem:[%s208 + $0x10] sm:$0xff] %v238
      %vm243 = vcmask 416768
      %244 = vst.msk [vmem:[%s208 + $0x18] sm:$0xff] %vm243, %v239
      %s245 = smul.u32 4, %s19
      %p246 = scmp.lt.s32.totalorder %s18, 1
      %s247 = scalar_select %p246, %s18, 1
      %p248 = scmp.lt.s32.totalorder %s245, 3
      %s249 = scalar_select %p248, %s245, 3
      %s250 = smul.addr %s247, 4
      %s251 = sadd.s32 %s249, %s250
      %s252 = smul.addr %s251, 8
      %s253 = scalar_lea.vmem %s3, %s252
      // Predicated region
      $region33: #{convolution_block.5} parent=31 // pred_check
        %p254 = pneg %p116
      $region34: #{convolution_block.5} parent=31 // pred_check_branch
        %256 = sbr.rel (%p254) target = $region36
      $region35: #{convolution_block.5} parent=31 // pred_region
        %s257 = smul.u32 4, %s19
      $region36: #{convolution_block.5} parent=31 // pred_fallthru
        _
    $region32: #{convolution_block.5} parent=5 // pred_fallthru
      _
    %p258 = scmp.le.s32.totalorder 2, %s9
    // Predicated region
    $region37: #{convolution_block.5} parent=5 // pred_check
      %p259 = pneg %p258
    $region38: #{convolution_block.5} parent=5 // pred_check_branch
      %261 = sbr.rel (%p259) target = $region40
    $region39: #{convolution_block.5} parent=5 // pred_region
      %s262 = ssub.s32 %s9, 2
      // Predicated region
      $region41: #{convolution_block.5} parent=39 // pred_check
        %p263 = pneg %p122
      $region42: #{convolution_block.5} parent=39 // pred_check_branch
        %265 = sbr.rel (%p263) target = $region44
      $region43: #{convolution_block.5} parent=39 // pred_region
        %s266 = smul.u32 4, %s21
        %p267 = scmp.lt.s32.totalorder %s20, 1
        %s268 = scalar_select %p267, %s20, 1
        %p269 = scmp.lt.s32.totalorder %s266, 3
        %s270 = scalar_select %p269, %s266, 3
        %s271 = smul.addr %s268, 4
        %s272 = sadd.s32 %s270, %s271
        %s273 = smul.addr %s272, 8
        %s274 = scalar_lea.vmem %s3, %s273
      $region44: #{convolution_block.5} parent=39 // pred_fallthru
        _
    $region40: #{convolution_block.5} parent=5 // pred_fallthru
      _
  $region6: #{convolution_block.5} parent=0 // loop_footer
    %s13 = sadd.s32 1, %s9
  $region7: #{convolution_block.5} parent=0 // loop_footer_branch
    %8 = sbr.rel target = $region3
  $region8: #{convolution_block.5} parent=0 // loop_exit
    _

// kernel: convolution_block.3
$region0: #{convolution_block.3}
  #allocation0 [shape = 'u32[]', space=smem, size = 0x4, offset = 0x4, fixed_abs, tag = 'smem constant byte address 0x4 - core index']
  #allocation1 [shape = 'u32[144,128]{1,0:T(1,128)}', space=vmem, size = 0x12000, scoped, tag = 'internal scratch']
  #allocation2 [shape = 'f32[8,288]{1,0:T(8,128)}', space=vmem, size = 0x3000, scoped, tag = 'scratch operand']
  %s0 = inlined_call_operand.vmem [shape: bf16[2,4,435], index: 0, kind: input, shape index: {}]
  %s1 = inlined_call_operand.vmem [shape: f32[4,1], index: 1, kind: input, shape index: {}]
  %s2 = inlined_call_operand.vmem [shape: f32[4,1], index: 2, kind: input, shape index: {}]
  %s3 = inlined_call_operand.vmem [shape: bf16[9,8,4], index: 3, kind: input, shape index: {}]
  %s4 = inlined_call_operand.vmem [shape: bf16[2,8,435], index: 4, kind: output, shape index: {0}]
  %s5 = inlined_call_operand.vmem [shape: f32[2,8,2], index: 5, kind: output, shape index: {1}]
  %6 = xla_tuple %s4, %s5
  %s7 = sld [smem:[#allocation0]]
  $region57: #{convolution_block.3} parent=0
    _
  %s9 = ssub.s32 1, %s7
  %s10 = scalar_select 0, %s9, %s7
  loop: start=0, step=1, limit=4
  $region2: #{convolution_block.3} parent=0 // loop_pre_header
    _
  $region3: #{convolution_block.3} parent=0 // loop_header
    %s12 = sphi 0, %s16
    %p13 = scmp.ge.s32.totalorder %s12, 4
    %s19 = sphi 0, %s31
    %s20 = sphi 0, %s27
    %s21 = sphi 0, %s19
    %s22 = sphi 0, %s20
    %s23 = sphi 0, %s21
    %s24 = sphi 0, %s22
    %s34 = sphi 0, %s36
    %s37 = sphi 0, %s34
    %s38 = sphi 0, %s37
    %s54 = sphi 0, %s38
    %s58 = sphi 0, %s58
    %s60 = sphi 0, %s58
    %s61 = sphi 0, %s60
    %s75 = sphi 0, %s61
    %s79 = sphi 0, %s79
    %s81 = sphi 0, %s79
    %s82 = sphi 0, %s81
    %s96 = sphi 0, %s82
    %s102 = sphi 0, %s104
    %s105 = sphi 0, %s102
    %s106 = sphi 0, %s105
    %s122 = sphi 0, %s106
    %s130 = sphi 0, %s132
    %s133 = sphi 0, %s130
    %s134 = sphi 0, %s133
    %s150 = sphi 0, %s134
    %s158 = sphi 0, %s160
    %s161 = sphi 0, %s158
    %s162 = sphi 0, %s161
    %s178 = sphi 0, %s162
  $region4: #{convolution_block.3} parent=0 // loop_header_branch
    %15 = sbr.rel (%p13) target = $region8
  $region5: #{convolution_block.3} parent=0 // loop_body
    %s17 = ssub.s32 %s12, 1
    %s18 = ssub.s32 %s12, 2
    %s25 = sadd.s32 1, %s20
    %p26 = scmp.ge.s32.totalorder %s25, 1
    %s27 = scalar_select %p26, 0, %s25
    %s28 = sadd.s32 1, %s19
    %s29 = scalar_select %p26, %s28, %s19
    %p30 = scmp.ge.s32.totalorder %s29, 2
    %s31 = scalar_select %p30, 0, %s29
    %s32 = ssub.s32 %s19, %s31
    %p33 = scmp.eq.s32.totalorder %s32, 0
    %s35 = sadd.s32 %s34, 1
    %s36 = scalar_select %p33, %s34, %s35
    %p39 = pneg %p33
    %p40 = scmp.eq.s32.totalorder %s12, 1
    %p41 = por %p39, %p40
    %p42 = scmp.ne.s32.totalorder %s34, %s37
    %p43 = scmp.eq.s32.totalorder %s12, 0
    %p44 = por %p42, %p43
    %p45 = scmp.ne.s32.totalorder %s34, %s37
    %p46 = scmp.eq.s32.totalorder %s17, 1
    %p47 = por %p45, %p46
    %p48 = scmp.ne.s32.totalorder %s37, %s38
    %p49 = scmp.eq.s32.totalorder %s17, 0
    %p50 = por %p48, %p49
    %p51 = scmp.ne.s32.totalorder %s37, %s38
    %p52 = scmp.eq.s32.totalorder %s18, 1
    %p53 = por %p51, %p52
    %p55 = scmp.ne.s32.totalorder %s38, %s54
    %p56 = scmp.eq.s32.totalorder %s18, 0
    %p57 = por %p55, %p56
    %s59 = sadd.s32 %s58, 1
    %p62 = scmp.eq.s32.totalorder %s12, 1
    %p63 = scmp.ne.s32.totalorder %s58, %s60
    %p64 = scmp.eq.s32.totalorder %s12, 0
    %p65 = por %p63, %p64
    %p66 = scmp.ne.s32.totalorder %s58, %s60
    %p67 = scmp.eq.s32.totalorder %s17, 1
    %p68 = por %p66, %p67
    %p69 = scmp.ne.s32.totalorder %s60, %s61
    %p70 = scmp.eq.s32.totalorder %s17, 0
    %p71 = por %p69, %p70
    %p72 = scmp.ne.s32.totalorder %s60, %s61
    %p73 = scmp.eq.s32.totalorder %s18, 1
    %p74 = por %p72, %p73
    %p76 = scmp.ne.s32.totalorder %s61, %s75
    %p77 = scmp.eq.s32.totalorder %s18, 0
    %p78 = por %p76, %p77
    %s80 = sadd.s32 %s79, 1
    %p83 = scmp.eq.s32.totalorder %s12, 1
    %p84 = scmp.ne.s32.totalorder %s79, %s81
    %p85 = scmp.eq.s32.totalorder %s12, 0
    %p86 = por %p84, %p85
    %p87 = scmp.ne.s32.totalorder %s79, %s81
    %p88 = scmp.eq.s32.totalorder %s17, 1
    %p89 = por %p87, %p88
    %p90 = scmp.ne.s32.totalorder %s81, %s82
    %p91 = scmp.eq.s32.totalorder %s17, 0
    %p92 = por %p90, %p91
    %p93 = scmp.ne.s32.totalorder %s81, %s82
    %p94 = scmp.eq.s32.totalorder %s18, 1
    %p95 = por %p93, %p94
    %p97 = scmp.ne.s32.totalorder %s82, %s96
    %p98 = scmp.eq.s32.totalorder %s18, 0
    %p99 = por %p97, %p98
    %s100 = ssub.s32 %s20, %s27
    %p101 = scmp.eq.s32.totalorder %s100, 0
    %s103 = sadd.s32 %s102, 1
    %s104 = scalar_select %p101, %s102, %s103
    %p107 = pneg %p101
    %p108 = scmp.eq.s32.totalorder %s12, 1
    %p109 = por %p107, %p108
    %p110 = scmp.ne.s32.totalorder %s102, %s105
    %p111 = scmp.eq.s32.totalorder %s12, 0
    %p112 = por %p110, %p111
    %p113 = scmp.ne.s32.totalorder %s102, %s105
    %p114 = scmp.eq.s32.totalorder %s17, 1
    %p115 = por %p113, %p114
    %p116 = scmp.ne.s32.totalorder %s105, %s106
    %p117 = scmp.eq.s32.totalorder %s17, 0
    %p118 = por %p116, %p117
    %p119 = scmp.ne.s32.totalorder %s105, %s106
    %p120 = scmp.eq.s32.totalorder %s18, 1
    %p121 = por %p119, %p120
    %p123 = scmp.ne.s32.totalorder %s106, %s122
    %p124 = scmp.eq.s32.totalorder %s18, 0
    %p125 = por %p123, %p124
    %s126 = ssub.s32 %s19, %s31
    %s127 = ssub.s32 %s20, %s27
    %s128 = sor.u32 %s126, %s127
    %p129 = scmp.eq.s32.totalorder %s128, 0
    %s131 = sadd.s32 %s130, 1
    %s132 = scalar_select %p129, %s130, %s131
    %p135 = pneg %p129
    %p136 = scmp.eq.s32.totalorder %s12, 1
    %p137 = por %p135, %p136
    %p138 = scmp.ne.s32.totalorder %s130, %s133
    %p139 = scmp.eq.s32.totalorder %s12, 0
    %p140 = por %p138, %p139
    %p141 = scmp.ne.s32.totalorder %s130, %s133
    %p142 = scmp.eq.s32.totalorder %s17, 1
    %p143 = por %p141, %p142
    %p144 = scmp.ne.s32.totalorder %s133, %s134
    %p145 = scmp.eq.s32.totalorder %s17, 0
    %p146 = por %p144, %p145
    %p147 = scmp.ne.s32.totalorder %s133, %s134
    %p148 = scmp.eq.s32.totalorder %s18, 1
    %p149 = por %p147, %p148
    %p151 = scmp.ne.s32.totalorder %s134, %s150
    %p152 = scmp.eq.s32.totalorder %s18, 0
    %p153 = por %p151, %p152
    %s154 = ssub.s32 %s19, %s31
    %s155 = ssub.s32 %s20, %s27
    %s156 = sor.u32 %s154, %s155
    %p157 = scmp.eq.s32.totalorder %s156, 0
    %s159 = sadd.s32 %s158, 1
    %s160 = scalar_select %p157, %s158, %s159
    %p163 = pneg %p157
    %p164 = scmp.eq.s32.totalorder %s12, 1
    %p165 = por %p163, %p164
    %p166 = scmp.ne.s32.totalorder %s158, %s161
    %p167 = scmp.eq.s32.totalorder %s12, 0
    %p168 = por %p166, %p167
    %p169 = scmp.ne.s32.totalorder %s158, %s161
    %p170 = scmp.eq.s32.totalorder %s17, 1
    %p171 = por %p169, %p170
    %p172 = scmp.ne.s32.totalorder %s161, %s162
    %p173 = scmp.eq.s32.totalorder %s17, 0
    %p174 = por %p172, %p173
    %p175 = scmp.ne.s32.totalorder %s161, %s162
    %p176 = scmp.eq.s32.totalorder %s18, 1
    %p177 = por %p175, %p176
    %p179 = scmp.ne.s32.totalorder %s162, %s178
    %p180 = scmp.eq.s32.totalorder %s18, 0
    %p181 = por %p179, %p180
    %p182 = scmp.le.s32.totalorder 1, %s12
    %p183 = scmp.lt.s32.totalorder %s12, 3
    %p184 = pnand %p182, %p183
    %p185 = pneg %p184
    // Predicated region
    $region9: #{convolution_block.3} parent=5 // pred_check
      _
    $region10: #{convolution_block.3} parent=5 // pred_check_branch
      %187 = sbr.rel (%p184) target = $region12
    $region11: #{convolution_block.3} parent=5 // pred_region
      %s188 = ssub.s32 %s12, 1
      // Predicated region
      $region13: #{convolution_block.3} parent=11 // pred_check
        %p189 = pneg %p71
      $region14: #{convolution_block.3} parent=11 // pred_check_branch
        %191 = sbr.rel (%p189) target = $region16
      $region15: #{convolution_block.3} parent=11 // pred_region
        _
      $region16: #{convolution_block.3} parent=11 // pred_fallthru
        _
      // Predicated region
      $region17: #{convolution_block.3} parent=11 // pred_check
        %p192 = pneg %p92
      $region18: #{convolution_block.3} parent=11 // pred_check_branch
        %194 = sbr.rel (%p192) target = $region20
      $region19: #{convolution_block.3} parent=11 // pred_region
        _
      $region20: #{convolution_block.3} parent=11 // pred_fallthru
        _
      // Predicated region
      $region21: #{convolution_block.3} parent=11 // pred_check
        %p195 = pneg %p118
      $region22: #{convolution_block.3} parent=11 // pred_check_branch
        %197 = sbr.rel (%p195) target = $region24
      $region23: #{convolution_block.3} parent=11 // pred_region
        %p198 = scmp.lt.s32.totalorder %s22, 0
        %s199 = scalar_select %p198, %s22, 0
        %s200 = smul.addr %s199, 4
        %s201 = scalar_lea.vmem %s3, %s200
      $region24: #{convolution_block.3} parent=11 // pred_fallthru
        _
    $region12: #{convolution_block.3} parent=5 // pred_fallthru
      _
    %p202 = scmp.lt.s32.totalorder %s12, 2
    // Predicated region
    $region25: #{convolution_block.3} parent=5 // pred_check
      %p203 = pneg %p202
    $region26: #{convolution_block.3} parent=5 // pred_check_branch
      %205 = sbr.rel (%p203) target = $region28
    $region27: #{convolution_block.3} parent=5 // pred_region
      // Predicated region
      $region29: #{convolution_block.3} parent=27 // pred_check
        %p206 = pneg %p44
      $region30: #{convolution_block.3} parent=27 // pred_check_branch
        %208 = sbr.rel (%p206) target = $region32
      $region31: #{convolution_block.3} parent=27 // pred_region
        %p209 = scmp.lt.s32.totalorder %s19, 1
        %s210 = scalar_select %p209, %s19, 1
        %s211 = smul.addr %s210, 4
        %s212 = smul.addr %s211, 2
        %s213 = scalar_lea.vmem %s0, %s212
      $region32: #{convolution_block.3} parent=27 // pred_fallthru
        _
    $region28: #{convolution_block.3} parent=5 // pred_fallthru
      _
    %p214 = scmp.le.s32.totalorder 1, %s12
    %p215 = scmp.lt.s32.totalorder %s12, 3
    %p216 = pnand %p214, %p215
    %p217 = pneg %p216
    // Predicated region
    $region33: #{convolution_block.3} parent=5 // pred_check
      _
    $region34: #{convolution_block.3} parent=5 // pred_check_branch
      %219 = sbr.rel (%p216) target = $region36
    $region35: #{convolution_block.3} parent=5 // pred_region
      %s220 = ssub.s32 %s12, 1
      %p221 = scmp.lt.s32.totalorder %s21, 1
      %s222 = scalar_select %p221, %s21, 1
      %s223 = smul.addr %s222, 4
      %s224 = smul.addr %s223, 2
      %s225 = scalar_lea.vmem %s0, %s224
      %p226 = pneg %p50
      %p227 = pneg %p47
      %p228 = pneg %p71
      %p229 = pneg %p68
      %p230 = pneg %p92
      %p231 = pneg %p89
      %p232 = scmp.lt.s32.totalorder %s22, 0
      %s233 = scalar_select %p232, %s22, 0
      %s234 = smul.addr %s233, 4
      %s235 = scalar_lea.vmem %s3, %s234
      %p236 = pneg %p118
      %p237 = pneg %p115
      %p238 = pneg %p146
      %p239 = pneg %p143
      %p240 = scmp.lt.s32.totalorder %s21, 1
      %s241 = scalar_select %p240, %s21, 1
      %p242 = scmp.lt.s32.totalorder %s22, 0
      %s243 = scalar_select %p242, %s22, 0
      %s244 = smul.addr %s243, 4
      %s245 = smul.addr %s241, 4
      %s246 = sadd.s32 %s244, %s245
      %s247 = smul.addr %s246, 4
      %s248 = scalar_lea.vmem %s4, %s247
      %p249 = pneg %p174
      %p250 = pneg %p171
      %p251 = scmp.lt.s32.totalorder %s21, 1
      %s252 = scalar_select %p251, %s21, 1
      %p253 = scmp.lt.s32.totalorder %s22, 0
      %s254 = scalar_select %p253, %s22, 0
      %s255 = sadd.s32 %s254, %s252
      %s256 = smul.addr %s255, 8
      %s257 = scalar_lea.vmem %s5, %s256
      %p258 = scmp.lt.s32.totalorder %s21, 1
      %s259 = scalar_select %p258, %s21, 1
      %s260 = smul.addr %s259, 4
      %s261 = smul.addr %s260, 2
      %s262 = scalar_lea.vmem %s0, %s261
      %p263 = scmp.lt.s32.totalorder %s22, 0
      %s264 = scalar_select %p263, %s22, 0
      %s265 = smul.addr %s264, 4
      %s266 = scalar_lea.vmem %s3, %s265
      %p267 = scmp.lt.s32.totalorder %s21, 1
      %s268 = scalar_select %p267, %s21, 1
      %p269 = scmp.lt.s32.totalorder %s22, 0
      %s270 = scalar_select %p269, %s22, 0
      %s271 = smul.addr %s270, 4
      %s272 = smul.addr %s268, 4
      %s273 = sadd.s32 %s271, %s272
      %s274 = smul.addr %s273, 4
      %s275 = scalar_lea.vmem %s4, %s274
      %p276 = scmp.lt.s32.totalorder %s21, 1
      %s277 = scalar_select %p276, %s21, 1
      %p278 = scmp.lt.s32.totalorder %s22, 0
      %s279 = scalar_select %p278, %s22, 0
      %s280 = sadd.s32 %s279, %s277
      %s281 = smul.addr %s280, 8
      %s282 = scalar_lea.vmem %s5, %s281
      %v284 = vld [vmem:[%s262] sm:$0xff]
      %v285 = vld [vmem:[%s266] sm:$0xf]
      %v287 = vcombine.high %v284, %v284
      %v289 = vunpack.c.l.s4 1983009808
      %v290 = vunpack.c.0.s8 %v289
      %v291 = vlaneseq
      %v292 = vshrl.u32 %v291, 7
      %v293 = vsub.s32 %v290, %v292
      %v294 = vrot.slane %v284, %v293
      %v296 = vunpack.c.l.s4 1983009808
      %v297 = vunpack.c.0.s8 %v296
      %v298 = vlaneseq
      %v299 = vshrl.u32 %v298, 7
      %v300 = vsub.s32 %v297, %v299
      %v301 = vrot.slane %v287, %v300
      %v302 = vcombine.high %v294, %v294
      %v303 = vcombine.high %v301, %v301
      %304 = vrot.lane.b32.xlu0 %v294, 19
      %v305 = vpop.permute.xlu0 %304
      %306 = vrot.lane.b32.xlu0 %v302, 19
      %v307 = vpop.permute.xlu0 %306
      %308 = vrot.lane.b32.xlu0 %v301, 19
      %v309 = vpop.permute.xlu0 %308
      %310 = vrot.lane.b32.xlu0 %v303, 19
      %v311 = vpop.permute.xlu0 %310
      %vm312 = vcmask 154624
      %v313 = vsel %vm312, %v305, %v307
      %v314 = vsel %vm312, %v307, %v309
      %v315 = vsel %vm312, %v309, %v311
      %vm316 = vcmask 31744
      %v318 = vsel %vm316, %v285, 0
      %vm320 = vcmask 1041408
      %v322 = vsel %vm320, %v313, 0
      %v325 = vsel %vm320, %v314, 0
      %v328 = vsel %vm320, %v315, 0
      %330 = vmatprep.subr.bf16.mxu0 %v325
      %331 = vmatpush1.bf16.msra.mxu0 %v322
      %332 = vmatprep.subr.bf16.mxu0 0
      %333 = vmatpush1.bf16.msra.mxu0 0
      %334 = vmatprep.subr.bf16.mxu0 0
      %335 = vmatpush1.bf16.msra.mxu0 0
      %336 = vmatprep.subr.bf16.mxu0 0
      %337 = vmatpush1.bf16.msra.mxu0 0
      %338 = vmatprep.subr.bf16.mxu0 0
      %339 = vmatpush1.bf16.msra.mxu0 0
      %340 = vmatprep.subr.bf16.mxu0 0
      %341 = vmatpush1.bf16.msra.mxu0 0
      %342 = vmatprep.subr.bf16.mxu0 0
      %343 = vmatpush1.bf16.msra.mxu0 0
      %344 = vmatprep.subr.bf16.mxu0 0
      %345 = vmatpush1.bf16.msra.mxu0 0
      %346 = vmatprep.subr.bf16.mxu0 0
      %347 = vmatpush1.bf16.msra.mxu0 0
      %348 = vmatprep.subr.bf16.mxu0 0
      %349 = vmatpush1.bf16.msra.mxu0 0
      %350 = vmatprep.subr.bf16.mxu0 0
      %351 = vmatpush1.bf16.msra.mxu0 0
      %352 = vmatprep.subr.bf16.mxu0 0
      %353 = vmatpush1.bf16.msra.mxu0 0
      %354 = vmatprep.subr.bf16.mxu0 0
      %355 = vmatpush1.bf16.msra.mxu0 0
      %356 = vmatprep.subr.bf16.mxu0 0
      %357 = vmatpush1.bf16.msra.mxu0 0
      %358 = vmatprep.subr.bf16.mxu0 0
      %359 = vmatpush1.bf16.msra.mxu0 0
      %360 = vmatprep.subr.bf16.mxu0 0
      %361 = vmatpush1.bf16.msra.mxu0 0
      %362 = vmatprep.mubr.bf16.mxu0 0
      %363 = vmatmul.mubr.bf16.gmra.mrb[0].mxu0 %v318
      %v364 = vpop.f32.mrb[0].mxu0
      %v365 = vadd.f32 0.0, %v364
      %v366 = vpop.f32.mrb[0].mxu0
      %v367 = vadd.f32 0.0, %v366
      %v368 = vpop.f32.mrb[0].mxu0
      %v369 = vpop.f32.mrb[0].mxu0
      %370 = vdwg.mxu0
      %371 = vmatprep.subr.bf16.mxu0 0
      %372 = vmatpush1.bf16.msra.mxu0 %v328
      %373 = vmatprep.subr.bf16.mxu0 0
      %374 = vmatpush1.bf16.msra.mxu0 0
      %375 = vmatprep.subr.bf16.mxu0 0
      %376 = vmatpush1.bf16.msra.mxu0 0
      %377 = vmatprep.subr.bf16.mxu0 0
      %378 = vmatpush1.bf16.msra.mxu0 0
      %379 = vmatprep.subr.bf16.mxu0 0
      %380 = vmatpush1.bf16.msra.mxu0 0
      %381 = vmatprep.subr.bf16.mxu0 0
      %382 = vmatpush1.bf16.msra.mxu0 0
      %383 = vmatprep.subr.bf16.mxu0 0
      %384 = vmatpush1.bf16.msra.mxu0 0
      %385 = vmatprep.subr.bf16.mxu0 0
      %386 = vmatpush1.bf16.msra.mxu0 0
      %387 = vmatprep.subr.bf16.mxu0 0
      %388 = vmatpush1.bf16.msra.mxu0 0
      %389 = vmatprep.subr.bf16.mxu0 0
      %390 = vmatpush1.bf16.msra.mxu0 0
      %391 = vmatprep.subr.bf16.mxu0 0
      %392 = vmatpush1.bf16.msra.mxu0 0
      %393 = vmatprep.subr.bf16.mxu0 0
      %394 = vmatpush1.bf16.msra.mxu0 0
      %395 = vmatprep.subr.bf16.mxu0 0
      %396 = vmatpush1.bf16.msra.mxu0 0
      %397 = vmatprep.subr.bf16.mxu0 0
      %398 = vmatpush1.bf16.msra.mxu0 0
      %399 = vmatprep.subr.bf16.mxu0 0
      %400 = vmatpush1.bf16.msra.mxu0 0
      %401 = vmatprep.subr.bf16.mxu0 0
      %402 = vmatpush1.bf16.msra.mxu0 0
      %403 = vmatprep.mubr.bf16.mxu0 0
      %404 = vmatmul.mubr.bf16.gmra.mrb[0].mxu0 %v318
      %v405 = vpop.f32.mrb[0].mxu0
      %v406 = vadd.f32 0.0, %v405
      %v407 = vpop.f32.mrb[0].mxu0
      %v408 = vpop.f32.mrb[0].mxu0
      %v409 = vpop.f32.mrb[0].mxu0
      %410 = vdwg.mxu0
      %411 = vst [vmem:[#allocation2] sm:$0xff] %v365
      %412 = vst [vmem:[#allocation2 + $0x8] sm:$0xff] %v367
      %vm413 = vcmask 261120
      %414 = vst.msk [vmem:[#allocation2 + $0x10] sm:$0xff] %vm413, %v406
      %v415 = vld [vmem:[%s262] sm:$0xff]
      %s416 = scalar_lea.vmem %s266, 4
      %v417 = vld [vmem:[%s416] sm:$0xf]
      %v419 = vcombine.high %v415, %v415
      %v421 = vunpack.c.l.s4 1983009808
      %v422 = vunpack.c.0.s8 %v421
      %v423 = vlaneseq
      %v424 = vshrl.u32 %v423, 7
      %v425 = vsub.s32 %v422, %v424
      %v426 = vrot.slane %v415, %v425
      %v428 = vunpack.c.l.s4 1983009808
      %v429 = vunpack.c.0.s8 %v428
      %v430 = vlaneseq
      %v431 = vshrl.u32 %v430, 7
      %v432 = vsub.s32 %v429, %v431
      %v433 = vrot.slane %v419, %v432
      %v434 = vcombine.high %v426, %v426
      %v435 = vcombine.high %v433, %v433
      %436 = vrot.lane.b32.xlu0 %v426, 18
      %v437 = vpop.permute.xlu0 %436
      %438 = vrot.lane.b32.xlu0 %v434, 18
      %v439 = vpop.permute.xlu0 %438
      %440 = vrot.lane.b32.xlu0 %v433, 18
      %v441 = vpop.permute.xlu0 %440
      %442 = vrot.lane.b32.xlu0 %v435, 18
      %v443 = vpop.permute.xlu0 %442
      %vm444 = vcmask 146432
      %v445 = vsel %vm444, %v437, %v439
      %v446 = vsel %vm444, %v439, %v441
      %v447 = vsel %vm444, %v441, %v443
      %v449 = vsel %vm316, %v417, 0
      %v452 = vsel %vm320, %v445, 0
      %v455 = vsel %vm320, %v446, 0
      %v458 = vsel %vm320, %v447, 0
      %460 = vmatprep.subr.bf16.mxu0 %v455
      %461 = vmatpush1.bf16.msra.mxu0 %v452
      %462 = vmatprep.subr.bf16.mxu0 0
      %463 = vmatpush1.bf16.msra.mxu0 0
      %464 = vmatprep.subr.bf16.mxu0 0
      %465 = vmatpush1.bf16.msra.mxu0 0
      %466 = vmatprep.subr.bf16.mxu0 0
      %467 = vmatpush1.bf16.msra.mxu0 0
      %468 = vmatprep.subr.bf16.mxu0 0
      %469 = vmatpush1.bf16.msra.mxu0 0
      %470 = vmatprep.subr.bf16.mxu0 0
      %471 = vmatpush1.bf16.msra.mxu0 0
      %472 = vmatprep.subr.bf16.mxu0 0
      %473 = vmatpush1.bf16.msra.mxu0 0
      %474 = vmatprep.subr.bf16.mxu0 0
      %475 = vmatpush1.bf16.msra.mxu0 0
      %476 = vmatprep.subr.bf16.mxu0 0
      %477 = vmatpush1.bf16.msra.mxu0 0
      %478 = vmatprep.subr.bf16.mxu0 0
      %479 = vmatpush1.bf16.msra.mxu0 0
      %480 = vmatprep.subr.bf16.mxu0 0
      %481 = vmatpush1.bf16.msra.mxu0 0
      %482 = vmatprep.subr.bf16.mxu0 0
      %483 = vmatpush1.bf16.msra.mxu0 0
      %484 = vmatprep.subr.bf16.mxu0 0
      %485 = vmatpush1.bf16.msra.mxu0 0
      %486 = vmatprep.subr.bf16.mxu0 0
      %487 = vmatpush1.bf16.msra.mxu0 0
      %488 = vmatprep.subr.bf16.mxu0 0
      %489 = vmatpush1.bf16.msra.mxu0 0
      %490 = vmatprep.subr.bf16.mxu0 0
      %491 = vmatpush1.bf16.msra.mxu0 0
      %492 = vmatprep.mubr.bf16.mxu0 0
      %493 = vmatmul.mubr.bf16.gmra.mrb[0].mxu0 %v449
      %v494 = vpop.f32.mrb[0].mxu0
      %v495 = vadd.f32 0.0, %v494
      %v496 = vpop.f32.mrb[0].mxu0
      %v497 = vadd.f32 0.0, %v496
      %v498 = vpop.f32.mrb[0].mxu0
      %v499 = vpop.f32.mrb[0].mxu0
      %500 = vdwg.mxu0
      %501 = vmatprep.subr.bf16.mxu0 0
      %502 = vmatpush1.bf16.msra.mxu0 %v458
      %503 = vmatprep.subr.bf16.mxu0 0
      %504 = vmatpush1.bf16.msra.mxu0 0
      %505 = vmatprep.subr.bf16.mxu0 0
      %506 = vmatpush1.bf16.msra.mxu0 0
      %507 = vmatprep.subr.bf16.mxu0 0
      %508 = vmatpush1.bf16.msra.mxu0 0
      %509 = vmatprep.subr.bf16.mxu0 0
      %510 = vmatpush1.bf16.msra.mxu0 0
      %511 = vmatprep.subr.bf16.mxu0 0
      %512 = vmatpush1.bf16.msra.mxu0 0
      %513 = vmatprep.subr.bf16.mxu0 0
      %514 = vmatpush1.bf16.msra.mxu0 0
      %515 = vmatprep.subr.bf16.mxu0 0
      %516 = vmatpush1.bf16.msra.mxu0 0
      %517 = vmatprep.subr.bf16.mxu0 0
      %518 = vmatpush1.bf16.msra.mxu0 0
      %519 = vmatprep.subr.bf16.mxu0 0
      %520 = vmatpush1.bf16.msra.mxu0 0
      %521 = vmatprep.subr.bf16.mxu0 0
      %522 = vmatpush1.bf16.msra.mxu0 0
      %523 = vmatprep.subr.bf16.mxu0 0
      %524 = vmatpush1.bf16.msra.mxu0 0
      %525 = vmatprep.subr.bf16.mxu0 0
      %526 = vmatpush1.bf16.msra.mxu0 0
      %527 = vmatprep.subr.bf16.mxu0 0
      %528 = vmatpush1.bf16.msra.mxu0 0
      %529 = vmatprep.subr.bf16.mxu0 0
      %530 = vmatpush1.bf16.msra.mxu0 0
      %531 = vmatprep.subr.bf16.mxu0 0
      %532 = vmatpush1.bf16.msra.mxu0 0
      %533 = vmatprep.mubr.bf16.mxu0 0
      %534 = vmatmul.mubr.bf16.gmra.mrb[0].mxu0 %v449
      %v535 = vpop.f32.mrb[0].mxu0
      %v536 = vadd.f32 0.0, %v535
      %v537 = vpop.f32.mrb[0].mxu0
      %v538 = vpop.f32.mrb[0].mxu0
      %v539 = vpop.f32.mrb[0].mxu0
      %540 = vdwg.mxu0
      %v541 = vld [vmem:[#allocation2] sm:$0xff]
      %v542 = vld [vmem:[#allocation2 + $0x8] sm:$0xff]
      %v543 = vld [vmem:[#allocation2 + $0x10] sm:$0xff]
      %v544 = vadd.f32 %v541, %v495
      %v545 = vadd.f32 %v542, %v497
      %v546 = vadd.f32 %v543, %v536
      %547 = vst [vmem:[#allocation2] sm:$0xff] %v544
      %548 = vst [vmem:[#allocation2 + $0x8] sm:$0xff] %v545
      %549 = vst.msk [vmem:[#allocation2 + $0x10] sm:$0xff] %vm413, %v546
      %v550 = vld [vmem:[%s262] sm:$0xff]
      %s551 = scalar_lea.vmem %s266, 8
      %v552 = vld [vmem:[%s551] sm:$0xf]
      %v554 = vcombine.high %v550, %v550
      %v556 = vunpack.c.l.s4 1983009808
      %v557 = vunpack.c.0.s8 %v556
      %v558 = vlaneseq
      %v559 = vshrl.u32 %v558, 7
      %v560 = vsub.s32 %v557, %v559
      %v561 = vrot.slane %v550, %v560
      %v563 = vunpack.c.l.s4 1983009808
      %v564 = vunpack.c.0.s8 %v563
      %v565 = vlaneseq
      %v566 = vshrl.u32 %v565, 7
      %v567 = vsub.s32 %v564, %v566
      %v568 = vrot.slane %v554, %v567
      %v569 = vcombine.high %v561, %v561
      %v570 = vcombine.high %v568, %v568
      %571 = vrot.lane.b32.xlu0 %v561, 17
      %v572 = vpop.permute.xlu0 %571
      %573 = vrot.lane.b32.xlu0 %v569, 17
      %v574 = vpop.permute.xlu0 %573
      %575 = vrot.lane.b32.xlu0 %v568, 17
      %v576 = vpop.permute.xlu0 %575
      %577 = vrot.lane.b32.xlu0 %v570, 17
      %v578 = vpop.permute.xlu0 %577
      %vm579 = vcmask 138240
      %v580 = vsel %vm579, %v572, %v574
      %v581 = vsel %vm579, %v574, %v576
      %v582 = vsel %vm579, %v576, %v578
      %v584 = vsel %vm316, %v552, 0
      %v587 = vsel %vm320, %v580, 0
      %v590 = vsel %vm320, %v581, 0
      %v593 = vsel %vm320, %v582, 0
      %595 = vmatprep.subr.bf16.mxu0 %v590
      %596 = vmatpush1.bf16.msra.mxu0 %v587
      %597 = vmatprep.subr.bf16.mxu0 0
      %598 = vmatpush1.bf16.msra.mxu0 0
      %599 = vmatprep.subr.bf16.mxu0 0
      %600 = vmatpush1.bf16.msra.mxu0 0
      %601 = vmatprep.subr.bf16.mxu0 0
      %602 = vmatpush1.bf16.msra.mxu0 0
      %603 = vmatprep.subr.bf16.mxu0 0
      %604 = vmatpush1.bf16.msra.mxu0 0
      %605 = vmatprep.subr.bf16.mxu0 0
      %606 = vmatpush1.bf16.msra.mxu0 0
      %607 = vmatprep.subr.bf16.mxu0 0
      %608 = vmatpush1.bf16.msra.mxu0 0
      %609 = vmatprep.subr.bf16.mxu0 0
      %610 = vmatpush1.bf16.msra.mxu0 0
      %611 = vmatprep.subr.bf16.mxu0 0
      %612 = vmatpush1.bf16.msra.mxu0 0
      %613 = vmatprep.subr.bf16.mxu0 0
      %614 = vmatpush1.bf16.msra.mxu0 0
      %615 = vmatprep.subr.bf16.mxu0 0
      %616 = vmatpush1.bf16.msra.mxu0 0
      %617 = vmatprep.subr.bf16.mxu0 0
      %618 = vmatpush1.bf16.msra.mxu0 0
      %619 = vmatprep.subr.bf16.mxu0 0
      %620 = vmatpush1.bf16.msra.mxu0 0
      %621 = vmatprep.subr.bf16.mxu0 0
      %622 = vmatpush1.bf16.msra.mxu0 0
      %623 = vmatprep.subr.bf16.mxu0 0
      %624 = vmatpush1.bf16.msra.mxu0 0
      %625 = vmatprep.subr.bf16.mxu0 0
      %626 = vmatpush1.bf16.msra.mxu0 0
      %627 = vmatprep.mubr.bf16.mxu0 0
      %628 = vmatmul.mubr.bf16.gmra.mrb[0].mxu0 %v584
      %v629 = vpop.f32.mrb[0].mxu0
      %v630 = vadd.f32 0.0, %v629
      %v631 = vpop.f32.mrb[0].mxu0
      %v632 = vadd.f32 0.0, %v631
      %v633 = vpop.f32.mrb[0].mxu0
      %v634 = vpop.f32.mrb[0].mxu0
      %635 = vdwg.mxu0
      %636 = vmatprep.subr.bf16.mxu0 0
      %637 = vmatpush1.bf16.msra.mxu0 %v593
      %638 = vmatprep.subr.bf16.mxu0 0
      %639 = vmatpush1.bf16.msra.mxu0 0
      %640 = vmatprep.subr.bf16.mxu0 0
      %641 = vmatpush1.bf16.msra.mxu0 0
      %642 = vmatprep.subr.bf16.mxu0 0
      %643 = vmatpush1.bf16.msra.mxu0 0
      %644 = vmatprep.subr.bf16.mxu0 0
      %645 = vmatpush1.bf16.msra.mxu0 0
      %646 = vmatprep.subr.bf16.mxu0 0
      %647 = vmatpush1.bf16.msra.mxu0 0
      %648 = vmatprep.subr.bf16.mxu0 0
      %649 = vmatpush1.bf16.msra.mxu0 0
      %650 = vmatprep.subr.bf16.mxu0 0
      %651 = vmatpush1.bf16.msra.mxu0 0
      %652 = vmatprep.subr.bf16.mxu0 0
      %653 = vmatpush1.bf16.msra.mxu0 0
      %654 = vmatprep.subr.bf16.mxu0 0
      %655 = vmatpush1.bf16.msra.mxu0 0
      %656 = vmatprep.subr.bf16.mxu0 0
      %657 = vmatpush1.bf16.msra.mxu0 0
      %658 = vmatprep.subr.bf16.mxu0 0
      %659 = vmatpush1.bf16.msra.mxu0 0
      %660 = vmatprep.subr.bf16.mxu0 0
      %661 = vmatpush1.bf16.msra.mxu0 0
      %662 = vmatprep.subr.bf16.mxu0 0
      %663 = vmatpush1.bf16.msra.mxu0 0
      %664 = vmatprep.subr.bf16.mxu0 0
      %665 = vmatpush1.bf16.msra.mxu0 0
      %666 = vmatprep.subr.bf16.mxu0 0
      %667 = vmatpush1.bf16.msra.mxu0 0
      %668 = vmatprep.mubr.bf16.mxu0 0
      %669 = vmatmul.mubr.bf16.gmra.mrb[0].mxu0 %v584
      %v670 = vpop.f32.mrb[0].mxu0
      %v671 = vadd.f32 0.0, %v670
      %v672 = vpop.f32.mrb[0].mxu0
      %v673 = vpop.f32.mrb[0].mxu0
      %v674 = vpop.f32.mrb[0].mxu0
      %675 = vdwg.mxu0
      %v676 = vld [vmem:[#allocation2] sm:$0xff]
      %v677 = vld [vmem:[#allocation2 + $0x8] sm:$0xff]
      %v678 = vld [vmem:[#allocation2 + $0x10] sm:$0xff]
      %v679 = vadd.f32 %v676, %v630
      %v680 = vadd.f32 %v677, %v632
      %v681 = vadd.f32 %v678, %v671
      %682 = vst [vmem:[#allocation2] sm:$0xff] %v679
      %683 = vst [vmem:[#allocation2 + $0x8] sm:$0xff] %v680
      %684 = vst.msk [vmem:[#allocation2 + $0x10] sm:$0xff] %vm413, %v681
      %v685 = vld [vmem:[%s262] sm:$0xff]
      %s686 = scalar_lea.vmem %s266, 12
      %v687 = vld [vmem:[%s686] sm:$0xf]
      %v689 = vcombine.high %v685, %v685
      %v691 = vunpack.c.l.s4 1983009808
      %v692 = vunpack.c.0.s8 %v691
      %v693 = vlaneseq
      %v694 = vshrl.u32 %v693, 7
      %v695 = vsub.s32 %v692, %v694
      %v696 = vrot.slane %v685, %v695
      %v698 = vunpack.c.l.s4 1983009808
      %v699 = vunpack.c.0.s8 %v698
      %v700 = vlaneseq
      %v701 = vshrl.u32 %v700, 7
      %v702 = vsub.s32 %v699, %v701
      %v703 = vrot.slane %v689, %v702
      %v704 = vcombine.high %v696, %v696
      %v705 = vcombine.high %v703, %v703
      %706 = vrot.lane.b32.xlu0 %v696, 1
      %v707 = vpop.permute.xlu0 %706
      %708 = vrot.lane.b32.xlu0 %v704, 1
      %v709 = vpop.permute.xlu0 %708
      %710 = vrot.lane.b32.xlu0 %v703, 1
      %v711 = vpop.permute.xlu0 %710
      %712 = vrot.lane.b32.xlu0 %v705, 1
      %v713 = vpop.permute.xlu0 %712
      %vm714 = vcmask 7168
      %v715 = vsel %vm714, %v707, %v709
      %v716 = vsel %vm714, %v709, %v711
      %v717 = vsel %vm714, %v711, %v713
      %v719 = vsel %vm316, %v687, 0
      %v722 = vsel %vm320, %v715, 0
      %v725 = vsel %vm320, %v716, 0
      %v728 = vsel %vm320, %v717, 0
      %730 = vmatprep.subr.bf16.mxu0 %v725
      %731 = vmatpush1.bf16.msra.mxu0 %v722
      %732 = vmatprep.subr.bf16.mxu0 0
      %733 = vmatpush1.bf16.msra.mxu0 0
      %734 = vmatprep.subr.bf16.mxu0 0
      %735 = vmatpush1.bf16.msra.mxu0 0
      %736 = vmatprep.subr.bf16.mxu0 0
      %737 = vmatpush1.bf16.msra.mxu0 0
      %738 = vmatprep.subr.bf16.mxu0 0
      %739 = vmatpush1.bf16.msra.mxu0 0
      %740 = vmatprep.subr.bf16.mxu0 0
      %741 = vmatpush1.bf16.msra.mxu0 0
      %742 = vmatprep.subr.bf16.mxu0 0
      %743 = vmatpush1.bf16.msra.mxu0 0
      %744 = vmatprep.subr.bf16.mxu0 0
      %745 = vmatpush1.bf16.msra.mxu0 0
      %746 = vmatprep.subr.bf16.mxu0 0
      %747 = vmatpush1.bf16.msra.mxu0 0
      %748 = vmatprep.subr.bf16.mxu0 0
      %749 = vmatpush1.bf16.msra.mxu0 0
      %750 = vmatprep.subr.bf16.mxu0 0
      %751 = vmatpush1.bf16.msra.mxu0 0
      %752 = vmatprep.subr.bf16.mxu0 0
      %753 = vmatpush1.bf16.msra.mxu0 0
      %754 = vmatprep.subr.bf16.mxu0 0
      %755 = vmatpush1.bf16.msra.mxu0 0
      %756 = vmatprep.subr.bf16.mxu0 0
      %757 = vmatpush1.bf16.msra.mxu0 0
      %758 = vmatprep.subr.bf16.mxu0 0
      %759 = vmatpush1.bf16.msra.mxu0 0
      %760 = vmatprep.subr.bf16.mxu0 0
      %761 = vmatpush1.bf16.msra.mxu0 0
      %762 = vmatprep.mubr.bf16.mxu0 0
      %763 = vmatmul.mubr.bf16.gmra.mrb[0].mxu0 %v719
      %v764 = vpop.f32.mrb[0].mxu0
      %v765 = vadd.f32 0.0, %v764
      %v766 = vpop.f32.mrb[0].mxu0
      %v767 = vadd.f32 0.0, %v766
      %v768 = vpop.f32.mrb[0].mxu0
      %v769 = vpop.f32.mrb[0].mxu0
      %770 = vdwg.mxu0
      %771 = vmatprep.subr.bf16.mxu0 0
      %772 = vmatpush1.bf16.msra.mxu0 %v728
      %773 = vmatprep.subr.bf16.mxu0 0
      %774 = vmatpush1.bf16.msra.mxu0 0
      %775 = vmatprep.subr.bf16.mxu0 0
      %776 = vmatpush1.bf16.msra.mxu0 0
      %777 = vmatprep.subr.bf16.mxu0 0
      %778 = vmatpush1.bf16.msra.mxu0 0
      %779 = vmatprep.subr.bf16.mxu0 0
      %780 = vmatpush1.bf16.msra.mxu0 0
      %781 = vmatprep.subr.bf16.mxu0 0
      %782 = vmatpush1.bf16.msra.mxu0 0
      %783 = vmatprep.subr.bf16.mxu0 0
      %784 = vmatpush1.bf16.msra.mxu0 0
      %785 = vmatprep.subr.bf16.mxu0 0
      %786 = vmatpush1.bf16.msra.mxu0 0
      %787 = vmatprep.subr.bf16.mxu0 0
      %788 = vmatpush1.bf16.msra.mxu0 0
      %789 = vmatprep.subr.bf16.mxu0 0
      %790 = vmatpush1.bf16.msra.mxu0 0
      %791 = vmatprep.subr.bf16.mxu0 0
      %792 = vmatpush1.bf16.msra.mxu0 0
      %793 = vmatprep.subr.bf16.mxu0 0
      %794 = vmatpush1.bf16.msra.mxu0 0
      %795 = vmatprep.subr.bf16.mxu0 0
      %796 = vmatpush1.bf16.msra.mxu0 0
      %797 = vmatprep.subr.bf16.mxu0 0
      %798 = vmatpush1.bf16.msra.mxu0 0
      %799 = vmatprep.subr.bf16.mxu0 0
      %800 = vmatpush1.bf16.msra.mxu0 0
      %801 = vmatprep.subr.bf16.mxu0 0
      %802 = vmatpush1.bf16.msra.mxu0 0
      %803 = vmatprep.mubr.bf16.mxu0 0
      %804 = vmatmul.mubr.bf16.gmra.mrb[0].mxu0 %v719
      %v805 = vpop.f32.mrb[0].mxu0
      %v806 = vadd.f32 0.0, %v805
      %v807 = vpop.f32.mrb[0].mxu0
      %v808 = vpop.f32.mrb[0].mxu0
      %v809 = vpop.f32.mrb[0].mxu0
      %810 = vdwg.mxu0
      %v811 = vld [vmem:[#allocation2] sm:$0xff]
      %v812 = vld [vmem:[#allocation2 + $0x8] sm:$0xff]
      %v813 = vld [vmem:[#allocation2 + $0x10] sm:$0xff]
      %v814 = vadd.f32 %v811, %v765
      %v815 = vadd.f32 %v812, %v767
      %v816 = vadd.f32 %v813, %v806
      %817 = vst [vmem:[#allocation2] sm:$0xff] %v814
      %818 = vst [vmem:[#allocation2 + $0x8] sm:$0xff] %v815
      %819 = vst.msk [vmem:[#allocation2 + $0x10] sm:$0xff] %vm413, %v816
      %v820 = vld [vmem:[%s262 + $0x2] sm:$0x3f]
      %s821 = scalar_lea.vmem %s266, 16
      %v822 = vld [vmem:[%s821] sm:$0xf]
      %v824 = vcombine.high %v820, %v820
      %v826 = vunpack.c.l.s4 1983009808
      %v827 = vunpack.c.0.s8 %v826
      %v828 = vlaneseq
      %v829 = vshrl.u32 %v828, 7
      %v830 = vsub.s32 %v827, %v829
      %v831 = vrot.slane %v820, %v830
      %v833 = vunpack.c.l.s4 1983009808
      %v834 = vunpack.c.0.s8 %v833
      %v835 = vlaneseq
      %v836 = vshrl.u32 %v835, 7
      %v837 = vsub.s32 %v834, %v836
      %v838 = vrot.slane %v824, %v837
      %v839 = vcombine.high %v831, %v831
      %v841 = vsel %vm316, %v822, 0
      %v844 = vsel %vm320, %v831, 0
      %v847 = vsel %vm320, %v839, 0
      %v850 = vsel %vm320, %v838, 0
      %852 = vmatprep.subr.bf16.mxu0 %v847
      %853 = vmatpush1.bf16.msra.mxu0 %v844
      %854 = vmatprep.subr.bf16.mxu0 0
      %855 = vmatpush1.bf16.msra.mxu0 0
      %856 = vmatprep.subr.bf16.mxu0 0
      %857 = vmatpush1.bf16.msra.mxu0 0
      %858 = vmatprep.subr.bf16.mxu0 0
      %859 = vmatpush1.bf16.msra.mxu0 0
      %860 = vmatprep.subr.bf16.mxu0 0
      %861 = vmatpush1.bf16.msra.mxu0 0
      %862 = vmatprep.subr.bf16.mxu0 0
      %863 = vmatpush1.bf16.msra.mxu0 0
      %864 = vmatprep.subr.bf16.mxu0 0
      %865 = vmatpush1.bf16.msra.mxu0 0
      %866 = vmatprep.subr.bf16.mxu0 0
      %867 = vmatpush1.bf16.msra.mxu0 0
      %868 = vmatprep.subr.bf16.mxu0 0
      %869 = vmatpush1.bf16.msra.mxu0 0
      %870 = vmatprep.subr.bf16.mxu0 0
      %871 = vmatpush1.bf16.msra.mxu0 0
      %872 = vmatprep.subr.bf16.mxu0 0
      %873 = vmatpush1.bf16.msra.mxu0 0
      %874 = vmatprep.subr.bf16.mxu0 0
      %875 = vmatpush1.bf16.msra.mxu0 0
      %876 = vmatprep.subr.bf16.mxu0 0
      %877 = vmatpush1.bf16.msra.mxu0 0
      %878 = vmatprep.subr.bf16.mxu0 0
      %879 = vmatpush1.bf16.msra.mxu0 0
      %880 = vmatprep.subr.bf16.mxu0 0
      %881 = vmatpush1.bf16.msra.mxu0 0
      %882 = vmatprep.subr.bf16.mxu0 0
      %883 = vmatpush1.bf16.msra.mxu0 0
      %884 = vmatprep.mubr.bf16.mxu0 0
      %885 = vmatmul.mubr.bf16.gmra.mrb[0].mxu0 %v841
      %v886 = vpop.f32.mrb[0].mxu0
      %v887 = vadd.f32 0.0, %v886
      %v888 = vpop.f32.mrb[0].mxu0
      %v889 = vadd.f32 0.0, %v888
      %v890 = vpop.f32.mrb[0].mxu0
      %v891 = vpop.f32.mrb[0].mxu0
      %892 = vdwg.mxu0
      %893 = vmatprep.subr.bf16.mxu0 0
      %894 = vmatpush1.bf16.msra.mxu0 %v850
      %895 = vmatprep.subr.bf16.mxu0 0
      %896 = vmatpush1.bf16.msra.mxu0 0
      %897 = vmatprep.subr.bf16.mxu0 0
      %898 = vmatpush1.bf16.msra.mxu0 0
      %899 = vmatprep.subr.bf16.mxu0 0
      %900 = vmatpush1.bf16.msra.mxu0 0
      %901 = vmatprep.subr.bf16.mxu0 0
      %902 = vmatpush1.bf16.msra.mxu0 0
      %903 = vmatprep.subr.bf16.mxu0 0
      %904 = vmatpush1.bf16.msra.mxu0 0
      %905 = vmatprep.subr.bf16.mxu0 0
      %906 = vmatpush1.bf16.msra.mxu0 0
      %907 = vmatprep.subr.bf16.mxu0 0
      %908 = vmatpush1.bf16.msra.mxu0 0
      %909 = vmatprep.subr.bf16.mxu0 0
      %910 = vmatpush1.bf16.msra.mxu0 0
      %911 = vmatprep.subr.bf16.mxu0 0
      %912 = vmatpush1.bf16.msra.mxu0 0
      %913 = vmatprep.subr.bf16.mxu0 0
      %914 = vmatpush1.bf16.msra.mxu0 0
      %915 = vmatprep.subr.bf16.mxu0 0
      %916 = vmatpush1.bf16.msra.mxu0 0
      %917 = vmatprep.subr.bf16.mxu0 0
      %918 = vmatpush1.bf16.msra.mxu0 0
      %919 = vmatprep.subr.bf16.mxu0 0
      %920 = vmatpush1.bf16.msra.mxu0 0
      %921 = vmatprep.subr.bf16.mxu0 0
      %922 = vmatpush1.bf16.msra.mxu0 0
      %923 = vmatprep.subr.bf16.mxu0 0
      %924 = vmatpush1.bf16.msra.mxu0 0
      %925 = vmatprep.mubr.bf16.mxu0 0
      %926 = vmatmul.mubr.bf16.gmra.mrb[0].mxu0 %v841
      %v927 = vpop.f32.mrb[0].mxu0
      %v928 = vadd.f32 0.0, %v927
      %v929 = vpop.f32.mrb[0].mxu0
      %v930 = vpop.f32.mrb[0].mxu0
      %v931 = vpop.f32.mrb[0].mxu0
      %932 = vdwg.mxu0
      %v933 = vld [vmem:[#allocation2] sm:$0xff]
      %v934 = vld [vmem:[#allocation2 + $0x8] sm:$0xff]
      %v935 = vld [vmem:[#allocation2 + $0x10] sm:$0xff]
      %v936 = vadd.f32 %v933, %v887
      %v937 = vadd.f32 %v934, %v889
      %v938 = vadd.f32 %v935, %v928
      %939 = vst [vmem:[#allocation2] sm:$0xff] %v936
      %940 = vst [vmem:[#allocation2 + $0x8] sm:$0xff] %v937
      %941 = vst.msk [vmem:[#allocation2 + $0x10] sm:$0xff] %vm413, %v938
      %v942 = vld [vmem:[%s262 + $0x2] sm:$0x3f]
      %s943 = scalar_lea.vmem %s266, 20
      %v944 = vld [vmem:[%s943] sm:$0xf]
      %v946 = vcombine.high %v942, %v942
      %v948 = vunpack.c.l.s4 1983009808
      %v949 = vunpack.c.0.s8 %v948
      %v950 = vlaneseq
      %v951 = vshrl.u32 %v950, 7
      %v952 = vsub.s32 %v949, %v951
      %v953 = vrot.slane %v942, %v952
      %v955 = vunpack.c.l.s4 1983009808
      %v956 = vunpack.c.0.s8 %v955
      %v957 = vlaneseq
      %v958 = vshrl.u32 %v957, 7
      %v959 = vsub.s32 %v956, %v958
      %v960 = vrot.slane %v946, %v959
      %v961 = vcombine.high %v953, %v953
      %962 = vrot.lane.b32.xlu0 %v953, 127
      %v963 = vpop.permute.xlu0 %962
      %964 = vrot.lane.b32.xlu0 %v961, 127
      %v965 = vpop.permute.xlu0 %964
      %966 = vrot.lane.b32.xlu0 %v960, 127
      %v967 = vpop.permute.xlu0 %966
      %vm968 = vcmask 1039360
      %v969 = vsel %vm968, %v963, %v965
      %v970 = vsel %vm968, %v965, %v967
      %v972 = vsel %vm316, %v944, 0
      %v975 = vsel %vm320, %v969, 0
      %v978 = vsel %vm320, %v970, 0
      %v981 = vsel %vm320, %v967, 0
      %983 = vmatprep.subr.bf16.mxu0 %v978
      %984 = vmatpush1.bf16.msra.mxu0 %v975
      %985 = vmatprep.subr.bf16.mxu0 0
      %986 = vmatpush1.bf16.msra.mxu0 0
      %987 = vmatprep.subr.bf16.mxu0 0
      %988 = vmatpush1.bf16.msra.mxu0 0
      %989 = vmatprep.subr.bf16.mxu0 0
      %990 = vmatpush1.bf16.msra.mxu0 0
      %991 = vmatprep.subr.bf16.mxu0 0
      %992 = vmatpush1.bf16.msra.mxu0 0
      %993 = vmatprep.subr.bf16.mxu0 0
      %994 = vmatpush1.bf16.msra.mxu0 0
      %995 = vmatprep.subr.bf16.mxu0 0
      %996 = vmatpush1.bf16.msra.mxu0 0
      %997 = vmatprep.subr.bf16.mxu0 0
      %998 = vmatpush1.bf16.msra.mxu0 0
      %999 = vmatprep.subr.bf16.mxu0 0
      %1000 = vmatpush1.bf16.msra.mxu0 0
      %1001 = vmatprep.subr.bf16.mxu0 0
      %1002 = vmatpush1.bf16.msra.mxu0 0
      %1003 = vmatprep.subr.bf16.mxu0 0
      %1004 = vmatpush1.bf16.msra.mxu0 0
      %1005 = vmatprep.subr.bf16.mxu0 0
      %1006 = vmatpush1.bf16.msra.mxu0 0
      %1007 = vmatprep.subr.bf16.mxu0 0
      %1008 = vmatpush1.bf16.msra.mxu0 0
      %1009 = vmatprep.subr.bf16.mxu0 0
      %1010 = vmatpush1.bf16.msra.mxu0 0
      %1011 = vmatprep.subr.bf16.mxu0 0
      %1012 = vmatpush1.bf16.msra.mxu0 0
      %1013 = vmatprep.subr.bf16.mxu0 0
      %1014 = vmatpush1.bf16.msra.mxu0 0
      %1015 = vmatprep.mubr.bf16.mxu0 0
      %1016 = vmatmul.mubr.bf16.gmra.mrb[0].mxu0 %v972
      %v1017 = vpop.f32.mrb[0].mxu0
      %v1018 = vadd.f32 0.0, %v1017
      %v1019 = vpop.f32.mrb[0].mxu0
      %v1020 = vadd.f32 0.0, %v1019
      %v1021 = vpop.f32.mrb[0].mxu0
      %v1022 = vpop.f32.mrb[0].mxu0
      %1023 = vdwg.mxu0
      %1024 = vmatprep.subr.bf16.mxu0 0
      %1025 = vmatpush1.bf16.msra.mxu0 %v981
      %1026 = vmatprep.subr.bf16.mxu0 0
      %1027 = vmatpush1.bf16.msra.mxu0 0
      %1028 = vmatprep.subr.bf16.mxu0 0
      %1029 = vmatpush1.bf16.msra.mxu0 0
      %1030 = vmatprep.subr.bf16.mxu0 0
      %1031 = vmatpush1.bf16.msra.mxu0 0
      %1032 = vmatprep.subr.bf16.mxu0 0
      %1033 = vmatpush1.bf16.msra.mxu0 0
      %1034 = vmatprep.subr.bf16.mxu0 0
      %1035 = vmatpush1.bf16.msra.mxu0 0
      %1036 = vmatprep.subr.bf16.mxu0 0
      %1037 = vmatpush1.bf16.msra.mxu0 0
      %1038 = vmatprep.subr.bf16.mxu0 0
      %1039 = vmatpush1.bf16.msra.mxu0 0
      %1040 = vmatprep.subr.bf16.mxu0 0
      %1041 = vmatpush1.bf16.msra.mxu0 0
      %1042 = vmatprep.subr.bf16.mxu0 0
      %1043 = vmatpush1.bf16.msra.mxu0 0
      %1044 = vmatprep.subr.bf16.mxu0 0
      %1045 = vmatpush1.bf16.msra.mxu0 0
      %1046 = vmatprep.subr.bf16.mxu0 0
      %1047 = vmatpush1.bf16.msra.mxu0 0
      %1048 = vmatprep.subr.bf16.mxu0 0
      %1049 = vmatpush1.bf16.msra.mxu0 0
      %1050 = vmatprep.subr.bf16.mxu0 0
      %1051 = vmatpush1.bf16.msra.mxu0 0
      %1052 = vmatprep.subr.bf16.mxu0 0
      %1053 = vmatpush1.bf16.msra.mxu0 0
      %1054 = vmatprep.subr.bf16.mxu0 0
      %1055 = vmatpush1.bf16.msra.mxu0 0
      %1056 = vmatprep.mubr.bf16.mxu0 0
      %1057 = vmatmul.mubr.bf16.gmra.mrb[0].mxu0 %v972
      %v1058 = vpop.f32.mrb[0].mxu0
      %v1059 = vadd.f32 0.0, %v1058
      %v1060 = vpop.f32.mrb[0].mxu0
      %v1061 = vpop.f32.mrb[0].mxu0
      %v1062 = vpop.f32.mrb[0].mxu0
      %1063 = vdwg.mxu0
      %v1064 = vld [vmem:[#allocation2] sm:$0xff]
      %v1065 = vld [vmem:[#allocation2 + $0x8] sm:$0xff]
      %v1066 = vld [vmem:[#allocation2 + $0x10] sm:$0xff]
      %v1067 = vadd.f32 %v1064, %v1018
      %v1068 = vadd.f32 %v1065, %v1020
      %v1069 = vadd.f32 %v1066, %v1059
      %1070 = vst [vmem:[#allocation2] sm:$0xff] %v1067
      %1071 = vst [vmem:[#allocation2 + $0x8] sm:$0xff] %v1068
      %1072 = vst.msk [vmem:[#allocation2 + $0x10] sm:$0xff] %vm413, %v1069
      %v1073 = vld [vmem:[%s262 + $0x2] sm:$0x3f]
      %s1074 = scalar_lea.vmem %s266, 24
      %v1075 = vld [vmem:[%s1074] sm:$0xf]
      %v1077 = vcombine.high %v1073, %v1073
      %v1079 = vunpack.c.l.s4 1983009808
      %v1080 = vunpack.c.0.s8 %v1079
      %v1081 = vlaneseq
      %v1082 = vshrl.u32 %v1081, 7
      %v1083 = vsub.s32 %v1080, %v1082
      %v1084 = vrot.slane %v1073, %v1083
      %v1086 = vunpack.c.l.s4 1983009808
      %v1087 = vunpack.c.0.s8 %v1086
      %v1088 = vlaneseq
      %v1089 = vshrl.u32 %v1088, 7
      %v1090 = vsub.s32 %v1087, %v1089
      %v1091 = vrot.slane %v1077, %v1090
      %v1092 = vcombine.high %v1084, %v1084
      %1093 = vrot.lane.b32.xlu0 %v1084, 111
      %v1094 = vpop.permute.xlu0 %1093
      %1095 = vrot.lane.b32.xlu0 %v1092, 111
      %v1096 = vpop.permute.xlu0 %1095
      %1097 = vrot.lane.b32.xlu0 %v1091, 111
      %v1098 = vpop.permute.xlu0 %1097
      %vm1099 = vcmask 908288
      %v1100 = vsel %vm1099, %v1094, %v1096
      %v1101 = vsel %vm1099, %v1096, %v1098
      %v1103 = vsel %vm316, %v1075, 0
      %v1106 = vsel %vm320, %v1100, 0
      %v1109 = vsel %vm320, %v1101, 0
      %v1112 = vsel %vm320, %v1098, 0
      %1114 = vmatprep.subr.bf16.mxu0 %v1109
      %1115 = vmatpush1.bf16.msra.mxu0 %v1106
      %1116 = vmatprep.subr.bf16.mxu0 0
      %1117 = vmatpush1.bf16.msra.mxu0 0
      %1118 = vmatprep.subr.bf16.mxu0 0
      %1119 = vmatpush1.bf16.msra.mxu0 0
      %1120 = vmatprep.subr.bf16.mxu0 0
      %1121 = vmatpush1.bf16.msra.mxu0 0
      %1122 = vmatprep.subr.bf16.mxu0 0
      %1123 = vmatpush1.bf16.msra.mxu0 0
      %1124 = vmatprep.subr.bf16.mxu0 0
      %1125 = vmatpush1.bf16.msra.mxu0 0
      %1126 = vmatprep.subr.bf16.mxu0 0
      %1127 = vmatpush1.bf16.msra.mxu0 0
      %1128 = vmatprep.subr.bf16.mxu0 0
      %1129 = vmatpush1.bf16.msra.mxu0 0
      %1130 = vmatprep.subr.bf16.mxu0 0
      %1131 = vmatpush1.bf16.msra.mxu0 0
      %1132 = vmatprep.subr.bf16.mxu0 0
      %1133 = vmatpush1.bf16.msra.mxu0 0
      %1134 = vmatprep.subr.bf16.mxu0 0
      %1135 = vmatpush1.bf16.msra.mxu0 0
      %1136 = vmatprep.subr.bf16.mxu0 0
      %1137 = vmatpush1.bf16.msra.mxu0 0
      %1138 = vmatprep.subr.bf16.mxu0 0
      %1139 = vmatpush1.bf16.msra.mxu0 0
      %1140 = vmatprep.subr.bf16.mxu0 0
      %1141 = vmatpush1.bf16.msra.mxu0 0
      %1142 = vmatprep.subr.bf16.mxu0 0
      %1143 = vmatpush1.bf16.msra.mxu0 0
      %1144 = vmatprep.subr.bf16.mxu0 0
      %1145 = vmatpush1.bf16.msra.mxu0 0
      %1146 = vmatprep.mubr.bf16.mxu0 0
      %1147 = vmatmul.mubr.bf16.gmra.mrb[0].mxu0 %v1103
      %v1148 = vpop.f32.mrb[0].mxu0
      %v1149 = vadd.f32 0.0, %v1148
      %v1150 = vpop.f32.mrb[0].mxu0
      %v1151 = vadd.f32 0.0, %v1150
      %v1152 = vpop.f32.mrb[0].mxu0
      %v1153 = vpop.f32.mrb[0].mxu0
      %1154 = vdwg.mxu0
      %1155 = vmatprep.subr.bf16.mxu0 0
      %1156 = vmatpush1.bf16.msra.mxu0 %v1112
      %1157 = vmatprep.subr.bf16.mxu0 0
      %1158 = vmatpush1.bf16.msra.mxu0 0
      %1159 = vmatprep.subr.bf16.mxu0 0
      %1160 = vmatpush1.bf16.msra.mxu0 0
      %1161 = vmatprep.subr.bf16.mxu0 0
      %1162 = vmatpush1.bf16.msra.mxu0 0
      %1163 = vmatprep.subr.bf16.mxu0 0
      %1164 = vmatpush1.bf16.msra.mxu0 0
      %1165 = vmatprep.subr.bf16.mxu0 0
      %1166 = vmatpush1.bf16.msra.mxu0 0
      %1167 = vmatprep.subr.bf16.mxu0 0
      %1168 = vmatpush1.bf16.msra.mxu0 0
      %1169 = vmatprep.subr.bf16.mxu0 0
      %1170 = vmatpush1.bf16.msra.mxu0 0
      %1171 = vmatprep.subr.bf16.mxu0 0
      %1172 = vmatpush1.bf16.msra.mxu0 0
      %1173 = vmatprep.subr.bf16.mxu0 0
      %1174 = vmatpush1.bf16.msra.mxu0 0
      %1175 = vmatprep.subr.bf16.mxu0 0
      %1176 = vmatpush1.bf16.msra.mxu0 0
      %1177 = vmatprep.subr.bf16.mxu0 0
      %1178 = vmatpush1.bf16.msra.mxu0 0
      %1179 = vmatprep.subr.bf16.mxu0 0
      %1180 = vmatpush1.bf16.msra.mxu0 0
      %1181 = vmatprep.subr.bf16.mxu0 0
      %1182 = vmatpush1.bf16.msra.mxu0 0
      %1183 = vmatprep.subr.bf16.mxu0 0
      %1184 = vmatpush1.bf16.msra.mxu0 0
      %1185 = vmatprep.subr.bf16.mxu0 0
      %1186 = vmatpush1.bf16.msra.mxu0 0
      %1187 = vmatprep.mubr.bf16.mxu0 0
      %1188 = vmatmul.mubr.bf16.gmra.mrb[0].mxu0 %v1103
      %v1189 = vpop.f32.mrb[0].mxu0
      %v1190 = vadd.f32 0.0, %v1189
      %v1191 = vpop.f32.mrb[0].mxu0
      %v1192 = vpop.f32.mrb[0].mxu0
      %v1193 = vpop.f32.mrb[0].mxu0
      %1194 = vdwg.mxu0
      %v1195 = vld [vmem:[#allocation2] sm:$0xff]
      %v1196 = vld [vmem:[#allocation2 + $0x8] sm:$0xff]
      %v1197 = vld [vmem:[#allocation2 + $0x10] sm:$0xff]
      %v1198 = vadd.f32 %v1195, %v1149
      %v1199 = vadd.f32 %v1196, %v1151
      %v1200 = vadd.f32 %v1197, %v1190
      %1201 = vst [vmem:[#allocation2] sm:$0xff] %v1198
      %1202 = vst [vmem:[#allocation2 + $0x8] sm:$0xff] %v1199
      %1203 = vst.msk [vmem:[#allocation2 + $0x10] sm:$0xff] %vm413, %v1200
      %v1204 = vld [vmem:[%s262 + $0x2] sm:$0x3f]
      %s1205 = scalar_lea.vmem %s266, 28
      %v1206 = vld [vmem:[%s1205] sm:$0xf]
      %v1208 = vcombine.high %v1204, %v1204
      %v1210 = vunpack.c.l.s4 1983009808
      %v1211 = vunpack.c.0.s8 %v1210
      %v1212 = vlaneseq
      %v1213 = vshrl.u32 %v1212, 7
      %v1214 = vsub.s32 %v1211, %v1213
      %v1215 = vrot.slane %v1204, %v1214
      %v1217 = vunpack.c.l.s4 1983009808
      %v1218 = vunpack.c.0.s8 %v1217
      %v1219 = vlaneseq
      %v1220 = vshrl.u32 %v1219, 7
      %v1221 = vsub.s32 %v1218, %v1220
      %v1222 = vrot.slane %v1208, %v1221
      %v1223 = vcombine.high %v1215, %v1215
      %1224 = vrot.lane.b32.xlu0 %v1215, 110
      %v1225 = vpop.permute.xlu0 %1224
      %1226 = vrot.lane.b32.xlu0 %v1223, 110
      %v1227 = vpop.permute.xlu0 %1226
      %1228 = vrot.lane.b32.xlu0 %v1222, 110
      %v1229 = vpop.permute.xlu0 %1228
      %vm1230 = vcmask 900096
      %v1231 = vsel %vm1230, %v1225, %v1227
      %v1232 = vsel %vm1230, %v1227, %v1229
      %v1234 = vsel %vm316, %v1206, 0
      %v1237 = vsel %vm320, %v1231, 0
      %v1240 = vsel %vm320, %v1232, 0
      %v1243 = vsel %vm320, %v1229, 0
      %1245 = vmatprep.subr.bf16.mxu0 %v1240
      %1246 = vmatpush1.bf16.msra.mxu0 %v1237
      %1247 = vmatprep.subr.bf16.mxu0 0
      %1248 = vmatpush1.bf16.msra.mxu0 0
      %1249 = vmatprep.subr.bf16.mxu0 0
      %1250 = vmatpush1.bf16.msra.mxu0 0
      %1251 = vmatprep.subr.bf16.mxu0 0
      %1252 = vmatpush1.bf16.msra.mxu0 0
      %1253 = vmatprep.subr.bf16.mxu0 0
      %1254 = vmatpush1.bf16.msra.mxu0 0
      %1255 = vmatprep.subr.bf16.mxu0 0
      %1256 = vmatpush1.bf16.msra.mxu0 0
      %1257 = vmatprep.subr.bf16.mxu0 0
      %1258 = vmatpush1.bf16.msra.mxu0 0
      %1259 = vmatprep.subr.bf16.mxu0 0
      %1260 = vmatpush1.bf16.msra.mxu0 0
      %1261 = vmatprep.subr.bf16.mxu0 0
      %1262 = vmatpush1.bf16.msra.mxu0 0
      %1263 = vmatprep.subr.bf16.mxu0 0
      %1264 = vmatpush1.bf16.msra.mxu0 0
      %1265 = vmatprep.subr.bf16.mxu0 0
      %1266 = vmatpush1.bf16.msra.mxu0 0
      %1267 = vmatprep.subr.bf16.mxu0 0
      %1268 = vmatpush1.bf16.msra.mxu0 0
      %1269 = vmatprep.subr.bf16.mxu0 0
      %1270 = vmatpush1.bf16.msra.mxu0 0
      %1271 = vmatprep.subr.bf16.mxu0 0
      %1272 = vmatpush1.bf16.msra.mxu0 0
      %1273 = vmatprep.subr.bf16.mxu0 0
      %1274 = vmatpush1.bf16.msra.mxu0 0
      %1275 = vmatprep.subr.bf16.mxu0 0
      %1276 = vmatpush1.bf16.msra.mxu0 0
      %1277 = vmatprep.mubr.bf16.mxu0 0
      %1278 = vmatmul.mubr.bf16.gmra.mrb[0].mxu0 %v1234
      %v1279 = vpop.f32.mrb[0].mxu0
      %v1280 = vadd.f32 0.0, %v1279
      %v1281 = vpop.f32.mrb[0].mxu0
      %v1282 = vadd.f32 0.0, %v1281
      %v1283 = vpop.f32.mrb[0].mxu0
      %v1284 = vpop.f32.mrb[0].mxu0
      %1285 = vdwg.mxu0
      %1286 = vmatprep.subr.bf16.mxu0 0
      %1287 = vmatpush1.bf16.msra.mxu0 %v1243
      %1288 = vmatprep.subr.bf16.mxu0 0
      %1289 = vmatpush1.bf16.msra.mxu0 0
      %1290 = vmatprep.subr.bf16.mxu0 0
      %1291 = vmatpush1.bf16.msra.mxu0 0
      %1292 = vmatprep.subr.bf16.mxu0 0
      %1293 = vmatpush1.bf16.msra.mxu0 0
      %1294 = vmatprep.subr.bf16.mxu0 0
      %1295 = vmatpush1.bf16.msra.mxu0 0
      %1296 = vmatprep.subr.bf16.mxu0 0
      %1297 = vmatpush1.bf16.msra.mxu0 0
      %1298 = vmatprep.subr.bf16.mxu0 0
      %1299 = vmatpush1.bf16.msra.mxu0 0
      %1300 = vmatprep.subr.bf16.mxu0 0
      %1301 = vmatpush1.bf16.msra.mxu0 0
      %1302 = vmatprep.subr.bf16.mxu0 0
      %1303 = vmatpush1.bf16.msra.mxu0 0
      %1304 = vmatprep.subr.bf16.mxu0 0
      %1305 = vmatpush1.bf16.msra.mxu0 0
      %1306 = vmatprep.subr.bf16.mxu0 0
      %1307 = vmatpush1.bf16.msra.mxu0 0
      %1308 = vmatprep.subr.bf16.mxu0 0
      %1309 = vmatpush1.bf16.msra.mxu0 0
      %1310 = vmatprep.subr.bf16.mxu0 0
      %1311 = vmatpush1.bf16.msra.mxu0 0
      %1312 = vmatprep.subr.bf16.mxu0 0
      %1313 = vmatpush1.bf16.msra.mxu0 0
      %1314 = vmatprep.subr.bf16.mxu0 0
      %1315 = vmatpush1.bf16.msra.mxu0 0
      %1316 = vmatprep.subr.bf16.mxu0 0
      %1317 = vmatpush1.bf16.msra.mxu0 0
      %1318 = vmatprep.mubr.bf16.mxu0 0
      %1319 = vmatmul.mubr.bf16.gmra.mrb[0].mxu0 %v1234
      %v1320 = vpop.f32.mrb[0].mxu0
      %v1321 = vadd.f32 0.0, %v1320
      %v1322 = vpop.f32.mrb[0].mxu0
      %v1323 = vpop.f32.mrb[0].mxu0
      %v1324 = vpop.f32.mrb[0].mxu0
      %1325 = vdwg.mxu0
      %v1326 = vld [vmem:[#allocation2] sm:$0xff]
      %v1327 = vld [vmem:[#allocation2 + $0x8] sm:$0xff]
      %v1328 = vld [vmem:[#allocation2 + $0x10] sm:$0xff]
      %v1329 = vadd.f32 %v1326, %v1280
      %v1330 = vadd.f32 %v1327, %v1282
      %v1331 = vadd.f32 %v1328, %v1321
      %1332 = vst [vmem:[#allocation2] sm:$0xff] %v1329
      %1333 = vst [vmem:[#allocation2 + $0x8] sm:$0xff] %v1330
      %1334 = vst.msk [vmem:[#allocation2 + $0x10] sm:$0xff] %vm413, %v1331
      %v1335 = vld [vmem:[%s262 + $0x2] sm:$0x3f]
      %s1336 = scalar_lea.vmem %s266, 32
      %v1337 = vld [vmem:[%s1336] sm:$0xf]
      %v1339 = vcombine.high %v1335, %v1335
      %v1341 = vunpack.c.l.s4 1983009808
      %v1342 = vunpack.c.0.s8 %v1341
      %v1343 = vlaneseq
      %v1344 = vshrl.u32 %v1343, 7
      %v1345 = vsub.s32 %v1342, %v1344
      %v1346 = vrot.slane %v1335, %v1345
      %v1348 = vunpack.c.l.s4 1983009808
      %v1349 = vunpack.c.0.s8 %v1348
      %v1350 = vlaneseq
      %v1351 = vshrl.u32 %v1350, 7
      %v1352 = vsub.s32 %v1349, %v1351
      %v1353 = vrot.slane %v1339, %v1352
      %v1354 = vcombine.high %v1346, %v1346
      %1355 = vrot.lane.b32.xlu0 %v1346, 109
      %v1356 = vpop.permute.xlu0 %1355
      %1357 = vrot.lane.b32.xlu0 %v1354, 109
      %v1358 = vpop.permute.xlu0 %1357
      %1359 = vrot.lane.b32.xlu0 %v1353, 109
      %v1360 = vpop.permute.xlu0 %1359
      %vm1361 = vcmask 891904
      %v1362 = vsel %vm1361, %v1356, %v1358
      %v1363 = vsel %vm1361, %v1358, %v1360
      %v1365 = vsel %vm316, %v1337, 0
      %v1368 = vsel %vm320, %v1362, 0
      %v1371 = vsel %vm320, %v1363, 0
      %v1374 = vsel %vm320, %v1360, 0
      %1376 = vmatprep.subr.bf16.mxu0 %v1371
      %1377 = vmatpush1.bf16.msra.mxu0 %v1368
      %1378 = vmatprep.subr.bf16.mxu0 0
      %1379 = vmatpush1.bf16.msra.mxu0 0
      %1380 = vmatprep.subr.bf16.mxu0 0
      %1381 = vmatpush1.bf16.msra.mxu0 0
      %1382 = vmatprep.subr.bf16.mxu0 0
      %1383 = vmatpush1.bf16.msra.mxu0 0
      %1384 = vmatprep.subr.bf16.mxu0 0
      %1385 = vmatpush1.bf16.msra.mxu0 0
      %1386 = vmatprep.subr.bf16.mxu0 0
      %1387 = vmatpush1.bf16.msra.mxu0 0
      %1388 = vmatprep.subr.bf16.mxu0 0
      %1389 = vmatpush1.bf16.msra.mxu0 0
      %1390 = vmatprep.subr.bf16.mxu0 0
      %1391 = vmatpush1.bf16.msra.mxu0 0
      %1392 = vmatprep.subr.bf16.mxu0 0
      %1393 = vmatpush1.bf16.msra.mxu0 0
      %1394 = vmatprep.subr.bf16.mxu0 0
      %1395 = vmatpush1.bf16.msra.mxu0 0
      %1396 = vmatprep.subr.bf16.mxu0 0
      %1397 = vmatpush1.bf16.msra.mxu0 0
      %1398 = vmatprep.subr.bf16.mxu0 0
      %1399 = vmatpush1.bf16.msra.mxu0 0
      %1400 = vmatprep.subr.bf16.mxu0 0
      %1401 = vmatpush1.bf16.msra.mxu0 0
      %1402 = vmatprep.subr.bf16.mxu0 0
      %1403 = vmatpush1.bf16.msra.mxu0 0
      %1404 = vmatprep.subr.bf16.mxu0 0
      %1405 = vmatpush1.bf16.msra.mxu0 0
      %1406 = vmatprep.subr.bf16.mxu0 0
      %1407 = vmatpush1.bf16.msra.mxu0 0
      %1408 = vmatprep.mubr.bf16.mxu0 0
      %1409 = vmatmul.mubr.bf16.gmra.mrb[0].mxu0 %v1365
      %v1410 = vpop.f32.mrb[0].mxu0
      %v1411 = vadd.f32 0.0, %v1410
      %v1412 = vpop.f32.mrb[0].mxu0
      %v1413 = vadd.f32 0.0, %v1412
      %v1414 = vpop.f32.mrb[0].mxu0
      %v1415 = vpop.f32.mrb[0].mxu0
      %1416 = vdwg.mxu0
      %1417 = vmatprep.subr.bf16.mxu0 0
      %1418 = vmatpush1.bf16.msra.mxu0 %v1374
      %1419 = vmatprep.subr.bf16.mxu0 0
      %1420 = vmatpush1.bf16.msra.mxu0 0
      %1421 = vmatprep.subr.bf16.mxu0 0
      %1422 = vmatpush1.bf16.msra.mxu0 0
      %1423 = vmatprep.subr.bf16.mxu0 0
      %1424 = vmatpush1.bf16.msra.mxu0 0
      %1425 = vmatprep.subr.bf16.mxu0 0
      %1426 = vmatpush1.bf16.msra.mxu0 0
      %1427 = vmatprep.subr.bf16.mxu0 0
      %1428 = vmatpush1.bf16.msra.mxu0 0
      %1429 = vmatprep.subr.bf16.mxu0 0
      %1430 = vmatpush1.bf16.msra.mxu0 0
      %1431 = vmatprep.subr.bf16.mxu0 0
      %1432 = vmatpush1.bf16.msra.mxu0 0
      %1433 = vmatprep.subr.bf16.mxu0 0
      %1434 = vmatpush1.bf16.msra.mxu0 0
      %1435 = vmatprep.subr.bf16.mxu0 0
      %1436 = vmatpush1.bf16.msra.mxu0 0
      %1437 = vmatprep.subr.bf16.mxu0 0
      %1438 = vmatpush1.bf16.msra.mxu0 0
      %1439 = vmatprep.subr.bf16.mxu0 0
      %1440 = vmatpush1.bf16.msra.mxu0 0
      %1441 = vmatprep.subr.bf16.mxu0 0
      %1442 = vmatpush1.bf16.msra.mxu0 0
      %1443 = vmatprep.subr.bf16.mxu0 0
      %1444 = vmatpush1.bf16.msra.mxu0 0
      %1445 = vmatprep.subr.bf16.mxu0 0
      %1446 = vmatpush1.bf16.msra.mxu0 0
      %1447 = vmatprep.subr.bf16.mxu0 0
      %1448 = vmatpush1.bf16.msra.mxu0 0
      %1449 = vmatprep.mubr.bf16.mxu0 0
      %1450 = vmatmul.mubr.bf16.gmra.mrb[0].mxu0 %v1365
      %v1451 = vpop.f32.mrb[0].mxu0
      %v1452 = vadd.f32 0.0, %v1451
      %v1453 = vpop.f32.mrb[0].mxu0
      %v1454 = vpop.f32.mrb[0].mxu0
      %v1455 = vpop.f32.mrb[0].mxu0
      %1456 = vdwg.mxu0
      %v1457 = vld [vmem:[#allocation2] sm:$0xff]
      %v1458 = vld [vmem:[#allocation2 + $0x8] sm:$0xff]
      %v1459 = vld [vmem:[#allocation2 + $0x10] sm:$0xff]
      %v1460 = vadd.f32 %v1457, %v1411
      %v1461 = vadd.f32 %v1458, %v1413
      %v1462 = vadd.f32 %v1459, %v1452
      %1463 = vst [vmem:[#allocation2] sm:$0xff] %v1460
      %1464 = vst [vmem:[#allocation2 + $0x8] sm:$0xff] %v1461
      %1465 = vst.msk [vmem:[#allocation2 + $0x10] sm:$0xff] %vm413, %v1462
      %v1466 = vlaneseq
      %v1467 = vand.u32 %v1466, 127
      %v1468 = vadd.s32 %v1467, 128
      %v1469 = vadd.s32 %v1467, 256
      %vm1470 = vcmp.lt.s32.totalorder %v1467, 0
      %v1471 = vsub.s32 0, %v1467
      %v1472 = vsel %vm1470, %v1471, %v1467
      %v1473 = vmul.u32.u64.compose %v1472, 3817748708
      %v1474 = vextract.low.u32 %v1473
      %v1475 = vextract.high.u32 %v1473
      %v1476 = vshrl.u32 %v1475, 4
      %v1477 = vmul.u32 %v1476, 18
      %v1478 = vsub.s32 %v1472, %v1477
      %v1479 = vsub.s32 0, %v1478
      %v1480 = vsel %vm1470, %v1479, %v1478
      %vm1481 = vcmp.lt.s32.totalorder %v1468, 0
      %v1482 = vsub.s32 0, %v1468
      %v1483 = vsel %vm1481, %v1482, %v1468
      %v1484 = vmul.u32.u64.compose %v1483, 3817748708
      %v1485 = vextract.low.u32 %v1484
      %v1486 = vextract.high.u32 %v1484
      %v1487 = vshrl.u32 %v1486, 4
      %v1488 = vmul.u32 %v1487, 18
      %v1489 = vsub.s32 %v1483, %v1488
      %v1490 = vsub.s32 0, %v1489
      %v1491 = vsel %vm1481, %v1490, %v1489
      %vm1492 = vcmp.lt.s32.totalorder %v1469, 0
      %v1493 = vsub.s32 0, %v1469
      %v1494 = vsel %vm1492, %v1493, %v1469
      %v1495 = vmul.u32.u64.compose %v1494, 3817748708
      %v1496 = vextract.low.u32 %v1495
      %v1497 = vextract.high.u32 %v1495
      %v1498 = vshrl.u32 %v1497, 4
      %v1499 = vmul.u32 %v1498, 18
      %v1500 = vsub.s32 %v1494, %v1499
      %v1501 = vsub.s32 0, %v1500
      %v1502 = vsel %vm1492, %v1501, %v1500
      %vm1503 = vcmp.ne.s32.totalorder %v1480, 0
      %vm1504 = vcmp.ne.s32.totalorder %v1491, 0
      %vm1505 = vcmp.ne.s32.totalorder %v1502, 0
      %vm1506 = vcmp.lt.s32.totalorder %v1480, 0
      %vm1507 = vcmp.lt.s32.totalorder %v1491, 0
      %vm1508 = vcmp.lt.s32.totalorder %v1502, 0
      %vm1509 = vmand %vm1506, %vm1503
      %vm1510 = vmand %vm1507, %vm1504
      %vm1511 = vmand %vm1508, %vm1505
      %v1512 = vadd.s32 %v1480, 18
      %v1513 = vadd.s32 %v1491, 18
      %v1514 = vadd.s32 %v1502, 18
      %v1515 = vsel %vm1509, %v1512, %v1480
      %v1516 = vsel %vm1510, %v1513, %v1491
      %v1517 = vsel %vm1511, %v1514, %v1502
      %v1518 = vld [vmem:[#allocation2] sm:$0xff]
      %v1519 = vld [vmem:[#allocation2 + $0x8] sm:$0xff]
      %v1520 = vld [vmem:[#allocation2 + $0x10] sm:$0xff]
      %vm1521 = vcmp.lt.s32.totalorder %v1515, 16
      %vm1522 = vcmp.lt.s32.totalorder %v1516, 16
      %vm1523 = vcmp.lt.s32.totalorder %v1517, 16
      %v1524 = vsel %vm1521, 1, 0
      %v1525 = vsel %vm1522, 1, 0
      %v1526 = vsel %vm1523, 1, 0
      %v1527 = vcvt.s32.f32 %v1524
      %v1528 = vcvt.s32.f32 %v1525
      %v1529 = vcvt.s32.f32 %v1526
      %v1530 = vmul.f32 %v1518, %v1527
      %v1531 = vmul.f32 %v1519, %v1528
      %v1532 = vmul.f32 %v1520, %v1529
      %v1533 = vadd.f32 %v1530, %v1531
      %v1534 = vsel %vm413, %v1532, 0.0
      %v1535 = vadd.f32 %v1533, %v1534
      %1536 = vadd.xlane.f32.xlu0 %v1535
      %v1537 = vpop.xlane.xlu0 %1536
      %vm1538 = vcmask 7168
      %1539 = vst.msk [vmem:[%s282] sm:$0xff] %vm1538, %v1537
      %v1540 = vmul.f32 %v1530, %v1530
      %v1541 = vmul.f32 %v1531, %v1531
      %v1542 = vmul.f32 %v1532, %v1532
      %v1543 = vadd.f32 %v1540, %v1541
      %v1544 = vsel %vm413, %v1542, 0.0
      %v1545 = vadd.f32 %v1543, %v1544
      %1546 = vadd.xlane.f32.xlu0 %v1545
      %v1547 = vpop.xlane.xlu0 %1546
      %vm1548 = vcmask 15368
      %1549 = vst.msk [vmem:[%s282] sm:$0xff] %vm1548, %v1547
      %1550 = vst [vmem:[%s275] sm:$0xf] 0
      %v1551 = vpack.c.bf16 %v1530, %v1530
      %v1552 = vpack.c.bf16 %v1531, %v1531
      %v1553 = vpack.c.bf16 %v1532, %v1532
      %v1557 = vunpack.c.l.b16 %v1551
      %v1558 = vunpack.c.l.b16 %v1552
      %v1559 = vunpack.c.l.b16 %v1553
      %v1560 = vpack.c.b16 %v1558, %v1557
      %v1561 = vpack.c.b16 %v1559, %v1559
      %1564 = vst [vmem:[%s275 + $0x4] sm:$0xff] %v1560
      %vm1565 = vcmask 257024
      %1566 = vst.msk [vmem:[%s275 + $0xc] sm:$0xf] %vm1565, %v1561
      %vm1567 = vcmask 412928
      %1568 = vst.msk [vmem:[%s275 + $0xc] sm:$0xf] %vm1567, 0
      %p1569 = scmp.lt.s32.totalorder %s21, 1
      %s1570 = scalar_select %p1569, %s21, 1
      %p1571 = scmp.lt.s32.totalorder %s22, 0
      %s1572 = scalar_select %p1571, %s22, 0
      %s1573 = smul.addr %s1572, 4
      %s1574 = smul.addr %s1570, 4
      %s1575 = sadd.s32 %s1573, %s1574
      %s1576 = smul.addr %s1575, 4
      %s1577 = scalar_lea.vmem %s4, %s1576
      %p1578 = scmp.lt.s32.totalorder %s21, 1
      %s1579 = scalar_select %p1578, %s21, 1
      %p1580 = scmp.lt.s32.totalorder %s22, 0
      %s1581 = scalar_select %p1580, %s22, 0
      %s1582 = sadd.s32 %s1581, %s1579
      %s1583 = smul.addr %s1582, 8
      %s1584 = scalar_lea.vmem %s5, %s1583
      // Predicated region
      $region37: #{convolution_block.3} parent=35 // pred_check
        %p1585 = pneg %p143
      $region38: #{convolution_block.3} parent=35 // pred_check_branch
        %1587 = sbr.rel (%p1585) target = $region40
      $region39: #{convolution_block.3} parent=35 // pred_region
        _
      $region40: #{convolution_block.3} parent=35 // pred_fallthru
        _
      // Predicated region
      $region41: #{convolution_block.3} parent=35 // pred_check
        %p1588 = pneg %p171
      $region42: #{convolution_block.3} parent=35 // pred_check_branch
        %1590 = sbr.rel (%p1588) target = $region44
      $region43: #{convolution_block.3} parent=35 // pred_region
        _
      $region44: #{convolution_block.3} parent=35 // pred_fallthru
        _
    $region36: #{convolution_block.3} parent=5 // pred_fallthru
      _
    %p1591 = scmp.le.s32.totalorder 2, %s12
    // Predicated region
    $region45: #{convolution_block.3} parent=5 // pred_check
      %p1592 = pneg %p1591
    $region46: #{convolution_block.3} parent=5 // pred_check_branch
      %1594 = sbr.rel (%p1592) target = $region48
    $region47: #{convolution_block.3} parent=5 // pred_region
      %s1595 = ssub.s32 %s12, 2
      // Predicated region
      $region49: #{convolution_block.3} parent=47 // pred_check
        %p1596 = pneg %p149
      $region50: #{convolution_block.3} parent=47 // pred_check_branch
        %1598 = sbr.rel (%p1596) target = $region52
      $region51: #{convolution_block.3} parent=47 // pred_region
        %p1599 = scmp.lt.s32.totalorder %s23, 1
        %s1600 = scalar_select %p1599, %s23, 1
        %p1601 = scmp.lt.s32.totalorder %s24, 0
        %s1602 = scalar_select %p1601, %s24, 0
        %s1603 = smul.addr %s1602, 4
        %s1604 = smul.addr %s1600, 4
        %s1605 = sadd.s32 %s1603, %s1604
        %s1606 = smul.addr %s1605, 4
        %s1607 = scalar_lea.vmem %s4, %s1606
      $region52: #{convolution_block.3} parent=47 // pred_fallthru
        _
      // Predicated region
      $region53: #{convolution_block.3} parent=47 // pred_check
        %p1608 = pneg %p177
      $region54: #{convolution_block.3} parent=47 // pred_check_branch
        %1610 = sbr.rel (%p1608) target = $region56
      $region55: #{convolution_block.3} parent=47 // pred_region
        %p1611 = scmp.lt.s32.totalorder %s23, 1
        %s1612 = scalar_select %p1611, %s23, 1
        %p1613 = scmp.lt.s32.totalorder %s24, 0
        %s1614 = scalar_select %p1613, %s24, 0
        %s1615 = sadd.s32 %s1614, %s1612
        %s1616 = smul.addr %s1615, 8
        %s1617 = scalar_lea.vmem %s5, %s1616
      $region56: #{convolution_block.3} parent=47 // pred_fallthru
        _
    $region48: #{convolution_block.3} parent=5 // pred_fallthru
      _
  $region6: #{convolution_block.3} parent=0 // loop_footer
    %s16 = sadd.s32 1, %s12
  $region7: #{convolution_block.3} parent=0 // loop_footer_branch
    %11 = sbr.rel target = $region3
  $region8: #{convolution_block.3} parent=0 // loop_exit
    _

// kernel: convolution_block.4
$region0: #{convolution_block.4}
  #allocation0 [shape = 'u32[]', space=smem, size = 0x4, offset = 0x4, fixed_abs, tag = 'smem constant byte address 0x4 - core index']
  #allocation1 [shape = 'u32[144,128]{1,0:T(1,128)}', space=vmem, size = 0x12000, scoped, tag = 'internal scratch']
  #allocation2 [shape = 'f32[8,288]{1,0:T(8,128)}', space=vmem, size = 0x3000, scoped, tag = 'scratch operand']
  #allocation3 [shape = 'bf16[8,435]{1,0:T(8,128)(2,1)}', space=vmem, size = 0x2000, scoped, tag = 'scratch operand']
  %s0 = inlined_call_operand.vmem [shape: bf16[2,8,435], index: 0, kind: input, shape index: {}]
  %s1 = inlined_call_operand.vmem [shape: f32[8,1], index: 1, kind: input, shape index: {}]
  %s2 = inlined_call_operand.vmem [shape: f32[8,1], index: 2, kind: input, shape index: {}]
  %s3 = inlined_call_operand.vmem [shape: bf16[9,8,8], index: 3, kind: input, shape index: {}]
  %s4 = inlined_call_operand.vmem [shape: bf16[2,8,435], index: 4, kind: output, shape index: {0}]
  %s5 = inlined_call_operand.vmem [shape: f32[2,8,2], index: 5, kind: output, shape index: {1}]
  %6 = xla_tuple %s4, %s5
  %s7 = sld [smem:[#allocation0]]
  $region57: #{convolution_block.4} parent=0
    _
  %s9 = ssub.s32 1, %s7
  %s10 = scalar_select 0, %s9, %s7
  loop: start=0, step=1, limit=4
  $region2: #{convolution_block.4} parent=0 // loop_pre_header
    _
  $region3: #{convolution_block.4} parent=0 // loop_header
    %s12 = sphi 0, %s16
    %p13 = scmp.ge.s32.totalorder %s12, 4
    %s19 = sphi 0, %s31
    %s20 = sphi 0, %s27
    %s21 = sphi 0, %s19
    %s22 = sphi 0, %s20
    %s23 = sphi 0, %s21
    %s24 = sphi 0, %s22
    %s34 = sphi 0, %s36
    %s37 = sphi 0, %s34
    %s38 = sphi 0, %s37
    %s54 = sphi 0, %s38
    %s58 = sphi 0, %s58
    %s60 = sphi 0, %s58
    %s61 = sphi 0, %s60
    %s75 = sphi 0, %s61
    %s79 = sphi 0, %s79
    %s81 = sphi 0, %s79
    %s82 = sphi 0, %s81
    %s96 = sphi 0, %s82
    %s102 = sphi 0, %s104
    %s105 = sphi 0, %s102
    %s106 = sphi 0, %s105
    %s122 = sphi 0, %s106
    %s130 = sphi 0, %s132
    %s133 = sphi 0, %s130
    %s134 = sphi 0, %s133
    %s150 = sphi 0, %s134
    %s158 = sphi 0, %s160
    %s161 = sphi 0, %s158
    %s162 = sphi 0, %s161
    %s178 = sphi 0, %s162
  $region4: #{convolution_block.4} parent=0 // loop_header_branch
    %15 = sbr.rel (%p13) target = $region8
  $region5: #{convolution_block.4} parent=0 // loop_body
    %s17 = ssub.s32 %s12, 1
    %s18 = ssub.s32 %s12, 2
    %s25 = sadd.s32 1, %s20
    %p26 = scmp.ge.s32.totalorder %s25, 1
    %s27 = scalar_select %p26, 0, %s25
    %s28 = sadd.s32 1, %s19
    %s29 = scalar_select %p26, %s28, %s19
    %p30 = scmp.ge.s32.totalorder %s29, 2
    %s31 = scalar_select %p30, 0, %s29
    %s32 = ssub.s32 %s19, %s31
    %p33 = scmp.eq.s32.totalorder %s32, 0
    %s35 = sadd.s32 %s34, 1
    %s36 = scalar_select %p33, %s34, %s35
    %p39 = pneg %p33
    %p40 = scmp.eq.s32.totalorder %s12, 1
    %p41 = por %p39, %p40
    %p42 = scmp.ne.s32.totalorder %s34, %s37
    %p43 = scmp.eq.s32.totalorder %s12, 0
    %p44 = por %p42, %p43
    %p45 = scmp.ne.s32.totalorder %s34, %s37
    %p46 = scmp.eq.s32.totalorder %s17, 1
    %p47 = por %p45, %p46
    %p48 = scmp.ne.s32.totalorder %s37, %s38
    %p49 = scmp.eq.s32.totalorder %s17, 0
    %p50 = por %p48, %p49
    %p51 = scmp.ne.s32.totalorder %s37, %s38
    %p52 = scmp.eq.s32.totalorder %s18, 1
    %p53 = por %p51, %p52
    %p55 = scmp.ne.s32.totalorder %s38, %s54
    %p56 = scmp.eq.s32.totalorder %s18, 0
    %p57 = por %p55, %p56
    %s59 = sadd.s32 %s58, 1
    %p62 = scmp.eq.s32.totalorder %s12, 1
    %p63 = scmp.ne.s32.totalorder %s58, %s60
    %p64 = scmp.eq.s32.totalorder %s12, 0
    %p65 = por %p63, %p64
    %p66 = scmp.ne.s32.totalorder %s58, %s60
    %p67 = scmp.eq.s32.totalorder %s17, 1
    %p68 = por %p66, %p67
    %p69 = scmp.ne.s32.totalorder %s60, %s61
    %p70 = scmp.eq.s32.totalorder %s17, 0
    %p71 = por %p69, %p70
    %p72 = scmp.ne.s32.totalorder %s60, %s61
    %p73 = scmp.eq.s32.totalorder %s18, 1
    %p74 = por %p72, %p73
    %p76 = scmp.ne.s32.totalorder %s61, %s75
    %p77 = scmp.eq.s32.totalorder %s18, 0
    %p78 = por %p76, %p77
    %s80 = sadd.s32 %s79, 1
    %p83 = scmp.eq.s32.totalorder %s12, 1
    %p84 = scmp.ne.s32.totalorder %s79, %s81
    %p85 = scmp.eq.s32.totalorder %s12, 0
    %p86 = por %p84, %p85
    %p87 = scmp.ne.s32.totalorder %s79, %s81
    %p88 = scmp.eq.s32.totalorder %s17, 1
    %p89 = por %p87, %p88
    %p90 = scmp.ne.s32.totalorder %s81, %s82
    %p91 = scmp.eq.s32.totalorder %s17, 0
    %p92 = por %p90, %p91
    %p93 = scmp.ne.s32.totalorder %s81, %s82
    %p94 = scmp.eq.s32.totalorder %s18, 1
    %p95 = por %p93, %p94
    %p97 = scmp.ne.s32.totalorder %s82, %s96
    %p98 = scmp.eq.s32.totalorder %s18, 0
    %p99 = por %p97, %p98
    %s100 = ssub.s32 %s20, %s27
    %p101 = scmp.eq.s32.totalorder %s100, 0
    %s103 = sadd.s32 %s102, 1
    %s104 = scalar_select %p101, %s102, %s103
    %p107 = pneg %p101
    %p108 = scmp.eq.s32.totalorder %s12, 1
    %p109 = por %p107, %p108
    %p110 = scmp.ne.s32.totalorder %s102, %s105
    %p111 = scmp.eq.s32.totalorder %s12, 0
    %p112 = por %p110, %p111
    %p113 = scmp.ne.s32.totalorder %s102, %s105
    %p114 = scmp.eq.s32.totalorder %s17, 1
    %p115 = por %p113, %p114
    %p116 = scmp.ne.s32.totalorder %s105, %s106
    %p117 = scmp.eq.s32.totalorder %s17, 0
    %p118 = por %p116, %p117
    %p119 = scmp.ne.s32.totalorder %s105, %s106
    %p120 = scmp.eq.s32.totalorder %s18, 1
    %p121 = por %p119, %p120
    %p123 = scmp.ne.s32.totalorder %s106, %s122
    %p124 = scmp.eq.s32.totalorder %s18, 0
    %p125 = por %p123, %p124
    %s126 = ssub.s32 %s19, %s31
    %s127 = ssub.s32 %s20, %s27
    %s128 = sor.u32 %s126, %s127
    %p129 = scmp.eq.s32.totalorder %s128, 0
    %s131 = sadd.s32 %s130, 1
    %s132 = scalar_select %p129, %s130, %s131
    %p135 = pneg %p129
    %p136 = scmp.eq.s32.totalorder %s12, 1
    %p137 = por %p135, %p136
    %p138 = scmp.ne.s32.totalorder %s130, %s133
    %p139 = scmp.eq.s32.totalorder %s12, 0
    %p140 = por %p138, %p139
    %p141 = scmp.ne.s32.totalorder %s130, %s133
    %p142 = scmp.eq.s32.totalorder %s17, 1
    %p143 = por %p141, %p142
    %p144 = scmp.ne.s32.totalorder %s133, %s134
    %p145 = scmp.eq.s32.totalorder %s17, 0
    %p146 = por %p144, %p145
    %p147 = scmp.ne.s32.totalorder %s133, %s134
    %p148 = scmp.eq.s32.totalorder %s18, 1
    %p149 = por %p147, %p148
    %p151 = scmp.ne.s32.totalorder %s134, %s150
    %p152 = scmp.eq.s32.totalorder %s18, 0
    %p153 = por %p151, %p152
    %s154 = ssub.s32 %s19, %s31
    %s155 = ssub.s32 %s20, %s27
    %s156 = sor.u32 %s154, %s155
    %p157 = scmp.eq.s32.totalorder %s156, 0
    %s159 = sadd.s32 %s158, 1
    %s160 = scalar_select %p157, %s158, %s159
    %p163 = pneg %p157
    %p164 = scmp.eq.s32.totalorder %s12, 1
    %p165 = por %p163, %p164
    %p166 = scmp.ne.s32.totalorder %s158, %s161
    %p167 = scmp.eq.s32.totalorder %s12, 0
    %p168 = por %p166, %p167
    %p169 = scmp.ne.s32.totalorder %s158, %s161
    %p170 = scmp.eq.s32.totalorder %s17, 1
    %p171 = por %p169, %p170
    %p172 = scmp.ne.s32.totalorder %s161, %s162
    %p173 = scmp.eq.s32.totalorder %s17, 0
    %p174 = por %p172, %p173
    %p175 = scmp.ne.s32.totalorder %s161, %s162
    %p176 = scmp.eq.s32.totalorder %s18, 1
    %p177 = por %p175, %p176
    %p179 = scmp.ne.s32.totalorder %s162, %s178
    %p180 = scmp.eq.s32.totalorder %s18, 0
    %p181 = por %p179, %p180
    %p182 = scmp.le.s32.totalorder 1, %s12
    %p183 = scmp.lt.s32.totalorder %s12, 3
    %p184 = pnand %p182, %p183
    %p185 = pneg %p184
    // Predicated region
    $region9: #{convolution_block.4} parent=5 // pred_check
      _
    $region10: #{convolution_block.4} parent=5 // pred_check_branch
      %187 = sbr.rel (%p184) target = $region12
    $region11: #{convolution_block.4} parent=5 // pred_region
      %s188 = ssub.s32 %s12, 1
      // Predicated region
      $region13: #{convolution_block.4} parent=11 // pred_check
        %p189 = pneg %p71
      $region14: #{convolution_block.4} parent=11 // pred_check_branch
        %191 = sbr.rel (%p189) target = $region16
      $region15: #{convolution_block.4} parent=11 // pred_region
        _
      $region16: #{convolution_block.4} parent=11 // pred_fallthru
        _
      // Predicated region
      $region17: #{convolution_block.4} parent=11 // pred_check
        %p192 = pneg %p92
      $region18: #{convolution_block.4} parent=11 // pred_check_branch
        %194 = sbr.rel (%p192) target = $region20
      $region19: #{convolution_block.4} parent=11 // pred_region
        _
      $region20: #{convolution_block.4} parent=11 // pred_fallthru
        _
      // Predicated region
      $region21: #{convolution_block.4} parent=11 // pred_check
        %p195 = pneg %p118
      $region22: #{convolution_block.4} parent=11 // pred_check_branch
        %197 = sbr.rel (%p195) target = $region24
      $region23: #{convolution_block.4} parent=11 // pred_region
        %p198 = scmp.lt.s32.totalorder %s22, 0
        %s199 = scalar_select %p198, %s22, 0
        %s200 = smul.addr %s199, 4
        %s201 = scalar_lea.vmem %s3, %s200
      $region24: #{convolution_block.4} parent=11 // pred_fallthru
        _
    $region12: #{convolution_block.4} parent=5 // pred_fallthru
      _
    %p202 = scmp.lt.s32.totalorder %s12, 2
    // Predicated region
    $region25: #{convolution_block.4} parent=5 // pred_check
      %p203 = pneg %p202
    $region26: #{convolution_block.4} parent=5 // pred_check_branch
      %205 = sbr.rel (%p203) target = $region28
    $region27: #{convolution_block.4} parent=5 // pred_region
      // Predicated region
      $region29: #{convolution_block.4} parent=27 // pred_check
        %p206 = pneg %p44
      $region30: #{convolution_block.4} parent=27 // pred_check_branch
        %208 = sbr.rel (%p206) target = $region32
      $region31: #{convolution_block.4} parent=27 // pred_region
        %p209 = scmp.lt.s32.totalorder %s19, 1
        %s210 = scalar_select %p209, %s19, 1
        %s211 = smul.addr %s210, 4
        %s212 = smul.addr %s211, 4
        %s213 = scalar_lea.vmem %s0, %s212
      $region32: #{convolution_block.4} parent=27 // pred_fallthru
        _
    $region28: #{convolution_block.4} parent=5 // pred_fallthru
      _
    %p214 = scmp.le.s32.totalorder 1, %s12
    %p215 = scmp.lt.s32.totalorder %s12, 3
    %p216 = pnand %p214, %p215
    %p217 = pneg %p216
    // Predicated region
    $region33: #{convolution_block.4} parent=5 // pred_check
      _
    $region34: #{convolution_block.4} parent=5 // pred_check_branch
      %219 = sbr.rel (%p216) target = $region36
    $region35: #{convolution_block.4} parent=5 // pred_region
      %s220 = ssub.s32 %s12, 1
      %p221 = scmp.lt.s32.totalorder %s21, 1
      %s222 = scalar_select %p221, %s21, 1
      %s223 = smul.addr %s222, 4
      %s224 = smul.addr %s223, 4
      %s225 = scalar_lea.vmem %s0, %s224
      %p226 = pneg %p50
      %p227 = pneg %p47
      %p228 = pneg %p71
      %p229 = pneg %p68
      %p230 = pneg %p92
      %p231 = pneg %p89
      %p232 = scmp.lt.s32.totalorder %s22, 0
      %s233 = scalar_select %p232, %s22, 0
      %s234 = smul.addr %s233, 4
      %s235 = scalar_lea.vmem %s3, %s234
      %p236 = pneg %p118
      %p237 = pneg %p115
      %p238 = pneg %p146
      %p239 = pneg %p143
      %p240 = scmp.lt.s32.totalorder %s21, 1
      %s241 = scalar_select %p240, %s21, 1
      %p242 = scmp.lt.s32.totalorder %s22, 0
      %s243 = scalar_select %p242, %s22, 0
      %s244 = smul.addr %s243, 4
      %s245 = smul.addr %s241, 4
      %s246 = sadd.s32 %s244, %s245
      %s247 = smul.addr %s246, 4
      %s248 = scalar_lea.vmem %s4, %s247
      %p249 = pneg %p174
      %p250 = pneg %p171
      %p251 = scmp.lt.s32.totalorder %s21, 1
      %s252 = scalar_select %p251, %s21, 1
      %p253 = scmp.lt.s32.totalorder %s22, 0
      %s254 = scalar_select %p253, %s22, 0
      %s255 = sadd.s32 %s254, %s252
      %s256 = smul.addr %s255, 8
      %s257 = scalar_lea.vmem %s5, %s256
      %p258 = scmp.lt.s32.totalorder %s21, 1
      %s259 = scalar_select %p258, %s21, 1
      %s260 = smul.addr %s259, 4
      %s261 = smul.addr %s260, 4
      %s262 = scalar_lea.vmem %s0, %s261
      %p263 = scmp.lt.s32.totalorder %s22, 0
      %s264 = scalar_select %p263, %s22, 0
      %s265 = smul.addr %s264, 4
      %s266 = scalar_lea.vmem %s3, %s265
      %p267 = scmp.lt.s32.totalorder %s21, 1
      %s268 = scalar_select %p267, %s21, 1
      %p269 = scmp.lt.s32.totalorder %s22, 0
      %s270 = scalar_select %p269, %s22, 0
      %s271 = smul.addr %s270, 4
      %s272 = smul.addr %s268, 4
      %s273 = sadd.s32 %s271, %s272
      %s274 = smul.addr %s273, 4
      %s275 = scalar_lea.vmem %s4, %s274
      %p276 = scmp.lt.s32.totalorder %s21, 1
      %s277 = scalar_select %p276, %s21, 1
      %p278 = scmp.lt.s32.totalorder %s22, 0
      %s279 = scalar_select %p278, %s22, 0
      %s280 = sadd.s32 %s279, %s277
      %s281 = smul.addr %s280, 8
      %s282 = scalar_lea.vmem %s5, %s281
      %v284 = vld [vmem:[%s262] sm:$0xff]
      %v285 = vld [vmem:[%s262 + $0x8] sm:$0xff]
      %v286 = vunpack.c.l.bf16 %v284
      %v287 = vunpack.c.h.bf16 %v284
      %v288 = vunpack.c.l.bf16 %v285
      %v289 = vunpack.c.h.bf16 %v285
      %v290 = vld [vmem:[%s1] sm:$0xff]
      %292 = vset.pattern.permute.xlu0 0
      %293 = vperm.xlu0 %292, %v290
      %v294 = vpop.permute.xlu0 %293
      %v296 = vmul.f32 %v286, %v294
      %v297 = vmul.f32 %v287, %v294
      %v298 = vmul.f32 %v288, %v294
      %v299 = vmul.f32 %v289, %v294
      %v300 = vld [vmem:[%s2] sm:$0xff]
      %302 = vset.pattern.permute.xlu0 0
      %303 = vperm.xlu0 %302, %v300
      %v304 = vpop.permute.xlu0 %303
      %v306 = vadd.f32 %v296, %v304
      %v307 = vadd.f32 %v297, %v304
      %v308 = vadd.f32 %v298, %v304
      %v309 = vadd.f32 %v299, %v304
      %v310 = vmax.f32 %v306, 0.0
      %v311 = vmax.f32 %v307, 0.0
      %v312 = vmax.f32 %v308, 0.0
      %v313 = vmax.f32 %v309, 0.0
      %v314 = vlaneseq
      %v315 = vand.u32 %v314, 127
      %v316 = vadd.s32 %v315, 256
      %v317 = vadd.s32 %v315, 384
      %v318 = vsub.s32 %v315, 128
      %v319 = vsub.s32 %v316, 128
      %v320 = vsub.s32 %v317, 128
      %vm321 = vcmp.gt.s32.totalorder %v318, 0
      %v322 = vsel %vm321, %v318, 0
      %vm323 = vcmp.gt.s32.totalorder %v315, 0
      %v324 = vsel %vm323, %v315, 0
      %vm325 = vcmp.gt.s32.totalorder %v319, 0
      %v326 = vsel %vm325, %v319, 0
      %vm327 = vcmp.gt.s32.totalorder %v320, 0
      %v328 = vsel %vm327, %v320, 0
      %vm329 = vcmp.lt.s32.totalorder %v322, 0
      %v330 = vsub.s32 0, %v322
      %v331 = vsel %vm329, %v330, %v322
      %v332 = vmul.u32.u64.compose %v331, 3817748708
      %v333 = vextract.low.u32 %v332
      %v334 = vextract.high.u32 %v332
      %v335 = vshrl.u32 %v334, 4
      %v336 = vmul.u32 %v335, 18
      %v337 = vsub.s32 %v331, %v336
      %v338 = vsub.s32 0, %v337
      %v339 = vsel %vm329, %v338, %v337
      %vm340 = vcmp.lt.s32.totalorder %v324, 0
      %v341 = vsub.s32 0, %v324
      %v342 = vsel %vm340, %v341, %v324
      %v343 = vmul.u32.u64.compose %v342, 3817748708
      %v344 = vextract.low.u32 %v343
      %v345 = vextract.high.u32 %v343
      %v346 = vshrl.u32 %v345, 4
      %v347 = vmul.u32 %v346, 18
      %v348 = vsub.s32 %v342, %v347
      %v349 = vsub.s32 0, %v348
      %v350 = vsel %vm340, %v349, %v348
      %vm351 = vcmp.lt.s32.totalorder %v326, 0
      %v352 = vsub.s32 0, %v326
      %v353 = vsel %vm351, %v352, %v326
      %v354 = vmul.u32.u64.compose %v353, 3817748708
      %v355 = vextract.low.u32 %v354
      %v356 = vextract.high.u32 %v354
      %v357 = vshrl.u32 %v356, 4
      %v358 = vmul.u32 %v357, 18
      %v359 = vsub.s32 %v353, %v358
      %v360 = vsub.s32 0, %v359
      %v361 = vsel %vm351, %v360, %v359
      %vm362 = vcmp.lt.s32.totalorder %v328, 0
      %v363 = vsub.s32 0, %v328
      %v364 = vsel %vm362, %v363, %v328
      %v365 = vmul.u32.u64.compose %v364, 3817748708
      %v366 = vextract.low.u32 %v365
      %v367 = vextract.high.u32 %v365
      %v368 = vshrl.u32 %v367, 4
      %v369 = vmul.u32 %v368, 18
      %v370 = vsub.s32 %v364, %v369
      %v371 = vsub.s32 0, %v370
      %v372 = vsel %vm362, %v371, %v370
      %vm373 = vcmp.ne.s32.totalorder %v339, 0
      %vm374 = vcmp.ne.s32.totalorder %v350, 0
      %vm375 = vcmp.ne.s32.totalorder %v361, 0
      %vm376 = vcmp.ne.s32.totalorder %v372, 0
      %vm377 = vcmp.lt.s32.totalorder %v339, 0
      %vm378 = vcmp.lt.s32.totalorder %v350, 0
      %vm379 = vcmp.lt.s32.totalorder %v361, 0
      %vm380 = vcmp.lt.s32.totalorder %v372, 0
      %vm381 = vmand %vm377, %vm373
      %vm382 = vmand %vm378, %vm374
      %vm383 = vmand %vm379, %vm375
      %vm384 = vmand %vm380, %vm376
      %v385 = vadd.s32 %v339, 18
      %v386 = vadd.s32 %v350, 18
      %v387 = vadd.s32 %v361, 18
      %v388 = vadd.s32 %v372, 18
      %v389 = vsel %vm381, %v385, %v339
      %v390 = vsel %vm382, %v386, %v350
      %v391 = vsel %vm383, %v387, %v361
      %v392 = vsel %vm384, %v388, %v372
      %vm393 = vcmp.ge.s32.totalorder %v318, 0
      %vm394 = vcmp.ge.s32.totalorder %v315, 0
      %vm395 = vcmp.ge.s32.totalorder %v319, 0
      %vm396 = vcmp.ge.s32.totalorder %v320, 0
      %vm397 = vcmp.lt.s32.totalorder %v318, 288
      %vm398 = vcmp.lt.s32.totalorder %v315, 288
      %vm399 = vcmp.lt.s32.totalorder %v319, 288
      %vm400 = vcmp.lt.s32.totalorder %v320, 288
      %vm401 = vmand %vm393, %vm397
      %vm402 = vmand %vm394, %vm398
      %vm403 = vmand %vm395, %vm399
      %vm404 = vmand %vm396, %vm400
      %vm405 = vcmp.lt.s32.totalorder %v389, 16
      %vm406 = vcmp.lt.s32.totalorder %v390, 16
      %vm407 = vcmp.lt.s32.totalorder %v391, 16
      %vm408 = vcmp.lt.s32.totalorder %v392, 16
      %vm409 = vmand %vm401, %vm405
      %vm410 = vmand %vm402, %vm406
      %vm411 = vmand %vm403, %vm407
      %vm412 = vmand %vm404, %vm408
      %v413 = vsel %vm409, 1, 0
      %v414 = vsel %vm410, 1, 0
      %v415 = vsel %vm411, 1, 0
      %v416 = vsel %vm412, 1, 0
      %vm417 = vcmp.eq.s32.totalorder %v413, 1
      %vm418 = vcmp.eq.s32.totalorder %v414, 1
      %vm419 = vcmp.eq.s32.totalorder %v415, 1
      %vm420 = vcmp.eq.s32.totalorder %v416, 1
      %v421 = vsel %vm417, %v310, 0.0
      %v422 = vsel %vm418, %v311, 0.0
      %v423 = vsel %vm419, %v312, 0.0
      %v424 = vsel %vm420, %v313, 0.0
      %v425 = vpack.c.bf16 %v421, %v421
      %v426 = vpack.c.bf16 %v422, %v422
      %v427 = vpack.c.bf16 %v423, %v423
      %v428 = vpack.c.bf16 %v424, %v424
      %v433 = vunpack.c.l.b16 %v425
      %v434 = vunpack.c.l.b16 %v426
      %v435 = vunpack.c.l.b16 %v427
      %v436 = vunpack.c.l.b16 %v428
      %v437 = vpack.c.b16 %v434, %v433
      %v438 = vpack.c.b16 %v436, %v435
      %441 = vst [vmem:[#allocation3] sm:$0xff] %v437
      %vm442 = vcmask 1043456
      %vm443 = vcmask 416772
      %vm444 = vmor %vm443, %vm442
      %445 = vst.msk [vmem:[#allocation3 + $0x8] sm:$0xff] %vm444, %v438
      %v446 = vld [vmem:[#allocation3] sm:$0xff]
      %v447 = vld [vmem:[#allocation3 + $0x8] sm:$0xff]
      %v448 = vld [vmem:[%s266] sm:$0xf]
      %v451 = vunpack.c.l.b16 %v446
      %v452 = vunpack.c.h.b16 %v446
      %v453 = vunpack.c.l.b16 %v447
      %v454 = vunpack.c.h.b16 %v447
      %v455 = vpack.c.b16 %v451, %v451
      %v456 = vpack.c.b16 %v452, %v452
      %v457 = vpack.c.b16 %v453, %v453
      %v458 = vpack.c.b16 %v454, %v454
      %459 = vrot.lane.b32.xlu0 %v455, 19
      %v460 = vpop.permute.xlu0 %459
      %461 = vrot.lane.b32.xlu0 %v456, 19
      %v462 = vpop.permute.xlu0 %461
      %463 = vrot.lane.b32.xlu0 %v457, 19
      %v464 = vpop.permute.xlu0 %463
      %465 = vrot.lane.b32.xlu0 %v458, 19
      %v466 = vpop.permute.xlu0 %465
      %vm467 = vcmask 154624
      %v468 = vsel %vm467, %v460, %v462
      %v469 = vsel %vm467, %v462, %v464
      %v470 = vsel %vm467, %v464, %v466
      %vm471 = vcmask 64512
      %v473 = vsel %vm471, %v448, 0
      %v476 = vsel %vm442, %v468, 0
      %v479 = vsel %vm442, %v469, 0
      %v482 = vsel %vm442, %v470, 0
      %484 = vmatprep.subr.bf16.mxu0 %v479
      %485 = vmatpush1.bf16.msra.mxu0 %v476
      %486 = vmatprep.subr.bf16.mxu0 0
      %487 = vmatpush1.bf16.msra.mxu0 0
      %488 = vmatprep.subr.bf16.mxu0 0
      %489 = vmatpush1.bf16.msra.mxu0 0
      %490 = vmatprep.subr.bf16.mxu0 0
      %491 = vmatpush1.bf16.msra.mxu0 0
      %492 = vmatprep.subr.bf16.mxu0 0
      %493 = vmatpush1.bf16.msra.mxu0 0
      %494 = vmatprep.subr.bf16.mxu0 0
      %495 = vmatpush1.bf16.msra.mxu0 0
      %496 = vmatprep.subr.bf16.mxu0 0
      %497 = vmatpush1.bf16.msra.mxu0 0
      %498 = vmatprep.subr.bf16.mxu0 0
      %499 = vmatpush1.bf16.msra.mxu0 0
      %500 = vmatprep.subr.bf16.mxu0 0
      %501 = vmatpush1.bf16.msra.mxu0 0
      %502 = vmatprep.subr.bf16.mxu0 0
      %503 = vmatpush1.bf16.msra.mxu0 0
      %504 = vmatprep.subr.bf16.mxu0 0
      %505 = vmatpush1.bf16.msra.mxu0 0
      %506 = vmatprep.subr.bf16.mxu0 0
      %507 = vmatpush1.bf16.msra.mxu0 0
      %508 = vmatprep.subr.bf16.mxu0 0
      %509 = vmatpush1.bf16.msra.mxu0 0
      %510 = vmatprep.subr.bf16.mxu0 0
      %511 = vmatpush1.bf16.msra.mxu0 0
      %512 = vmatprep.subr.bf16.mxu0 0
      %513 = vmatpush1.bf16.msra.mxu0 0
      %514 = vmatprep.subr.bf16.mxu0 0
      %515 = vmatpush1.bf16.msra.mxu0 0
      %516 = vmatprep.mubr.bf16.mxu0 0
      %517 = vmatmul.mubr.bf16.gmra.mrb[0].mxu0 %v473
      %v518 = vpop.f32.mrb[0].mxu0
      %v519 = vadd.f32 0.0, %v518
      %v520 = vpop.f32.mrb[0].mxu0
      %v521 = vadd.f32 0.0, %v520
      %v522 = vpop.f32.mrb[0].mxu0
      %v523 = vpop.f32.mrb[0].mxu0
      %524 = vdwg.mxu0
      %525 = vmatprep.subr.bf16.mxu0 0
      %526 = vmatpush1.bf16.msra.mxu0 %v482
      %527 = vmatprep.subr.bf16.mxu0 0
      %528 = vmatpush1.bf16.msra.mxu0 0
      %529 = vmatprep.subr.bf16.mxu0 0
      %530 = vmatpush1.bf16.msra.mxu0 0
      %531 = vmatprep.subr.bf16.mxu0 0
      %532 = vmatpush1.bf16.msra.mxu0 0
      %533 = vmatprep.subr.bf16.mxu0 0
      %534 = vmatpush1.bf16.msra.mxu0 0
      %535 = vmatprep.subr.bf16.mxu0 0
      %536 = vmatpush1.bf16.msra.mxu0 0
      %537 = vmatprep.subr.bf16.mxu0 0
      %538 = vmatpush1.bf16.msra.mxu0 0
      %539 = vmatprep.subr.bf16.mxu0 0
      %540 = vmatpush1.bf16.msra.mxu0 0
      %541 = vmatprep.subr.bf16.mxu0 0
      %542 = vmatpush1.bf16.msra.mxu0 0
      %543 = vmatprep.subr.bf16.mxu0 0
      %544 = vmatpush1.bf16.msra.mxu0 0
      %545 = vmatprep.subr.bf16.mxu0 0
      %546 = vmatpush1.bf16.msra.mxu0 0
      %547 = vmatprep.subr.bf16.mxu0 0
      %548 = vmatpush1.bf16.msra.mxu0 0
      %549 = vmatprep.subr.bf16.mxu0 0
      %550 = vmatpush1.bf16.msra.mxu0 0
      %551 = vmatprep.subr.bf16.mxu0 0
      %552 = vmatpush1.bf16.msra.mxu0 0
      %553 = vmatprep.subr.bf16.mxu0 0
      %554 = vmatpush1.bf16.msra.mxu0 0
      %555 = vmatprep.subr.bf16.mxu0 0
      %556 = vmatpush1.bf16.msra.mxu0 0
      %557 = vmatprep.mubr.bf16.mxu0 0
      %558 = vmatmul.mubr.bf16.gmra.mrb[0].mxu0 %v473
      %v559 = vpop.f32.mrb[0].mxu0
      %v560 = vadd.f32 0.0, %v559
      %v561 = vpop.f32.mrb[0].mxu0
      %v562 = vpop.f32.mrb[0].mxu0
      %v563 = vpop.f32.mrb[0].mxu0
      %564 = vdwg.mxu0
      %565 = vst [vmem:[#allocation2] sm:$0xff] %v519
      %566 = vst [vmem:[#allocation2 + $0x8] sm:$0xff] %v521
      %vm567 = vcmask 261120
      %568 = vst.msk [vmem:[#allocation2 + $0x10] sm:$0xff] %vm567, %v560
      %v569 = vld [vmem:[#allocation3] sm:$0xff]
      %v570 = vld [vmem:[#allocation3 + $0x8] sm:$0xff]
      %s571 = scalar_lea.vmem %s266, 4
      %v572 = vld [vmem:[%s571] sm:$0xf]
      %v575 = vunpack.c.l.b16 %v569
      %v576 = vunpack.c.h.b16 %v569
      %v577 = vunpack.c.l.b16 %v570
      %v578 = vunpack.c.h.b16 %v570
      %v579 = vpack.c.b16 %v575, %v575
      %v580 = vpack.c.b16 %v576, %v576
      %v581 = vpack.c.b16 %v577, %v577
      %v582 = vpack.c.b16 %v578, %v578
      %583 = vrot.lane.b32.xlu0 %v579, 18
      %v584 = vpop.permute.xlu0 %583
      %585 = vrot.lane.b32.xlu0 %v580, 18
      %v586 = vpop.permute.xlu0 %585
      %587 = vrot.lane.b32.xlu0 %v581, 18
      %v588 = vpop.permute.xlu0 %587
      %589 = vrot.lane.b32.xlu0 %v582, 18
      %v590 = vpop.permute.xlu0 %589
      %vm591 = vcmask 146432
      %v592 = vsel %vm591, %v584, %v586
      %v593 = vsel %vm591, %v586, %v588
      %v594 = vsel %vm591, %v588, %v590
      %v596 = vsel %vm471, %v572, 0
      %v599 = vsel %vm442, %v592, 0
      %v602 = vsel %vm442, %v593, 0
      %v605 = vsel %vm442, %v594, 0
      %607 = vmatprep.subr.bf16.mxu0 %v602
      %608 = vmatpush1.bf16.msra.mxu0 %v599
      %609 = vmatprep.subr.bf16.mxu0 0
      %610 = vmatpush1.bf16.msra.mxu0 0
      %611 = vmatprep.subr.bf16.mxu0 0
      %612 = vmatpush1.bf16.msra.mxu0 0
      %613 = vmatprep.subr.bf16.mxu0 0
      %614 = vmatpush1.bf16.msra.mxu0 0
      %615 = vmatprep.subr.bf16.mxu0 0
      %616 = vmatpush1.bf16.msra.mxu0 0
      %617 = vmatprep.subr.bf16.mxu0 0
      %618 = vmatpush1.bf16.msra.mxu0 0
      %619 = vmatprep.subr.bf16.mxu0 0
      %620 = vmatpush1.bf16.msra.mxu0 0
      %621 = vmatprep.subr.bf16.mxu0 0
      %622 = vmatpush1.bf16.msra.mxu0 0
      %623 = vmatprep.subr.bf16.mxu0 0
      %624 = vmatpush1.bf16.msra.mxu0 0
      %625 = vmatprep.subr.bf16.mxu0 0
      %626 = vmatpush1.bf16.msra.mxu0 0
      %627 = vmatprep.subr.bf16.mxu0 0
      %628 = vmatpush1.bf16.msra.mxu0 0
      %629 = vmatprep.subr.bf16.mxu0 0
      %630 = vmatpush1.bf16.msra.mxu0 0
      %631 = vmatprep.subr.bf16.mxu0 0
      %632 = vmatpush1.bf16.msra.mxu0 0
      %633 = vmatprep.subr.bf16.mxu0 0
      %634 = vmatpush1.bf16.msra.mxu0 0
      %635 = vmatprep.subr.bf16.mxu0 0
      %636 = vmatpush1.bf16.msra.mxu0 0
      %637 = vmatprep.subr.bf16.mxu0 0
      %638 = vmatpush1.bf16.msra.mxu0 0
      %639 = vmatprep.mubr.bf16.mxu0 0
      %640 = vmatmul.mubr.bf16.gmra.mrb[0].mxu0 %v596
      %v641 = vpop.f32.mrb[0].mxu0
      %v642 = vadd.f32 0.0, %v641
      %v643 = vpop.f32.mrb[0].mxu0
      %v644 = vadd.f32 0.0, %v643
      %v645 = vpop.f32.mrb[0].mxu0
      %v646 = vpop.f32.mrb[0].mxu0
      %647 = vdwg.mxu0
      %648 = vmatprep.subr.bf16.mxu0 0
      %649 = vmatpush1.bf16.msra.mxu0 %v605
      %650 = vmatprep.subr.bf16.mxu0 0
      %651 = vmatpush1.bf16.msra.mxu0 0
      %652 = vmatprep.subr.bf16.mxu0 0
      %653 = vmatpush1.bf16.msra.mxu0 0
      %654 = vmatprep.subr.bf16.mxu0 0
      %655 = vmatpush1.bf16.msra.mxu0 0
      %656 = vmatprep.subr.bf16.mxu0 0
      %657 = vmatpush1.bf16.msra.mxu0 0
      %658 = vmatprep.subr.bf16.mxu0 0
      %659 = vmatpush1.bf16.msra.mxu0 0
      %660 = vmatprep.subr.bf16.mxu0 0
      %661 = vmatpush1.bf16.msra.mxu0 0
      %662 = vmatprep.subr.bf16.mxu0 0
      %663 = vmatpush1.bf16.msra.mxu0 0
      %664 = vmatprep.subr.bf16.mxu0 0
      %665 = vmatpush1.bf16.msra.mxu0 0
      %666 = vmatprep.subr.bf16.mxu0 0
      %667 = vmatpush1.bf16.msra.mxu0 0
      %668 = vmatprep.subr.bf16.mxu0 0
      %669 = vmatpush1.bf16.msra.mxu0 0
      %670 = vmatprep.subr.bf16.mxu0 0
      %671 = vmatpush1.bf16.msra.mxu0 0
      %672 = vmatprep.subr.bf16.mxu0 0
      %673 = vmatpush1.bf16.msra.mxu0 0
      %674 = vmatprep.subr.bf16.mxu0 0
      %675 = vmatpush1.bf16.msra.mxu0 0
      %676 = vmatprep.subr.bf16.mxu0 0
      %677 = vmatpush1.bf16.msra.mxu0 0
      %678 = vmatprep.subr.bf16.mxu0 0
      %679 = vmatpush1.bf16.msra.mxu0 0
      %680 = vmatprep.mubr.bf16.mxu0 0
      %681 = vmatmul.mubr.bf16.gmra.mrb[0].mxu0 %v596
      %v682 = vpop.f32.mrb[0].mxu0
      %v683 = vadd.f32 0.0, %v682
      %v684 = vpop.f32.mrb[0].mxu0
      %v685 = vpop.f32.mrb[0].mxu0
      %v686 = vpop.f32.mrb[0].mxu0
      %687 = vdwg.mxu0
      %v688 = vld [vmem:[#allocation2] sm:$0xff]
      %v689 = vld [vmem:[#allocation2 + $0x8] sm:$0xff]
      %v690 = vld [vmem:[#allocation2 + $0x10] sm:$0xff]
      %v691 = vadd.f32 %v688, %v642
      %v692 = vadd.f32 %v689, %v644
      %v693 = vadd.f32 %v690, %v683
      %694 = vst [vmem:[#allocation2] sm:$0xff] %v691
      %695 = vst [vmem:[#allocation2 + $0x8] sm:$0xff] %v692
      %696 = vst.msk [vmem:[#allocation2 + $0x10] sm:$0xff] %vm567, %v693
      %v697 = vld [vmem:[#allocation3] sm:$0xff]
      %v698 = vld [vmem:[#allocation3 + $0x8] sm:$0xff]
      %s699 = scalar_lea.vmem %s266, 8
      %v700 = vld [vmem:[%s699] sm:$0xf]
      %v703 = vunpack.c.l.b16 %v697
      %v704 = vunpack.c.h.b16 %v697
      %v705 = vunpack.c.l.b16 %v698
      %v706 = vunpack.c.h.b16 %v698
      %v707 = vpack.c.b16 %v703, %v703
      %v708 = vpack.c.b16 %v704, %v704
      %v709 = vpack.c.b16 %v705, %v705
      %v710 = vpack.c.b16 %v706, %v706
      %711 = vrot.lane.b32.xlu0 %v707, 17
      %v712 = vpop.permute.xlu0 %711
      %713 = vrot.lane.b32.xlu0 %v708, 17
      %v714 = vpop.permute.xlu0 %713
      %715 = vrot.lane.b32.xlu0 %v709, 17
      %v716 = vpop.permute.xlu0 %715
      %717 = vrot.lane.b32.xlu0 %v710, 17
      %v718 = vpop.permute.xlu0 %717
      %vm719 = vcmask 138240
      %v720 = vsel %vm719, %v712, %v714
      %v721 = vsel %vm719, %v714, %v716
      %v722 = vsel %vm719, %v716, %v718
      %v724 = vsel %vm471, %v700, 0
      %v727 = vsel %vm442, %v720, 0
      %v730 = vsel %vm442, %v721, 0
      %v733 = vsel %vm442, %v722, 0
      %735 = vmatprep.subr.bf16.mxu0 %v730
      %736 = vmatpush1.bf16.msra.mxu0 %v727
      %737 = vmatprep.subr.bf16.mxu0 0
      %738 = vmatpush1.bf16.msra.mxu0 0
      %739 = vmatprep.subr.bf16.mxu0 0
      %740 = vmatpush1.bf16.msra.mxu0 0
      %741 = vmatprep.subr.bf16.mxu0 0
      %742 = vmatpush1.bf16.msra.mxu0 0
      %743 = vmatprep.subr.bf16.mxu0 0
      %744 = vmatpush1.bf16.msra.mxu0 0
      %745 = vmatprep.subr.bf16.mxu0 0
      %746 = vmatpush1.bf16.msra.mxu0 0
      %747 = vmatprep.subr.bf16.mxu0 0
      %748 = vmatpush1.bf16.msra.mxu0 0
      %749 = vmatprep.subr.bf16.mxu0 0
      %750 = vmatpush1.bf16.msra.mxu0 0
      %751 = vmatprep.subr.bf16.mxu0 0
      %752 = vmatpush1.bf16.msra.mxu0 0
      %753 = vmatprep.subr.bf16.mxu0 0
      %754 = vmatpush1.bf16.msra.mxu0 0
      %755 = vmatprep.subr.bf16.mxu0 0
      %756 = vmatpush1.bf16.msra.mxu0 0
      %757 = vmatprep.subr.bf16.mxu0 0
      %758 = vmatpush1.bf16.msra.mxu0 0
      %759 = vmatprep.subr.bf16.mxu0 0
      %760 = vmatpush1.bf16.msra.mxu0 0
      %761 = vmatprep.subr.bf16.mxu0 0
      %762 = vmatpush1.bf16.msra.mxu0 0
      %763 = vmatprep.subr.bf16.mxu0 0
      %764 = vmatpush1.bf16.msra.mxu0 0
      %765 = vmatprep.subr.bf16.mxu0 0
      %766 = vmatpush1.bf16.msra.mxu0 0
      %767 = vmatprep.mubr.bf16.mxu0 0
      %768 = vmatmul.mubr.bf16.gmra.mrb[0].mxu0 %v724
      %v769 = vpop.f32.mrb[0].mxu0
      %v770 = vadd.f32 0.0, %v769
      %v771 = vpop.f32.mrb[0].mxu0
      %v772 = vadd.f32 0.0, %v771
      %v773 = vpop.f32.mrb[0].mxu0
      %v774 = vpop.f32.mrb[0].mxu0
      %775 = vdwg.mxu0
      %776 = vmatprep.subr.bf16.mxu0 0
      %777 = vmatpush1.bf16.msra.mxu0 %v733
      %778 = vmatprep.subr.bf16.mxu0 0
      %779 = vmatpush1.bf16.msra.mxu0 0
      %780 = vmatprep.subr.bf16.mxu0 0
      %781 = vmatpush1.bf16.msra.mxu0 0
      %782 = vmatprep.subr.bf16.mxu0 0
      %783 = vmatpush1.bf16.msra.mxu0 0
      %784 = vmatprep.subr.bf16.mxu0 0
      %785 = vmatpush1.bf16.msra.mxu0 0
      %786 = vmatprep.subr.bf16.mxu0 0
      %787 = vmatpush1.bf16.msra.mxu0 0
      %788 = vmatprep.subr.bf16.mxu0 0
      %789 = vmatpush1.bf16.msra.mxu0 0
      %790 = vmatprep.subr.bf16.mxu0 0
      %791 = vmatpush1.bf16.msra.mxu0 0
      %792 = vmatprep.subr.bf16.mxu0 0
      %793 = vmatpush1.bf16.msra.mxu0 0
      %794 = vmatprep.subr.bf16.mxu0 0
      %795 = vmatpush1.bf16.msra.mxu0 0
      %796 = vmatprep.subr.bf16.mxu0 0
      %797 = vmatpush1.bf16.msra.mxu0 0
      %798 = vmatprep.subr.bf16.mxu0 0
      %799 = vmatpush1.bf16.msra.mxu0 0
      %800 = vmatprep.subr.bf16.mxu0 0
      %801 = vmatpush1.bf16.msra.mxu0 0
      %802 = vmatprep.subr.bf16.mxu0 0
      %803 = vmatpush1.bf16.msra.mxu0 0
      %804 = vmatprep.subr.bf16.mxu0 0
      %805 = vmatpush1.bf16.msra.mxu0 0
      %806 = vmatprep.subr.bf16.mxu0 0
      %807 = vmatpush1.bf16.msra.mxu0 0
      %808 = vmatprep.mubr.bf16.mxu0 0
      %809 = vmatmul.mubr.bf16.gmra.mrb[0].mxu0 %v724
      %v810 = vpop.f32.mrb[0].mxu0
      %v811 = vadd.f32 0.0, %v810
      %v812 = vpop.f32.mrb[0].mxu0
      %v813 = vpop.f32.mrb[0].mxu0
      %v814 = vpop.f32.mrb[0].mxu0
      %815 = vdwg.mxu0
      %v816 = vld [vmem:[#allocation2] sm:$0xff]
      %v817 = vld [vmem:[#allocation2 + $0x8] sm:$0xff]
      %v818 = vld [vmem:[#allocation2 + $0x10] sm:$0xff]
      %v819 = vadd.f32 %v816, %v770
      %v820 = vadd.f32 %v817, %v772
      %v821 = vadd.f32 %v818, %v811
      %822 = vst [vmem:[#allocation2] sm:$0xff] %v819
      %823 = vst [vmem:[#allocation2 + $0x8] sm:$0xff] %v820
      %824 = vst.msk [vmem:[#allocation2 + $0x10] sm:$0xff] %vm567, %v821
      %v825 = vld [vmem:[#allocation3] sm:$0xff]
      %v826 = vld [vmem:[#allocation3 + $0x8] sm:$0xff]
      %s827 = scalar_lea.vmem %s266, 12
      %v828 = vld [vmem:[%s827] sm:$0xf]
      %v831 = vunpack.c.l.b16 %v825
      %v832 = vunpack.c.h.b16 %v825
      %v833 = vunpack.c.l.b16 %v826
      %v834 = vunpack.c.h.b16 %v826
      %v835 = vpack.c.b16 %v831, %v831
      %v836 = vpack.c.b16 %v832, %v832
      %v837 = vpack.c.b16 %v833, %v833
      %v838 = vpack.c.b16 %v834, %v834
      %839 = vrot.lane.b32.xlu0 %v835, 1
      %v840 = vpop.permute.xlu0 %839
      %841 = vrot.lane.b32.xlu0 %v836, 1
      %v842 = vpop.permute.xlu0 %841
      %843 = vrot.lane.b32.xlu0 %v837, 1
      %v844 = vpop.permute.xlu0 %843
      %845 = vrot.lane.b32.xlu0 %v838, 1
      %v846 = vpop.permute.xlu0 %845
      %vm847 = vcmask 7168
      %v848 = vsel %vm847, %v840, %v842
      %v849 = vsel %vm847, %v842, %v844
      %v850 = vsel %vm847, %v844, %v846
      %v852 = vsel %vm471, %v828, 0
      %v855 = vsel %vm442, %v848, 0
      %v858 = vsel %vm442, %v849, 0
      %v861 = vsel %vm442, %v850, 0
      %863 = vmatprep.subr.bf16.mxu0 %v858
      %864 = vmatpush1.bf16.msra.mxu0 %v855
      %865 = vmatprep.subr.bf16.mxu0 0
      %866 = vmatpush1.bf16.msra.mxu0 0
      %867 = vmatprep.subr.bf16.mxu0 0
      %868 = vmatpush1.bf16.msra.mxu0 0
      %869 = vmatprep.subr.bf16.mxu0 0
      %870 = vmatpush1.bf16.msra.mxu0 0
      %871 = vmatprep.subr.bf16.mxu0 0
      %872 = vmatpush1.bf16.msra.mxu0 0
      %873 = vmatprep.subr.bf16.mxu0 0
      %874 = vmatpush1.bf16.msra.mxu0 0
      %875 = vmatprep.subr.bf16.mxu0 0
      %876 = vmatpush1.bf16.msra.mxu0 0
      %877 = vmatprep.subr.bf16.mxu0 0
      %878 = vmatpush1.bf16.msra.mxu0 0
      %879 = vmatprep.subr.bf16.mxu0 0
      %880 = vmatpush1.bf16.msra.mxu0 0
      %881 = vmatprep.subr.bf16.mxu0 0
      %882 = vmatpush1.bf16.msra.mxu0 0
      %883 = vmatprep.subr.bf16.mxu0 0
      %884 = vmatpush1.bf16.msra.mxu0 0
      %885 = vmatprep.subr.bf16.mxu0 0
      %886 = vmatpush1.bf16.msra.mxu0 0
      %887 = vmatprep.subr.bf16.mxu0 0
      %888 = vmatpush1.bf16.msra.mxu0 0
      %889 = vmatprep.subr.bf16.mxu0 0
      %890 = vmatpush1.bf16.msra.mxu0 0
      %891 = vmatprep.subr.bf16.mxu0 0
      %892 = vmatpush1.bf16.msra.mxu0 0
      %893 = vmatprep.subr.bf16.mxu0 0
      %894 = vmatpush1.bf16.msra.mxu0 0
      %895 = vmatprep.mubr.bf16.mxu0 0
      %896 = vmatmul.mubr.bf16.gmra.mrb[0].mxu0 %v852
      %v897 = vpop.f32.mrb[0].mxu0
      %v898 = vadd.f32 0.0, %v897
      %v899 = vpop.f32.mrb[0].mxu0
      %v900 = vadd.f32 0.0, %v899
      %v901 = vpop.f32.mrb[0].mxu0
      %v902 = vpop.f32.mrb[0].mxu0
      %903 = vdwg.mxu0
      %904 = vmatprep.subr.bf16.mxu0 0
      %905 = vmatpush1.bf16.msra.mxu0 %v861
      %906 = vmatprep.subr.bf16.mxu0 0
      %907 = vmatpush1.bf16.msra.mxu0 0
      %908 = vmatprep.subr.bf16.mxu0 0
      %909 = vmatpush1.bf16.msra.mxu0 0
      %910 = vmatprep.subr.bf16.mxu0 0
      %911 = vmatpush1.bf16.msra.mxu0 0
      %912 = vmatprep.subr.bf16.mxu0 0
      %913 = vmatpush1.bf16.msra.mxu0 0
      %914 = vmatprep.subr.bf16.mxu0 0
      %915 = vmatpush1.bf16.msra.mxu0 0
      %916 = vmatprep.subr.bf16.mxu0 0
      %917 = vmatpush1.bf16.msra.mxu0 0
      %918 = vmatprep.subr.bf16.mxu0 0
      %919 = vmatpush1.bf16.msra.mxu0 0
      %920 = vmatprep.subr.bf16.mxu0 0
      %921 = vmatpush1.bf16.msra.mxu0 0
      %922 = vmatprep.subr.bf16.mxu0 0
      %923 = vmatpush1.bf16.msra.mxu0 0
      %924 = vmatprep.subr.bf16.mxu0 0
      %925 = vmatpush1.bf16.msra.mxu0 0
      %926 = vmatprep.subr.bf16.mxu0 0
      %927 = vmatpush1.bf16.msra.mxu0 0
      %928 = vmatprep.subr.bf16.mxu0 0
      %929 = vmatpush1.bf16.msra.mxu0 0
      %930 = vmatprep.subr.bf16.mxu0 0
      %931 = vmatpush1.bf16.msra.mxu0 0
      %932 = vmatprep.subr.bf16.mxu0 0
      %933 = vmatpush1.bf16.msra.mxu0 0
      %934 = vmatprep.subr.bf16.mxu0 0
      %935 = vmatpush1.bf16.msra.mxu0 0
      %936 = vmatprep.mubr.bf16.mxu0 0
      %937 = vmatmul.mubr.bf16.gmra.mrb[0].mxu0 %v852
      %v938 = vpop.f32.mrb[0].mxu0
      %v939 = vadd.f32 0.0, %v938
      %v940 = vpop.f32.mrb[0].mxu0
      %v941 = vpop.f32.mrb[0].mxu0
      %v942 = vpop.f32.mrb[0].mxu0
      %943 = vdwg.mxu0
      %v944 = vld [vmem:[#allocation2] sm:$0xff]
      %v945 = vld [vmem:[#allocation2 + $0x8] sm:$0xff]
      %v946 = vld [vmem:[#allocation2 + $0x10] sm:$0xff]
      %v947 = vadd.f32 %v944, %v898
      %v948 = vadd.f32 %v945, %v900
      %v949 = vadd.f32 %v946, %v939
      %950 = vst [vmem:[#allocation2] sm:$0xff] %v947
      %951 = vst [vmem:[#allocation2 + $0x8] sm:$0xff] %v948
      %952 = vst.msk [vmem:[#allocation2 + $0x10] sm:$0xff] %vm567, %v949
      %v953 = vld [vmem:[#allocation3 + $0x4] sm:$0xff]
      %v954 = vld [vmem:[#allocation3 + $0xc] sm:$0xf]
      %s955 = scalar_lea.vmem %s266, 16
      %v956 = vld [vmem:[%s955] sm:$0xf]
      %v959 = vunpack.c.l.b16 %v953
      %v960 = vunpack.c.h.b16 %v953
      %v961 = vunpack.c.l.b16 %v954
      %v962 = vpack.c.b16 %v959, %v959
      %v963 = vpack.c.b16 %v960, %v960
      %v964 = vpack.c.b16 %v961, %v961
      %v966 = vsel %vm471, %v956, 0
      %v969 = vsel %vm442, %v962, 0
      %v972 = vsel %vm442, %v963, 0
      %v975 = vsel %vm442, %v964, 0
      %977 = vmatprep.subr.bf16.mxu0 %v972
      %978 = vmatpush1.bf16.msra.mxu0 %v969
      %979 = vmatprep.subr.bf16.mxu0 0
      %980 = vmatpush1.bf16.msra.mxu0 0
      %981 = vmatprep.subr.bf16.mxu0 0
      %982 = vmatpush1.bf16.msra.mxu0 0
      %983 = vmatprep.subr.bf16.mxu0 0
      %984 = vmatpush1.bf16.msra.mxu0 0
      %985 = vmatprep.subr.bf16.mxu0 0
      %986 = vmatpush1.bf16.msra.mxu0 0
      %987 = vmatprep.subr.bf16.mxu0 0
      %988 = vmatpush1.bf16.msra.mxu0 0
      %989 = vmatprep.subr.bf16.mxu0 0
      %990 = vmatpush1.bf16.msra.mxu0 0
      %991 = vmatprep.subr.bf16.mxu0 0
      %992 = vmatpush1.bf16.msra.mxu0 0
      %993 = vmatprep.subr.bf16.mxu0 0
      %994 = vmatpush1.bf16.msra.mxu0 0
      %995 = vmatprep.subr.bf16.mxu0 0
      %996 = vmatpush1.bf16.msra.mxu0 0
      %997 = vmatprep.subr.bf16.mxu0 0
      %998 = vmatpush1.bf16.msra.mxu0 0
      %999 = vmatprep.subr.bf16.mxu0 0
      %1000 = vmatpush1.bf16.msra.mxu0 0
      %1001 = vmatprep.subr.bf16.mxu0 0
      %1002 = vmatpush1.bf16.msra.mxu0 0
      %1003 = vmatprep.subr.bf16.mxu0 0
      %1004 = vmatpush1.bf16.msra.mxu0 0
      %1005 = vmatprep.subr.bf16.mxu0 0
      %1006 = vmatpush1.bf16.msra.mxu0 0
      %1007 = vmatprep.subr.bf16.mxu0 0
      %1008 = vmatpush1.bf16.msra.mxu0 0
      %1009 = vmatprep.mubr.bf16.mxu0 0
      %1010 = vmatmul.mubr.bf16.gmra.mrb[0].mxu0 %v966
      %v1011 = vpop.f32.mrb[0].mxu0
      %v1012 = vadd.f32 0.0, %v1011
      %v1013 = vpop.f32.mrb[0].mxu0
      %v1014 = vadd.f32 0.0, %v1013
      %v1015 = vpop.f32.mrb[0].mxu0
      %v1016 = vpop.f32.mrb[0].mxu0
      %1017 = vdwg.mxu0
      %1018 = vmatprep.subr.bf16.mxu0 0
      %1019 = vmatpush1.bf16.msra.mxu0 %v975
      %1020 = vmatprep.subr.bf16.mxu0 0
      %1021 = vmatpush1.bf16.msra.mxu0 0
      %1022 = vmatprep.subr.bf16.mxu0 0
      %1023 = vmatpush1.bf16.msra.mxu0 0
      %1024 = vmatprep.subr.bf16.mxu0 0
      %1025 = vmatpush1.bf16.msra.mxu0 0
      %1026 = vmatprep.subr.bf16.mxu0 0
      %1027 = vmatpush1.bf16.msra.mxu0 0
      %1028 = vmatprep.subr.bf16.mxu0 0
      %1029 = vmatpush1.bf16.msra.mxu0 0
      %1030 = vmatprep.subr.bf16.mxu0 0
      %1031 = vmatpush1.bf16.msra.mxu0 0
      %1032 = vmatprep.subr.bf16.mxu0 0
      %1033 = vmatpush1.bf16.msra.mxu0 0
      %1034 = vmatprep.subr.bf16.mxu0 0
      %1035 = vmatpush1.bf16.msra.mxu0 0
      %1036 = vmatprep.subr.bf16.mxu0 0
      %1037 = vmatpush1.bf16.msra.mxu0 0
      %1038 = vmatprep.subr.bf16.mxu0 0
      %1039 = vmatpush1.bf16.msra.mxu0 0
      %1040 = vmatprep.subr.bf16.mxu0 0
      %1041 = vmatpush1.bf16.msra.mxu0 0
      %1042 = vmatprep.subr.bf16.mxu0 0
      %1043 = vmatpush1.bf16.msra.mxu0 0
      %1044 = vmatprep.subr.bf16.mxu0 0
      %1045 = vmatpush1.bf16.msra.mxu0 0
      %1046 = vmatprep.subr.bf16.mxu0 0
      %1047 = vmatpush1.bf16.msra.mxu0 0
      %1048 = vmatprep.subr.bf16.mxu0 0
      %1049 = vmatpush1.bf16.msra.mxu0 0
      %1050 = vmatprep.mubr.bf16.mxu0 0
      %1051 = vmatmul.mubr.bf16.gmra.mrb[0].mxu0 %v966
      %v1052 = vpop.f32.mrb[0].mxu0
      %v1053 = vadd.f32 0.0, %v1052
      %v1054 = vpop.f32.mrb[0].mxu0
      %v1055 = vpop.f32.mrb[0].mxu0
      %v1056 = vpop.f32.mrb[0].mxu0
      %1057 = vdwg.mxu0
      %v1058 = vld [vmem:[#allocation2] sm:$0xff]
      %v1059 = vld [vmem:[#allocation2 + $0x8] sm:$0xff]
      %v1060 = vld [vmem:[#allocation2 + $0x10] sm:$0xff]
      %v1061 = vadd.f32 %v1058, %v1012
      %v1062 = vadd.f32 %v1059, %v1014
      %v1063 = vadd.f32 %v1060, %v1053
      %1064 = vst [vmem:[#allocation2] sm:$0xff] %v1061
      %1065 = vst [vmem:[#allocation2 + $0x8] sm:$0xff] %v1062
      %1066 = vst.msk [vmem:[#allocation2 + $0x10] sm:$0xff] %vm567, %v1063
      %v1067 = vld [vmem:[#allocation3 + $0x4] sm:$0xff]
      %v1068 = vld [vmem:[#allocation3 + $0xc] sm:$0xf]
      %s1069 = scalar_lea.vmem %s266, 20
      %v1070 = vld [vmem:[%s1069] sm:$0xf]
      %v1073 = vunpack.c.l.b16 %v1067
      %v1074 = vunpack.c.h.b16 %v1067
      %v1075 = vunpack.c.l.b16 %v1068
      %v1076 = vpack.c.b16 %v1073, %v1073
      %v1077 = vpack.c.b16 %v1074, %v1074
      %v1078 = vpack.c.b16 %v1075, %v1075
      %1079 = vrot.lane.b32.xlu0 %v1076, 127
      %v1080 = vpop.permute.xlu0 %1079
      %1081 = vrot.lane.b32.xlu0 %v1077, 127
      %v1082 = vpop.permute.xlu0 %1081
      %1083 = vrot.lane.b32.xlu0 %v1078, 127
      %v1084 = vpop.permute.xlu0 %1083
      %vm1085 = vcmask 1039360
      %v1086 = vsel %vm1085, %v1080, %v1082
      %v1087 = vsel %vm1085, %v1082, %v1084
      %v1089 = vsel %vm471, %v1070, 0
      %v1092 = vsel %vm442, %v1086, 0
      %v1095 = vsel %vm442, %v1087, 0
      %v1098 = vsel %vm442, %v1084, 0
      %1100 = vmatprep.subr.bf16.mxu0 %v1095
      %1101 = vmatpush1.bf16.msra.mxu0 %v1092
      %1102 = vmatprep.subr.bf16.mxu0 0
      %1103 = vmatpush1.bf16.msra.mxu0 0
      %1104 = vmatprep.subr.bf16.mxu0 0
      %1105 = vmatpush1.bf16.msra.mxu0 0
      %1106 = vmatprep.subr.bf16.mxu0 0
      %1107 = vmatpush1.bf16.msra.mxu0 0
      %1108 = vmatprep.subr.bf16.mxu0 0
      %1109 = vmatpush1.bf16.msra.mxu0 0
      %1110 = vmatprep.subr.bf16.mxu0 0
      %1111 = vmatpush1.bf16.msra.mxu0 0
      %1112 = vmatprep.subr.bf16.mxu0 0
      %1113 = vmatpush1.bf16.msra.mxu0 0
      %1114 = vmatprep.subr.bf16.mxu0 0
      %1115 = vmatpush1.bf16.msra.mxu0 0
      %1116 = vmatprep.subr.bf16.mxu0 0
      %1117 = vmatpush1.bf16.msra.mxu0 0
      %1118 = vmatprep.subr.bf16.mxu0 0
      %1119 = vmatpush1.bf16.msra.mxu0 0
      %1120 = vmatprep.subr.bf16.mxu0 0
      %1121 = vmatpush1.bf16.msra.mxu0 0
      %1122 = vmatprep.subr.bf16.mxu0 0
      %1123 = vmatpush1.bf16.msra.mxu0 0
      %1124 = vmatprep.subr.bf16.mxu0 0
      %1125 = vmatpush1.bf16.msra.mxu0 0
      %1126 = vmatprep.subr.bf16.mxu0 0
      %1127 = vmatpush1.bf16.msra.mxu0 0
      %1128 = vmatprep.subr.bf16.mxu0 0
      %1129 = vmatpush1.bf16.msra.mxu0 0
      %1130 = vmatprep.subr.bf16.mxu0 0
      %1131 = vmatpush1.bf16.msra.mxu0 0
      %1132 = vmatprep.mubr.bf16.mxu0 0
      %1133 = vmatmul.mubr.bf16.gmra.mrb[0].mxu0 %v1089
      %v1134 = vpop.f32.mrb[0].mxu0
      %v1135 = vadd.f32 0.0, %v1134
      %v1136 = vpop.f32.mrb[0].mxu0
      %v1137 = vadd.f32 0.0, %v1136
      %v1138 = vpop.f32.mrb[0].mxu0
      %v1139 = vpop.f32.mrb[0].mxu0
      %1140 = vdwg.mxu0
      %1141 = vmatprep.subr.bf16.mxu0 0
      %1142 = vmatpush1.bf16.msra.mxu0 %v1098
      %1143 = vmatprep.subr.bf16.mxu0 0
      %1144 = vmatpush1.bf16.msra.mxu0 0
      %1145 = vmatprep.subr.bf16.mxu0 0
      %1146 = vmatpush1.bf16.msra.mxu0 0
      %1147 = vmatprep.subr.bf16.mxu0 0
      %1148 = vmatpush1.bf16.msra.mxu0 0
      %1149 = vmatprep.subr.bf16.mxu0 0
      %1150 = vmatpush1.bf16.msra.mxu0 0
      %1151 = vmatprep.subr.bf16.mxu0 0
      %1152 = vmatpush1.bf16.msra.mxu0 0
      %1153 = vmatprep.subr.bf16.mxu0 0
      %1154 = vmatpush1.bf16.msra.mxu0 0
      %1155 = vmatprep.subr.bf16.mxu0 0
      %1156 = vmatpush1.bf16.msra.mxu0 0
      %1157 = vmatprep.subr.bf16.mxu0 0
      %1158 = vmatpush1.bf16.msra.mxu0 0
      %1159 = vmatprep.subr.bf16.mxu0 0
      %1160 = vmatpush1.bf16.msra.mxu0 0
      %1161 = vmatprep.subr.bf16.mxu0 0
      %1162 = vmatpush1.bf16.msra.mxu0 0
      %1163 = vmatprep.subr.bf16.mxu0 0
      %1164 = vmatpush1.bf16.msra.mxu0 0
      %1165 = vmatprep.subr.bf16.mxu0 0
      %1166 = vmatpush1.bf16.msra.mxu0 0
      %1167 = vmatprep.subr.bf16.mxu0 0
      %1168 = vmatpush1.bf16.msra.mxu0 0
      %1169 = vmatprep.subr.bf16.mxu0 0
      %1170 = vmatpush1.bf16.msra.mxu0 0
      %1171 = vmatprep.subr.bf16.mxu0 0
      %1172 = vmatpush1.bf16.msra.mxu0 0
      %1173 = vmatprep.mubr.bf16.mxu0 0
      %1174 = vmatmul.mubr.bf16.gmra.mrb[0].mxu0 %v1089
      %v1175 = vpop.f32.mrb[0].mxu0
      %v1176 = vadd.f32 0.0, %v1175
      %v1177 = vpop.f32.mrb[0].mxu0
      %v1178 = vpop.f32.mrb[0].mxu0
      %v1179 = vpop.f32.mrb[0].mxu0
      %1180 = vdwg.mxu0
      %v1181 = vld [vmem:[#allocation2] sm:$0xff]
      %v1182 = vld [vmem:[#allocation2 + $0x8] sm:$0xff]
      %v1183 = vld [vmem:[#allocation2 + $0x10] sm:$0xff]
      %v1184 = vadd.f32 %v1181, %v1135
      %v1185 = vadd.f32 %v1182, %v1137
      %v1186 = vadd.f32 %v1183, %v1176
      %1187 = vst [vmem:[#allocation2] sm:$0xff] %v1184
      %1188 = vst [vmem:[#allocation2 + $0x8] sm:$0xff] %v1185
      %1189 = vst.msk [vmem:[#allocation2 + $0x10] sm:$0xff] %vm567, %v1186
      %v1190 = vld [vmem:[#allocation3 + $0x4] sm:$0xff]
      %v1191 = vld [vmem:[#allocation3 + $0xc] sm:$0xf]
      %s1192 = scalar_lea.vmem %s266, 24
      %v1193 = vld [vmem:[%s1192] sm:$0xf]
      %v1196 = vunpack.c.l.b16 %v1190
      %v1197 = vunpack.c.h.b16 %v1190
      %v1198 = vunpack.c.l.b16 %v1191
      %v1199 = vpack.c.b16 %v1196, %v1196
      %v1200 = vpack.c.b16 %v1197, %v1197
      %v1201 = vpack.c.b16 %v1198, %v1198
      %1202 = vrot.lane.b32.xlu0 %v1199, 111
      %v1203 = vpop.permute.xlu0 %1202
      %1204 = vrot.lane.b32.xlu0 %v1200, 111
      %v1205 = vpop.permute.xlu0 %1204
      %1206 = vrot.lane.b32.xlu0 %v1201, 111
      %v1207 = vpop.permute.xlu0 %1206
      %vm1208 = vcmask 908288
      %v1209 = vsel %vm1208, %v1203, %v1205
      %v1210 = vsel %vm1208, %v1205, %v1207
      %v1212 = vsel %vm471, %v1193, 0
      %v1215 = vsel %vm442, %v1209, 0
      %v1218 = vsel %vm442, %v1210, 0
      %v1221 = vsel %vm442, %v1207, 0
      %1223 = vmatprep.subr.bf16.mxu0 %v1218
      %1224 = vmatpush1.bf16.msra.mxu0 %v1215
      %1225 = vmatprep.subr.bf16.mxu0 0
      %1226 = vmatpush1.bf16.msra.mxu0 0
      %1227 = vmatprep.subr.bf16.mxu0 0
      %1228 = vmatpush1.bf16.msra.mxu0 0
      %1229 = vmatprep.subr.bf16.mxu0 0
      %1230 = vmatpush1.bf16.msra.mxu0 0
      %1231 = vmatprep.subr.bf16.mxu0 0
      %1232 = vmatpush1.bf16.msra.mxu0 0
      %1233 = vmatprep.subr.bf16.mxu0 0
      %1234 = vmatpush1.bf16.msra.mxu0 0
      %1235 = vmatprep.subr.bf16.mxu0 0
      %1236 = vmatpush1.bf16.msra.mxu0 0
      %1237 = vmatprep.subr.bf16.mxu0 0
      %1238 = vmatpush1.bf16.msra.mxu0 0
      %1239 = vmatprep.subr.bf16.mxu0 0
      %1240 = vmatpush1.bf16.msra.mxu0 0
      %1241 = vmatprep.subr.bf16.mxu0 0
      %1242 = vmatpush1.bf16.msra.mxu0 0
      %1243 = vmatprep.subr.bf16.mxu0 0
      %1244 = vmatpush1.bf16.msra.mxu0 0
      %1245 = vmatprep.subr.bf16.mxu0 0
      %1246 = vmatpush1.bf16.msra.mxu0 0
      %1247 = vmatprep.subr.bf16.mxu0 0
      %1248 = vmatpush1.bf16.msra.mxu0 0
      %1249 = vmatprep.subr.bf16.mxu0 0
      %1250 = vmatpush1.bf16.msra.mxu0 0
      %1251 = vmatprep.subr.bf16.mxu0 0
      %1252 = vmatpush1.bf16.msra.mxu0 0
      %1253 = vmatprep.subr.bf16.mxu0 0
      %1254 = vmatpush1.bf16.msra.mxu0 0
      %1255 = vmatprep.mubr.bf16.mxu0 0
      %1256 = vmatmul.mubr.bf16.gmra.mrb[0].mxu0 %v1212
      %v1257 = vpop.f32.mrb[0].mxu0
      %v1258 = vadd.f32 0.0, %v1257
      %v1259 = vpop.f32.mrb[0].mxu0
      %v1260 = vadd.f32 0.0, %v1259
      %v1261 = vpop.f32.mrb[0].mxu0
      %v1262 = vpop.f32.mrb[0].mxu0
      %1263 = vdwg.mxu0
      %1264 = vmatprep.subr.bf16.mxu0 0
      %1265 = vmatpush1.bf16.msra.mxu0 %v1221
      %1266 = vmatprep.subr.bf16.mxu0 0
      %1267 = vmatpush1.bf16.msra.mxu0 0
      %1268 = vmatprep.subr.bf16.mxu0 0
      %1269 = vmatpush1.bf16.msra.mxu0 0
      %1270 = vmatprep.subr.bf16.mxu0 0
      %1271 = vmatpush1.bf16.msra.mxu0 0
      %1272 = vmatprep.subr.bf16.mxu0 0
      %1273 = vmatpush1.bf16.msra.mxu0 0
      %1274 = vmatprep.subr.bf16.mxu0 0
      %1275 = vmatpush1.bf16.msra.mxu0 0
      %1276 = vmatprep.subr.bf16.mxu0 0
      %1277 = vmatpush1.bf16.msra.mxu0 0
      %1278 = vmatprep.subr.bf16.mxu0 0
      %1279 = vmatpush1.bf16.msra.mxu0 0
      %1280 = vmatprep.subr.bf16.mxu0 0
      %1281 = vmatpush1.bf16.msra.mxu0 0
      %1282 = vmatprep.subr.bf16.mxu0 0
      %1283 = vmatpush1.bf16.msra.mxu0 0
      %1284 = vmatprep.subr.bf16.mxu0 0
      %1285 = vmatpush1.bf16.msra.mxu0 0
      %1286 = vmatprep.subr.bf16.mxu0 0
      %1287 = vmatpush1.bf16.msra.mxu0 0
      %1288 = vmatprep.subr.bf16.mxu0 0
      %1289 = vmatpush1.bf16.msra.mxu0 0
      %1290 = vmatprep.subr.bf16.mxu0 0
      %1291 = vmatpush1.bf16.msra.mxu0 0
      %1292 = vmatprep.subr.bf16.mxu0 0
      %1293 = vmatpush1.bf16.msra.mxu0 0
      %1294 = vmatprep.subr.bf16.mxu0 0
      %1295 = vmatpush1.bf16.msra.mxu0 0
      %1296 = vmatprep.mubr.bf16.mxu0 0
      %1297 = vmatmul.mubr.bf16.gmra.mrb[0].mxu0 %v1212
      %v1298 = vpop.f32.mrb[0].mxu0
      %v1299 = vadd.f32 0.0, %v1298
      %v1300 = vpop.f32.mrb[0].mxu0
      %v1301 = vpop.f32.mrb[0].mxu0
      %v1302 = vpop.f32.mrb[0].mxu0
      %1303 = vdwg.mxu0
      %v1304 = vld [vmem:[#allocation2] sm:$0xff]
      %v1305 = vld [vmem:[#allocation2 + $0x8] sm:$0xff]
      %v1306 = vld [vmem:[#allocation2 + $0x10] sm:$0xff]
      %v1307 = vadd.f32 %v1304, %v1258
      %v1308 = vadd.f32 %v1305, %v1260
      %v1309 = vadd.f32 %v1306, %v1299
      %1310 = vst [vmem:[#allocation2] sm:$0xff] %v1307
      %1311 = vst [vmem:[#allocation2 + $0x8] sm:$0xff] %v1308
      %1312 = vst.msk [vmem:[#allocation2 + $0x10] sm:$0xff] %vm567, %v1309
      %v1313 = vld [vmem:[#allocation3 + $0x4] sm:$0xff]
      %v1314 = vld [vmem:[#allocation3 + $0xc] sm:$0xf]
      %s1315 = scalar_lea.vmem %s266, 28
      %v1316 = vld [vmem:[%s1315] sm:$0xf]
      %v1319 = vunpack.c.l.b16 %v1313
      %v1320 = vunpack.c.h.b16 %v1313
      %v1321 = vunpack.c.l.b16 %v1314
      %v1322 = vpack.c.b16 %v1319, %v1319
      %v1323 = vpack.c.b16 %v1320, %v1320
      %v1324 = vpack.c.b16 %v1321, %v1321
      %1325 = vrot.lane.b32.xlu0 %v1322, 110
      %v1326 = vpop.permute.xlu0 %1325
      %1327 = vrot.lane.b32.xlu0 %v1323, 110
      %v1328 = vpop.permute.xlu0 %1327
      %1329 = vrot.lane.b32.xlu0 %v1324, 110
      %v1330 = vpop.permute.xlu0 %1329
      %vm1331 = vcmask 900096
      %v1332 = vsel %vm1331, %v1326, %v1328
      %v1333 = vsel %vm1331, %v1328, %v1330
      %v1335 = vsel %vm471, %v1316, 0
      %v1338 = vsel %vm442, %v1332, 0
      %v1341 = vsel %vm442, %v1333, 0
      %v1344 = vsel %vm442, %v1330, 0
      %1346 = vmatprep.subr.bf16.mxu0 %v1341
      %1347 = vmatpush1.bf16.msra.mxu0 %v1338
      %1348 = vmatprep.subr.bf16.mxu0 0
      %1349 = vmatpush1.bf16.msra.mxu0 0
      %1350 = vmatprep.subr.bf16.mxu0 0
      %1351 = vmatpush1.bf16.msra.mxu0 0
      %1352 = vmatprep.subr.bf16.mxu0 0
      %1353 = vmatpush1.bf16.msra.mxu0 0
      %1354 = vmatprep.subr.bf16.mxu0 0
      %1355 = vmatpush1.bf16.msra.mxu0 0
      %1356 = vmatprep.subr.bf16.mxu0 0
      %1357 = vmatpush1.bf16.msra.mxu0 0
      %1358 = vmatprep.subr.bf16.mxu0 0
      %1359 = vmatpush1.bf16.msra.mxu0 0
      %1360 = vmatprep.subr.bf16.mxu0 0
      %1361 = vmatpush1.bf16.msra.mxu0 0
      %1362 = vmatprep.subr.bf16.mxu0 0
      %1363 = vmatpush1.bf16.msra.mxu0 0
      %1364 = vmatprep.subr.bf16.mxu0 0
      %1365 = vmatpush1.bf16.msra.mxu0 0
      %1366 = vmatprep.subr.bf16.mxu0 0
      %1367 = vmatpush1.bf16.msra.mxu0 0
      %1368 = vmatprep.subr.bf16.mxu0 0
      %1369 = vmatpush1.bf16.msra.mxu0 0
      %1370 = vmatprep.subr.bf16.mxu0 0
      %1371 = vmatpush1.bf16.msra.mxu0 0
      %1372 = vmatprep.subr.bf16.mxu0 0
      %1373 = vmatpush1.bf16.msra.mxu0 0
      %1374 = vmatprep.subr.bf16.mxu0 0
      %1375 = vmatpush1.bf16.msra.mxu0 0
      %1376 = vmatprep.subr.bf16.mxu0 0
      %1377 = vmatpush1.bf16.msra.mxu0 0
      %1378 = vmatprep.mubr.bf16.mxu0 0
      %1379 = vmatmul.mubr.bf16.gmra.mrb[0].mxu0 %v1335
      %v1380 = vpop.f32.mrb[0].mxu0
      %v1381 = vadd.f32 0.0, %v1380
      %v1382 = vpop.f32.mrb[0].mxu0
      %v1383 = vadd.f32 0.0, %v1382
      %v1384 = vpop.f32.mrb[0].mxu0
      %v1385 = vpop.f32.mrb[0].mxu0
      %1386 = vdwg.mxu0
      %1387 = vmatprep.subr.bf16.mxu0 0
      %1388 = vmatpush1.bf16.msra.mxu0 %v1344
      %1389 = vmatprep.subr.bf16.mxu0 0
      %1390 = vmatpush1.bf16.msra.mxu0 0
      %1391 = vmatprep.subr.bf16.mxu0 0
      %1392 = vmatpush1.bf16.msra.mxu0 0
      %1393 = vmatprep.subr.bf16.mxu0 0
      %1394 = vmatpush1.bf16.msra.mxu0 0
      %1395 = vmatprep.subr.bf16.mxu0 0
      %1396 = vmatpush1.bf16.msra.mxu0 0
      %1397 = vmatprep.subr.bf16.mxu0 0
      %1398 = vmatpush1.bf16.msra.mxu0 0
      %1399 = vmatprep.subr.bf16.mxu0 0
      %1400 = vmatpush1.bf16.msra.mxu0 0
      %1401 = vmatprep.subr.bf16.mxu0 0
      %1402 = vmatpush1.bf16.msra.mxu0 0
      %1403 = vmatprep.subr.bf16.mxu0 0
      %1404 = vmatpush1.bf16.msra.mxu0 0
      %1405 = vmatprep.subr.bf16.mxu0 0
      %1406 = vmatpush1.bf16.msra.mxu0 0
      %1407 = vmatprep.subr.bf16.mxu0 0
      %1408 = vmatpush1.bf16.msra.mxu0 0
      %1409 = vmatprep.subr.bf16.mxu0 0
      %1410 = vmatpush1.bf16.msra.mxu0 0
      %1411 = vmatprep.subr.bf16.mxu0 0
      %1412 = vmatpush1.bf16.msra.mxu0 0
      %1413 = vmatprep.subr.bf16.mxu0 0
      %1414 = vmatpush1.bf16.msra.mxu0 0
      %1415 = vmatprep.subr.bf16.mxu0 0
      %1416 = vmatpush1.bf16.msra.mxu0 0
      %1417 = vmatprep.subr.bf16.mxu0 0
      %1418 = vmatpush1.bf16.msra.mxu0 0
      %1419 = vmatprep.mubr.bf16.mxu0 0
      %1420 = vmatmul.mubr.bf16.gmra.mrb[0].mxu0 %v1335
      %v1421 = vpop.f32.mrb[0].mxu0
      %v1422 = vadd.f32 0.0, %v1421
      %v1423 = vpop.f32.mrb[0].mxu0
      %v1424 = vpop.f32.mrb[0].mxu0
      %v1425 = vpop.f32.mrb[0].mxu0
      %1426 = vdwg.mxu0
      %v1427 = vld [vmem:[#allocation2] sm:$0xff]
      %v1428 = vld [vmem:[#allocation2 + $0x8] sm:$0xff]
      %v1429 = vld [vmem:[#allocation2 + $0x10] sm:$0xff]
      %v1430 = vadd.f32 %v1427, %v1381
      %v1431 = vadd.f32 %v1428, %v1383
      %v1432 = vadd.f32 %v1429, %v1422
      %1433 = vst [vmem:[#allocation2] sm:$0xff] %v1430
      %1434 = vst [vmem:[#allocation2 + $0x8] sm:$0xff] %v1431
      %1435 = vst.msk [vmem:[#allocation2 + $0x10] sm:$0xff] %vm567, %v1432
      %v1436 = vld [vmem:[#allocation3 + $0x4] sm:$0xff]
      %v1437 = vld [vmem:[#allocation3 + $0xc] sm:$0xf]
      %s1438 = scalar_lea.vmem %s266, 32
      %v1439 = vld [vmem:[%s1438] sm:$0xf]
      %v1442 = vunpack.c.l.b16 %v1436
      %v1443 = vunpack.c.h.b16 %v1436
      %v1444 = vunpack.c.l.b16 %v1437
      %v1445 = vpack.c.b16 %v1442, %v1442
      %v1446 = vpack.c.b16 %v1443, %v1443
      %v1447 = vpack.c.b16 %v1444, %v1444
      %1448 = vrot.lane.b32.xlu0 %v1445, 109
      %v1449 = vpop.permute.xlu0 %1448
      %1450 = vrot.lane.b32.xlu0 %v1446, 109
      %v1451 = vpop.permute.xlu0 %1450
      %1452 = vrot.lane.b32.xlu0 %v1447, 109
      %v1453 = vpop.permute.xlu0 %1452
      %vm1454 = vcmask 891904
      %v1455 = vsel %vm1454, %v1449, %v1451
      %v1456 = vsel %vm1454, %v1451, %v1453
      %v1458 = vsel %vm471, %v1439, 0
      %v1461 = vsel %vm442, %v1455, 0
      %v1464 = vsel %vm442, %v1456, 0
      %v1467 = vsel %vm442, %v1453, 0
      %1469 = vmatprep.subr.bf16.mxu0 %v1464
      %1470 = vmatpush1.bf16.msra.mxu0 %v1461
      %1471 = vmatprep.subr.bf16.mxu0 0
      %1472 = vmatpush1.bf16.msra.mxu0 0
      %1473 = vmatprep.subr.bf16.mxu0 0
      %1474 = vmatpush1.bf16.msra.mxu0 0
      %1475 = vmatprep.subr.bf16.mxu0 0
      %1476 = vmatpush1.bf16.msra.mxu0 0
      %1477 = vmatprep.subr.bf16.mxu0 0
      %1478 = vmatpush1.bf16.msra.mxu0 0
      %1479 = vmatprep.subr.bf16.mxu0 0
      %1480 = vmatpush1.bf16.msra.mxu0 0
      %1481 = vmatprep.subr.bf16.mxu0 0
      %1482 = vmatpush1.bf16.msra.mxu0 0
      %1483 = vmatprep.subr.bf16.mxu0 0
      %1484 = vmatpush1.bf16.msra.mxu0 0
      %1485 = vmatprep.subr.bf16.mxu0 0
      %1486 = vmatpush1.bf16.msra.mxu0 0
      %1487 = vmatprep.subr.bf16.mxu0 0
      %1488 = vmatpush1.bf16.msra.mxu0 0
      %1489 = vmatprep.subr.bf16.mxu0 0
      %1490 = vmatpush1.bf16.msra.mxu0 0
      %1491 = vmatprep.subr.bf16.mxu0 0
      %1492 = vmatpush1.bf16.msra.mxu0 0
      %1493 = vmatprep.subr.bf16.mxu0 0
      %1494 = vmatpush1.bf16.msra.mxu0 0
      %1495 = vmatprep.subr.bf16.mxu0 0
      %1496 = vmatpush1.bf16.msra.mxu0 0
      %1497 = vmatprep.subr.bf16.mxu0 0
      %1498 = vmatpush1.bf16.msra.mxu0 0
      %1499 = vmatprep.subr.bf16.mxu0 0
      %1500 = vmatpush1.bf16.msra.mxu0 0
      %1501 = vmatprep.mubr.bf16.mxu0 0
      %1502 = vmatmul.mubr.bf16.gmra.mrb[0].mxu0 %v1458
      %v1503 = vpop.f32.mrb[0].mxu0
      %v1504 = vadd.f32 0.0, %v1503
      %v1505 = vpop.f32.mrb[0].mxu0
      %v1506 = vadd.f32 0.0, %v1505
      %v1507 = vpop.f32.mrb[0].mxu0
      %v1508 = vpop.f32.mrb[0].mxu0
      %1509 = vdwg.mxu0
      %1510 = vmatprep.subr.bf16.mxu0 0
      %1511 = vmatpush1.bf16.msra.mxu0 %v1467
      %1512 = vmatprep.subr.bf16.mxu0 0
      %1513 = vmatpush1.bf16.msra.mxu0 0
      %1514 = vmatprep.subr.bf16.mxu0 0
      %1515 = vmatpush1.bf16.msra.mxu0 0
      %1516 = vmatprep.subr.bf16.mxu0 0
      %1517 = vmatpush1.bf16.msra.mxu0 0
      %1518 = vmatprep.subr.bf16.mxu0 0
      %1519 = vmatpush1.bf16.msra.mxu0 0
      %1520 = vmatprep.subr.bf16.mxu0 0
      %1521 = vmatpush1.bf16.msra.mxu0 0
      %1522 = vmatprep.subr.bf16.mxu0 0
      %1523 = vmatpush1.bf16.msra.mxu0 0
      %1524 = vmatprep.subr.bf16.mxu0 0
      %1525 = vmatpush1.bf16.msra.mxu0 0
      %1526 = vmatprep.subr.bf16.mxu0 0
      %1527 = vmatpush1.bf16.msra.mxu0 0
      %1528 = vmatprep.subr.bf16.mxu0 0
      %1529 = vmatpush1.bf16.msra.mxu0 0
      %1530 = vmatprep.subr.bf16.mxu0 0
      %1531 = vmatpush1.bf16.msra.mxu0 0
      %1532 = vmatprep.subr.bf16.mxu0 0
      %1533 = vmatpush1.bf16.msra.mxu0 0
      %1534 = vmatprep.subr.bf16.mxu0 0
      %1535 = vmatpush1.bf16.msra.mxu0 0
      %1536 = vmatprep.subr.bf16.mxu0 0
      %1537 = vmatpush1.bf16.msra.mxu0 0
      %1538 = vmatprep.subr.bf16.mxu0 0
      %1539 = vmatpush1.bf16.msra.mxu0 0
      %1540 = vmatprep.subr.bf16.mxu0 0
      %1541 = vmatpush1.bf16.msra.mxu0 0
      %1542 = vmatprep.mubr.bf16.mxu0 0
      %1543 = vmatmul.mubr.bf16.gmra.mrb[0].mxu0 %v1458
      %v1544 = vpop.f32.mrb[0].mxu0
      %v1545 = vadd.f32 0.0, %v1544
      %v1546 = vpop.f32.mrb[0].mxu0
      %v1547 = vpop.f32.mrb[0].mxu0
      %v1548 = vpop.f32.mrb[0].mxu0
      %1549 = vdwg.mxu0
      %v1550 = vld [vmem:[#allocation2] sm:$0xff]
      %v1551 = vld [vmem:[#allocation2 + $0x8] sm:$0xff]
      %v1552 = vld [vmem:[#allocation2 + $0x10] sm:$0xff]
      %v1553 = vadd.f32 %v1550, %v1504
      %v1554 = vadd.f32 %v1551, %v1506
      %v1555 = vadd.f32 %v1552, %v1545
      %1556 = vst [vmem:[#allocation2] sm:$0xff] %v1553
      %1557 = vst [vmem:[#allocation2 + $0x8] sm:$0xff] %v1554
      %1558 = vst.msk [vmem:[#allocation2 + $0x10] sm:$0xff] %vm567, %v1555
      %v1559 = vadd.s32 %v315, 128
      %vm1560 = vcmp.lt.s32.totalorder %v315, 0
      %v1561 = vsub.s32 0, %v315
      %v1562 = vsel %vm1560, %v1561, %v315
      %v1563 = vmul.u32.u64.compose %v1562, 3817748708
      %v1564 = vextract.low.u32 %v1563
      %v1565 = vextract.high.u32 %v1563
      %v1566 = vshrl.u32 %v1565, 4
      %v1567 = vmul.u32 %v1566, 18
      %v1568 = vsub.s32 %v1562, %v1567
      %v1569 = vsub.s32 0, %v1568
      %v1570 = vsel %vm1560, %v1569, %v1568
      %vm1571 = vcmp.lt.s32.totalorder %v1559, 0
      %v1572 = vsub.s32 0, %v1559
      %v1573 = vsel %vm1571, %v1572, %v1559
      %v1574 = vmul.u32.u64.compose %v1573, 3817748708
      %v1575 = vextract.low.u32 %v1574
      %v1576 = vextract.high.u32 %v1574
      %v1577 = vshrl.u32 %v1576, 4
      %v1578 = vmul.u32 %v1577, 18
      %v1579 = vsub.s32 %v1573, %v1578
      %v1580 = vsub.s32 0, %v1579
      %v1581 = vsel %vm1571, %v1580, %v1579
      %vm1582 = vcmp.lt.s32.totalorder %v316, 0
      %v1583 = vsub.s32 0, %v316
      %v1584 = vsel %vm1582, %v1583, %v316
      %v1585 = vmul.u32.u64.compose %v1584, 3817748708
      %v1586 = vextract.low.u32 %v1585
      %v1587 = vextract.high.u32 %v1585
      %v1588 = vshrl.u32 %v1587, 4
      %v1589 = vmul.u32 %v1588, 18
      %v1590 = vsub.s32 %v1584, %v1589
      %v1591 = vsub.s32 0, %v1590
      %v1592 = vsel %vm1582, %v1591, %v1590
      %vm1593 = vcmp.ne.s32.totalorder %v1570, 0
      %vm1594 = vcmp.ne.s32.totalorder %v1581, 0
      %vm1595 = vcmp.ne.s32.totalorder %v1592, 0
      %vm1596 = vcmp.lt.s32.totalorder %v1570, 0
      %vm1597 = vcmp.lt.s32.totalorder %v1581, 0
      %vm1598 = vcmp.lt.s32.totalorder %v1592, 0
      %vm1599 = vmand %vm1596, %vm1593
      %vm1600 = vmand %vm1597, %vm1594
      %vm1601 = vmand %vm1598, %vm1595
      %v1602 = vadd.s32 %v1570, 18
      %v1603 = vadd.s32 %v1581, 18
      %v1604 = vadd.s32 %v1592, 18
      %v1605 = vsel %vm1599, %v1602, %v1570
      %v1606 = vsel %vm1600, %v1603, %v1581
      %v1607 = vsel %vm1601, %v1604, %v1592
      %v1608 = vld [vmem:[#allocation2] sm:$0xff]
      %v1609 = vld [vmem:[#allocation2 + $0x8] sm:$0xff]
      %v1610 = vld [vmem:[#allocation2 + $0x10] sm:$0xff]
      %vm1611 = vcmp.lt.s32.totalorder %v1605, 16
      %vm1612 = vcmp.lt.s32.totalorder %v1606, 16
      %vm1613 = vcmp.lt.s32.totalorder %v1607, 16
      %v1614 = vsel %vm1611, 1, 0
      %v1615 = vsel %vm1612, 1, 0
      %v1616 = vsel %vm1613, 1, 0
      %v1617 = vcvt.s32.f32 %v1614
      %v1618 = vcvt.s32.f32 %v1615
      %v1619 = vcvt.s32.f32 %v1616
      %v1620 = vmul.f32 %v1608, %v1617
      %v1621 = vmul.f32 %v1609, %v1618
      %v1622 = vmul.f32 %v1610, %v1619
      %v1623 = vadd.f32 %v1620, %v1621
      %v1624 = vsel %vm567, %v1622, 0.0
      %v1625 = vadd.f32 %v1623, %v1624
      %1626 = vadd.xlane.f32.xlu0 %v1625
      %v1627 = vpop.xlane.xlu0 %1626
      %vm1628 = vcmask 7168
      %1629 = vst.msk [vmem:[%s282] sm:$0xff] %vm1628, %v1627
      %v1630 = vmul.f32 %v1620, %v1620
      %v1631 = vmul.f32 %v1621, %v1621
      %v1632 = vmul.f32 %v1622, %v1622
      %v1633 = vadd.f32 %v1630, %v1631
      %v1634 = vsel %vm567, %v1632, 0.0
      %v1635 = vadd.f32 %v1633, %v1634
      %1636 = vadd.xlane.f32.xlu0 %v1635
      %v1637 = vpop.xlane.xlu0 %1636
      %vm1638 = vcmask 15368
      %1639 = vst.msk [vmem:[%s282] sm:$0xff] %vm1638, %v1637
      %1640 = vst [vmem:[%s275] sm:$0xf] 0
      %v1641 = vpack.c.bf16 %v1620, %v1620
      %v1642 = vpack.c.bf16 %v1621, %v1621
      %v1643 = vpack.c.bf16 %v1622, %v1622
      %v1647 = vunpack.c.l.b16 %v1641
      %v1648 = vunpack.c.l.b16 %v1642
      %v1649 = vunpack.c.l.b16 %v1643
      %v1650 = vpack.c.b16 %v1648, %v1647
      %v1651 = vpack.c.b16 %v1649, %v1649
      %1654 = vst [vmem:[%s275 + $0x4] sm:$0xff] %v1650
      %vm1655 = vcmask 257024
      %1656 = vst.msk [vmem:[%s275 + $0xc] sm:$0xf] %vm1655, %v1651
      %vm1657 = vcmask 412928
      %1658 = vst.msk [vmem:[%s275 + $0xc] sm:$0xf] %vm1657, 0
      %p1659 = scmp.lt.s32.totalorder %s21, 1
      %s1660 = scalar_select %p1659, %s21, 1
      %p1661 = scmp.lt.s32.totalorder %s22, 0
      %s1662 = scalar_select %p1661, %s22, 0
      %s1663 = smul.addr %s1662, 4
      %s1664 = smul.addr %s1660, 4
      %s1665 = sadd.s32 %s1663, %s1664
      %s1666 = smul.addr %s1665, 4
      %s1667 = scalar_lea.vmem %s4, %s1666
      %p1668 = scmp.lt.s32.totalorder %s21, 1
      %s1669 = scalar_select %p1668, %s21, 1
      %p1670 = scmp.lt.s32.totalorder %s22, 0
      %s1671 = scalar_select %p1670, %s22, 0
      %s1672 = sadd.s32 %s1671, %s1669
      %s1673 = smul.addr %s1672, 8
      %s1674 = scalar_lea.vmem %s5, %s1673
      // Predicated region
      $region37: #{convolution_block.4} parent=35 // pred_check
        %p1675 = pneg %p143
      $region38: #{convolution_block.4} parent=35 // pred_check_branch
        %1677 = sbr.rel (%p1675) target = $region40
      $region39: #{convolution_block.4} parent=35 // pred_region
        _
      $region40: #{convolution_block.4} parent=35 // pred_fallthru
        _
      // Predicated region
      $region41: #{convolution_block.4} parent=35 // pred_check
        %p1678 = pneg %p171
      $region42: #{convolution_block.4} parent=35 // pred_check_branch
        %1680 = sbr.rel (%p1678) target = $region44
      $region43: #{convolution_block.4} parent=35 // pred_region
        _
      $region44: #{convolution_block.4} parent=35 // pred_fallthru
        _
    $region36: #{convolution_block.4} parent=5 // pred_fallthru
      _
    %p1681 = scmp.le.s32.totalorder 2, %s12
    // Predicated region
    $region45: #{convolution_block.4} parent=5 // pred_check
      %p1682 = pneg %p1681
    $region46: #{convolution_block.4} parent=5 // pred_check_branch
      %1684 = sbr.rel (%p1682) target = $region48
    $region47: #{convolution_block.4} parent=5 // pred_region
      %s1685 = ssub.s32 %s12, 2
      // Predicated region
      $region49: #{convolution_block.4} parent=47 // pred_check
        %p1686 = pneg %p149
      $region50: #{convolution_block.4} parent=47 // pred_check_branch
        %1688 = sbr.rel (%p1686) target = $region52
      $region51: #{convolution_block.4} parent=47 // pred_region
        %p1689 = scmp.lt.s32.totalorder %s23, 1
        %s1690 = scalar_select %p1689, %s23, 1
        %p1691 = scmp.lt.s32.totalorder %s24, 0
        %s1692 = scalar_select %p1691, %s24, 0
        %s1693 = smul.addr %s1692, 4
        %s1694 = smul.addr %s1690, 4
        %s1695 = sadd.s32 %s1693, %s1694
        %s1696 = smul.addr %s1695, 4
        %s1697 = scalar_lea.vmem %s4, %s1696
      $region52: #{convolution_block.4} parent=47 // pred_fallthru
        _
      // Predicated region
      $region53: #{convolution_block.4} parent=47 // pred_check
        %p1698 = pneg %p177
      $region54: #{convolution_block.4} parent=47 // pred_check_branch
        %1700 = sbr.rel (%p1698) target = $region56
      $region55: #{convolution_block.4} parent=47 // pred_region
        %p1701 = scmp.lt.s32.totalorder %s23, 1
        %s1702 = scalar_select %p1701, %s23, 1
        %p1703 = scmp.lt.s32.totalorder %s24, 0
        %s1704 = scalar_select %p1703, %s24, 0
        %s1705 = sadd.s32 %s1704, %s1702
        %s1706 = smul.addr %s1705, 8
        %s1707 = scalar_lea.vmem %s5, %s1706
      $region56: #{convolution_block.4} parent=47 // pred_fallthru
        _
    $region48: #{convolution_block.4} parent=5 // pred_fallthru
      _
  $region6: #{convolution_block.4} parent=0 // loop_footer
    %s16 = sadd.s32 1, %s12
  $region7: #{convolution_block.4} parent=0 // loop_footer_branch
    %11 = sbr.rel target = $region3
  $region8: #{convolution_block.4} parent=0 // loop_exit
    _

</llo_original>
